<compile_context>
chip_gen: v7x
topology: tpu7x:2x2x1
jax: 0.10.0
libtpu: 0.0.40
codegen_flags: <defaults>
</compile_context>

<pallas_src>
import math
import functools

import jax
import jax.numpy as jnp
from jax import lax
from jax.experimental import pallas as pl
from jax.experimental.pallas import tpu as pltpu


# ----------------------------- in-kernel helpers -----------------------------

def _layer_norm(x, gamma, beta, eps=1e-6):
    mean = jnp.mean(x, axis=-1, keepdims=True)
    var = jnp.mean(jnp.square(x - mean), axis=-1, keepdims=True)
    return (x - mean) * lax.rsqrt(var + eps) * gamma + beta


def _gelu_exact(x):
    # torch.nn.GELU() default is the exact (erf-based) GELU
    return 0.5 * x * (1.0 + lax.erf(x * (1.0 / math.sqrt(2.0))))


# --------------------------------- fused kernel --------------------------------

def fused_encoder_kernel(x_ref, pe_ref,
                         wq_ref, bq_ref, wk_ref, bk_ref, wv_ref, bv_ref,
                         wo_ref, bo_ref,
                         g1_ref, be1_ref, g2_ref, be2_ref,
                         w1_ref, b1_ref, w2_ref, b2_ref,
                         gf_ref, bf_ref,
                         o_ref, *, depth, n_heads):
    f32 = jnp.float32
    S, D = pe_ref.shape
    dh = D // n_heads
    scale = dh ** (-0.5)

    # Positional encoding add folded into the kernel (dropout(0.1) = identity in eval).
    x = x_ref[0] + pe_ref[...]                              # (S, D)

    # Static unroll over layers; all stacked weights are VMEM-resident.
    for d in range(depth):
        # ---- Self attention (pre-norm) ----
        xn = _layer_norm(x, g1_ref[d], be1_ref[d])          # (S, D)
        xb = jnp.broadcast_to(xn, (n_heads, S, D))          # (H, S, D) per-head batch

        # Per-head projections via batched einsum; scale folded into Q once.
        q = (jnp.einsum('hsd,hde->hse', xb, wq_ref[d],
                        preferred_element_type=f32) + bq_ref[d]) * scale   # (H, S, dh)
        k = jnp.einsum('hsd,hde->hse', xb, wk_ref[d],
                       preferred_element_type=f32) + bk_ref[d]             # (H, S, dh)
        v = jnp.einsum('hsd,hde->hse', xb, wv_ref[d],
                       preferred_element_type=f32) + bv_ref[d]             # (H, S, dh)

        s = jnp.einsum('hqd,hkd->hqk', q, k, preferred_element_type=f32)   # (H, S, S)
        s = s - jnp.max(s, axis=-1, keepdims=True)
        e = jnp.exp(s)
        p = e * pl.reciprocal(jnp.sum(e, axis=-1, keepdims=True), approx=True)

        ctx = jnp.einsum('hqk,hkd->hqd', p, v, preferred_element_type=f32)  # (H, S, dh)
        # Output projection applied per head (wo pre-split as (H, dh, D)), then
        # summed over heads: equivalent to concat(ctx_h) @ Wo, no concatenate.
        oh = jnp.einsum('hsd,hde->hse', ctx, wo_ref[d],
                        preferred_element_type=f32)                         # (H, S, D)
        x = x + jnp.sum(oh, axis=0) + bo_ref[d]

        # ---- MLP (pre-norm) ----
        xn2 = _layer_norm(x, g2_ref[d], be2_ref[d])
        h = jnp.dot(xn2, w1_ref[d], preferred_element_type=f32) + b1_ref[d]
        h = _gelu_exact(h)
        x = x + jnp.dot(h, w2_ref[d], preferred_element_type=f32) + b2_ref[d]

    o_ref[0] = _layer_norm(x, gf_ref[...], bf_ref[...])


# ------------------------------- pallas wrapper -------------------------------

_WEIGHT_ORDER = ("wq", "bq", "wk", "bk", "wv", "bv", "wo", "bo",
                 "g1", "be1", "g2", "be2", "w1", "b1", "w2", "b2", "gf", "bf")


def _full_spec(a):
    """Whole-array block, same tile at every grid step (stays VMEM-resident)."""
    ndim = a.ndim

    def idx(b):
        return (0,) * ndim

    return pl.BlockSpec(a.shape, idx)


@functools.partial(jax.jit, static_argnames=("n_heads",))
def transformer_encoder(x, stacked, n_heads):
    """x: (B, num_input_tokens, D) -> (B, num_input_tokens + 1, D)"""
    B, T, D = x.shape
    depth = stacked["wq"].shape[0]

    # cls token concat stays in plain JAX (trivial, XLA fuses it).
    x = jnp.concatenate([jnp.zeros((B, 1, D), x.dtype), x], axis=1)   # (B, S, D)
    S = T + 1
    pe = make_positional_encoding(S, D)

    weight_args = [stacked[k] for k in _WEIGHT_ORDER]
    in_specs = ([pl.BlockSpec((1, S, D), lambda b: (b, 0, 0)), _full_spec(pe)]
                + [_full_spec(a) for a in weight_args])

    return pl.pallas_call(
        functools.partial(fused_encoder_kernel, depth=depth, n_heads=n_heads),
        out_shape=jax.ShapeDtypeStruct((B, S, D), x.dtype),
        grid=(B,),
        in_specs=in_specs,
        out_specs=pl.BlockSpec((1, S, D), lambda b: (b, 0, 0)),
        compiler_params=pltpu.CompilerParams(dimension_semantics=("parallel",)),
    )(x, pe, *weight_args)


# ---------------------------- parameters / pos enc ----------------------------

def make_positional_encoding(seq_len, embed_dim):
    pos = jnp.arange(seq_len, dtype=jnp.float32)[:, None]
    div = jnp.exp(jnp.arange(0, embed_dim, 2, dtype=jnp.float32)
                  * (-(math.log(10000.0) / embed_dim)))
    pe = jnp.zeros((seq_len, embed_dim), jnp.float32)
    pe = pe.at[:, 0::2].set(jnp.sin(pos * div))
    pe = pe.at[:, 1::2].set(jnp.cos(pos * div))
    return pe


def init_params(key, depth, embed_dim, mlp_ratio=4.0):
    hidden = int(embed_dim * mlp_ratio)
    blocks = []
    for d in range(depth):
        keys = jax.random.split(jax.random.fold_in(key, d), 12)
        s = 0.02
        blk = dict(
            wq=s * jax.random.normal(keys[0], (embed_dim, embed_dim), jnp.float32),
            bq=s * jax.random.normal(keys[1], (1, embed_dim), jnp.float32),
            wk=s * jax.random.normal(keys[2], (embed_dim, embed_dim), jnp.float32),
            bk=s * jax.random.normal(keys[3], (1, embed_dim), jnp.float32),
            wv=s * jax.random.normal(keys[4], (embed_dim, embed_dim), jnp.float32),
            bv=s * jax.random.normal(keys[5], (1, embed_dim), jnp.float32),
            wo=s * jax.random.normal(keys[6], (embed_dim, embed_dim), jnp.float32),
            bo=s * jax.random.normal(keys[7], (1, embed_dim), jnp.float32),
            g1=jnp.ones((1, embed_dim), jnp.float32),
            be1=jnp.zeros((1, embed_dim), jnp.float32),
            g2=jnp.ones((1, embed_dim), jnp.float32),
            be2=jnp.zeros((1, embed_dim), jnp.float32),
            w_fc1=s * jax.random.normal(keys[8], (embed_dim, hidden), jnp.float32),
            b_fc1=s * jax.random.normal(keys[9], (1, hidden), jnp.float32),
            w_fc2=s * jax.random.normal(keys[10], (hidden, embed_dim), jnp.float32),
            b_fc2=s * jax.random.normal(keys[11], (1, embed_dim), jnp.float32),
        )
        blocks.append(blk)
    final = dict(gamma=jnp.ones((1, embed_dim), jnp.float32),
                 beta=jnp.zeros((1, embed_dim), jnp.float32))
    return blocks, final


def pack_params(blocks, final, n_heads):
    """Stack per-layer weights with a leading depth axis and pre-split heads."""
    D = blocks[0]["wq"].shape[0]
    dh = D // n_heads

    def stack(name):
        return jnp.stack([b[name] for b in blocks], axis=0)

    def split_in(w):      # (depth, D, D) -> (depth, H, D, dh)  (output dim split)
        return w.reshape(w.shape[0], D, n_heads, dh).transpose(0, 2, 1, 3)

    def split_bias(b):    # (depth, 1, D) -> (depth, H, 1, dh)
        return b.reshape(b.shape[0], n_heads, dh)[:, :, None, :]

    def split_out(w):     # (depth, D, D) -> (depth, H, dh, D)  (input dim split)
        return w.reshape(w.shape[0], n_heads, dh, D)

    return dict(
        wq=split_in(stack("wq")), bq=split_bias(stack("bq")),
        wk=split_in(stack("wk")), bk=split_bias(stack("bk")),
        wv=split_in(stack("wv")), bv=split_bias(stack("bv")),
        wo=split_out(stack("wo")), bo=stack("bo"),
        g1=stack("g1"), be1=stack("be1"),
        g2=stack("g2"), be2=stack("be2"),
        w1=stack("w_fc1"), b1=stack("b_fc1"),
        w2=stack("w_fc2"), b2=stack("b_fc2"),
        gf=final["gamma"], bf=final["beta"],
    )


# ------------------------------ pure-JAX reference -----------------------------

def _ref_forward(x, blocks, final, n_heads):
    B, T, D = x.shape
    x = jnp.concatenate([jnp.zeros((B, 1, D), x.dtype), x], axis=1)
    x = x + make_positional_encoding(x.shape[1], D)[None]
    dh = D // n_heads

    def ln(z, g, b):
        m = z.mean(-1, keepdims=True)
        v = ((z - m) ** 2).mean(-1, keepdims=True)
        return (z - m) / jnp.sqrt(v + 1e-6) * g + b

    for p in blocks:
        xn = ln(x, p["g1"][0], p["be1"][0])
        q = xn @ p["wq"] + p["bq"][0]
        k = xn @ p["wk"] + p["bk"][0]
        v = xn @ p["wv"] + p["bv"][0]
        S = x.shape[1]
        q = q.reshape(B, S, n_heads, dh).transpose(0, 2, 1, 3)
        k = k.reshape(B, S, n_heads, dh).transpose(0, 2, 1, 3)
        v = v.reshape(B, S, n_heads, dh).transpose(0, 2, 1, 3)
        s = jnp.einsum("bhqd,bhkd->bhqk", q, k) * dh ** -0.5
        a = jax.nn.softmax(s, axis=-1)
        ctx = jnp.einsum("bhqk,bhkd->bhqd", a, v).transpose(0, 2, 1, 3).reshape(B, S, D)
        x = x + (ctx @ p["wo"] + p["bo"][0])
        xn2 = ln(x, p["g2"][0], p["be2"][0])
        h = xn2 @ p["w_fc1"] + p["b_fc1"][0]
        h = 0.5 * h * (1.0 + jax.lax.erf(h / jnp.sqrt(2.0)))
        x = x + (h @ p["w_fc2"] + p["b_fc2"][0])
    return ln(x, final["gamma"][0], final["beta"][0])


# ------------------------------------ main -------------------------------------

if __name__ == "__main__":
    # args = dict(depth=2, n_heads=4, entity_dim=32, num_input_tokens=7, out_dim=32)
    depth, n_heads, embed_dim, num_input_tokens = 2, 4, 32, 7
    batch = 2

    key = jax.random.PRNGKey(0)
    kx, kp = jax.random.split(key)
    x = jax.random.normal(kx, (batch, num_input_tokens, embed_dim), jnp.float32)
    blocks, final = init_params(kp, depth, embed_dim)
    stacked = pack_params(blocks, final, n_heads)

    out = transformer_encoder(x, stacked, n_heads)
    out = jax.block_until_ready(out)

    ref = _ref_forward(x, blocks, final, n_heads)
    assert out.shape == (batch, num_input_tokens + 1, embed_dim)
    # Tolerance accounts for the EUP approximate-reciprocal softmax normalization.
    assert jnp.allclose(out, ref, atol=1e-3, rtol=1e-3), "mismatch vs reference"

    print("KERNEL_OK")
</pallas_src>

<mosaic_0001>
module attributes {stable_mosaic.version = 11 : i64} {
  func.func @fused_encoder_kernel(%arg0: i32, %arg1: memref<1x8x32xf32, #tpu.memory_space<vmem>>, %arg2: memref<8x32xf32, #tpu.memory_space<vmem>>, %arg3: memref<2x4x32x8xf32, #tpu.memory_space<vmem>>, %arg4: memref<2x4x1x8xf32, #tpu.memory_space<vmem>>, %arg5: memref<2x4x32x8xf32, #tpu.memory_space<vmem>>, %arg6: memref<2x4x1x8xf32, #tpu.memory_space<vmem>>, %arg7: memref<2x4x32x8xf32, #tpu.memory_space<vmem>>, %arg8: memref<2x4x1x8xf32, #tpu.memory_space<vmem>>, %arg9: memref<2x4x8x32xf32, #tpu.memory_space<vmem>>, %arg10: memref<2x1x32xf32, #tpu.memory_space<vmem>>, %arg11: memref<2x1x32xf32, #tpu.memory_space<vmem>>, %arg12: memref<2x1x32xf32, #tpu.memory_space<vmem>>, %arg13: memref<2x1x32xf32, #tpu.memory_space<vmem>>, %arg14: memref<2x1x32xf32, #tpu.memory_space<vmem>>, %arg15: memref<2x32x128xf32, #tpu.memory_space<vmem>>, %arg16: memref<2x1x128xf32, #tpu.memory_space<vmem>>, %arg17: memref<2x128x32xf32, #tpu.memory_space<vmem>>, %arg18: memref<2x1x32xf32, #tpu.memory_space<vmem>>, %arg19: memref<1x32xf32, #tpu.memory_space<vmem>>, %arg20: memref<1x32xf32, #tpu.memory_space<vmem>>, %arg21: memref<1x8x32xf32, #tpu.memory_space<vmem>>) attributes {dimension_semantics = [#tpu.dimension_semantics<parallel>], iteration_bounds = array<i64: 2>, scalar_prefetch = 0 : i64, scratch_operands = 0 : i64, tpu.core_type = #tpu.core_type<tc>, window_params = [{transform_indices = @transform_0, window_bounds = array<i64: 1, 8, 32>}, {pipeline_mode = #tpu.pipeline_mode<synchronous>, transform_indices = @transform_1, window_bounds = array<i64: 8, 32>}, {pipeline_mode = #tpu.pipeline_mode<synchronous>, transform_indices = @transform_2, window_bounds = array<i64: 2, 4, 32, 8>}, {pipeline_mode = #tpu.pipeline_mode<synchronous>, transform_indices = @transform_3, window_bounds = array<i64: 2, 4, 1, 8>}, {pipeline_mode = #tpu.pipeline_mode<synchronous>, transform_indices = @transform_4, window_bounds = array<i64: 2, 4, 32, 8>}, {pipeline_mode = #tpu.pipeline_mode<synchronous>, transform_indices = @transform_5, window_bounds = array<i64: 2, 4, 1, 8>}, {pipeline_mode = #tpu.pipeline_mode<synchronous>, transform_indices = @transform_6, window_bounds = array<i64: 2, 4, 32, 8>}, {pipeline_mode = #tpu.pipeline_mode<synchronous>, transform_indices = @transform_7, window_bounds = array<i64: 2, 4, 1, 8>}, {pipeline_mode = #tpu.pipeline_mode<synchronous>, transform_indices = @transform_8, window_bounds = array<i64: 2, 4, 8, 32>}, {pipeline_mode = #tpu.pipeline_mode<synchronous>, transform_indices = @transform_9, window_bounds = array<i64: 2, 1, 32>}, {pipeline_mode = #tpu.pipeline_mode<synchronous>, transform_indices = @transform_10, window_bounds = array<i64: 2, 1, 32>}, {pipeline_mode = #tpu.pipeline_mode<synchronous>, transform_indices = @transform_11, window_bounds = array<i64: 2, 1, 32>}, {pipeline_mode = #tpu.pipeline_mode<synchronous>, transform_indices = @transform_12, window_bounds = array<i64: 2, 1, 32>}, {pipeline_mode = #tpu.pipeline_mode<synchronous>, transform_indices = @transform_13, window_bounds = array<i64: 2, 1, 32>}, {pipeline_mode = #tpu.pipeline_mode<synchronous>, transform_indices = @transform_14, window_bounds = array<i64: 2, 32, 128>}, {pipeline_mode = #tpu.pipeline_mode<synchronous>, transform_indices = @transform_15, window_bounds = array<i64: 2, 1, 128>}, {pipeline_mode = #tpu.pipeline_mode<synchronous>, transform_indices = @transform_16, window_bounds = array<i64: 2, 128, 32>}, {pipeline_mode = #tpu.pipeline_mode<synchronous>, transform_indices = @transform_17, window_bounds = array<i64: 2, 1, 32>}, {pipeline_mode = #tpu.pipeline_mode<synchronous>, transform_indices = @transform_18, window_bounds = array<i64: 1, 32>}, {pipeline_mode = #tpu.pipeline_mode<synchronous>, transform_indices = @transform_19, window_bounds = array<i64: 1, 32>}, {transform_indices = @transform_20, window_bounds = array<i64: 1, 8, 32>}]} {
    %c0 = arith.constant 0 : index
    %c0_0 = arith.constant 0 : index
    %c0_1 = arith.constant 0 : index
    %0 = vector.load %arg1[%c0, %c0_0, %c0_1] : memref<1x8x32xf32, #tpu.memory_space<vmem>>, vector<1x8x32xf32>
    %1 = vector.shape_cast %0 : vector<1x8x32xf32> to vector<8x32xf32>
    %c0_2 = arith.constant 0 : index
    %c0_3 = arith.constant 0 : index
    %2 = vector.load %arg2[%c0_2, %c0_3] : memref<8x32xf32, #tpu.memory_space<vmem>>, vector<8x32xf32>
    %3 = arith.addf %1, %2 : vector<8x32xf32>
    %c0_4 = arith.constant 0 : index
    %c0_5 = arith.constant 0 : index
    %c0_6 = arith.constant 0 : index
    %4 = vector.load %arg11[%c0_4, %c0_5, %c0_6] : memref<2x1x32xf32, #tpu.memory_space<vmem>>, vector<1x1x32xf32>
    %5 = vector.shape_cast %4 : vector<1x1x32xf32> to vector<1x32xf32>
    %c0_7 = arith.constant 0 : index
    %c0_8 = arith.constant 0 : index
    %c0_9 = arith.constant 0 : index
    %6 = vector.load %arg12[%c0_7, %c0_8, %c0_9] : memref<2x1x32xf32, #tpu.memory_space<vmem>>, vector<1x1x32xf32>
    %7 = vector.shape_cast %6 : vector<1x1x32xf32> to vector<1x32xf32>
    %cst = arith.constant dense<0.000000e+00> : vector<8xf32>
    %8 = vector.multi_reduction <add>, %3, %cst [1] : vector<8x32xf32> to vector<8xf32>
    %9 = vector.shape_cast %8 : vector<8xf32> to vector<8x1xf32>
    %cst_10 = arith.constant 3.200000e+01 : f32
    %10 = vector.broadcast %cst_10 : f32 to vector<8x1xf32>
    %11 = arith.divf %9, %10 : vector<8x1xf32>
    %12 = vector.broadcast %11 : vector<8x1xf32> to vector<8x32xf32>
    %13 = arith.subf %3, %12 : vector<8x32xf32>
    %14 = arith.mulf %13, %13 : vector<8x32xf32>
    %cst_11 = arith.constant dense<0.000000e+00> : vector<8xf32>
    %15 = vector.multi_reduction <add>, %14, %cst_11 [1] : vector<8x32xf32> to vector<8xf32>
    %16 = vector.shape_cast %15 : vector<8xf32> to vector<8x1xf32>
    %cst_12 = arith.constant 3.200000e+01 : f32
    %17 = vector.broadcast %cst_12 : f32 to vector<8x1xf32>
    %18 = arith.divf %16, %17 : vector<8x1xf32>
    %19 = vector.broadcast %11 : vector<8x1xf32> to vector<8x32xf32>
    %20 = arith.subf %3, %19 : vector<8x32xf32>
    %cst_13 = arith.constant 9.99999997E-7 : f32
    %21 = vector.broadcast %cst_13 : f32 to vector<8x1xf32>
    %22 = arith.addf %18, %21 : vector<8x1xf32>
    %23 = math.rsqrt %22 : vector<8x1xf32>
    %24 = vector.broadcast %23 : vector<8x1xf32> to vector<8x32xf32>
    %25 = arith.mulf %20, %24 : vector<8x32xf32>
    %26 = vector.broadcast %5 : vector<1x32xf32> to vector<8x32xf32>
    %27 = arith.mulf %25, %26 : vector<8x32xf32>
    %28 = vector.broadcast %7 : vector<1x32xf32> to vector<8x32xf32>
    %29 = arith.addf %27, %28 : vector<8x32xf32>
    %30 = vector.shape_cast %29 : vector<8x32xf32> to vector<1x8x32xf32>
    %31 = vector.broadcast %30 : vector<1x8x32xf32> to vector<4x8x32xf32>
    %c0_14 = arith.constant 0 : index
    %c0_15 = arith.constant 0 : index
    %c0_16 = arith.constant 0 : index
    %c0_17 = arith.constant 0 : index
    %32 = vector.load %arg3[%c0_14, %c0_15, %c0_16, %c0_17] : memref<2x4x32x8xf32, #tpu.memory_space<vmem>>, vector<1x4x32x8xf32>
    %33 = vector.shape_cast %32 : vector<1x4x32x8xf32> to vector<4x32x8xf32>
    "tpu.trace_start"() <{level = 10 : i32, message = "hsd,hde->hse"}> : () -> ()
    %cst_18 = arith.constant dense<0.000000e+00> : vector<4x8x8xf32>
    %34 = tpu.matmul %31, %33, %cst_18 {dimension_numbers = #tpu.dot_dimension_numbers<[2], [1], [1], [2], [0, 0, 0, 1, 1, 2], [0], [0]>} : vector<4x8x32xf32>, vector<4x32x8xf32>, vector<4x8x8xf32> -> vector<4x8x8xf32>
    "tpu.trace_stop"() : () -> ()
    %c0_19 = arith.constant 0 : index
    %c0_20 = arith.constant 0 : index
    %c0_21 = arith.constant 0 : index
    %c0_22 = arith.constant 0 : index
    %35 = vector.load %arg4[%c0_19, %c0_20, %c0_21, %c0_22] : memref<2x4x1x8xf32, #tpu.memory_space<vmem>>, vector<1x4x1x8xf32>
    %36 = vector.shape_cast %35 : vector<1x4x1x8xf32> to vector<4x1x8xf32>
    %37 = vector.broadcast %36 : vector<4x1x8xf32> to vector<4x8x8xf32>
    %38 = arith.addf %34, %37 : vector<4x8x8xf32>
    %cst_23 = arith.constant 0.353553385 : f32
    %39 = vector.broadcast %cst_23 : f32 to vector<4x8x8xf32>
    %40 = arith.mulf %38, %39 : vector<4x8x8xf32>
    %c0_24 = arith.constant 0 : index
    %c0_25 = arith.constant 0 : index
    %c0_26 = arith.constant 0 : index
    %c0_27 = arith.constant 0 : index
    %41 = vector.load %arg5[%c0_24, %c0_25, %c0_26, %c0_27] : memref<2x4x32x8xf32, #tpu.memory_space<vmem>>, vector<1x4x32x8xf32>
    %42 = vector.shape_cast %41 : vector<1x4x32x8xf32> to vector<4x32x8xf32>
    "tpu.trace_start"() <{level = 10 : i32, message = "hsd,hde->hse"}> : () -> ()
    %cst_28 = arith.constant dense<0.000000e+00> : vector<4x8x8xf32>
    %43 = tpu.matmul %31, %42, %cst_28 {dimension_numbers = #tpu.dot_dimension_numbers<[2], [1], [1], [2], [0, 0, 0, 1, 1, 2], [0], [0]>} : vector<4x8x32xf32>, vector<4x32x8xf32>, vector<4x8x8xf32> -> vector<4x8x8xf32>
    "tpu.trace_stop"() : () -> ()
    %c0_29 = arith.constant 0 : index
    %c0_30 = arith.constant 0 : index
    %c0_31 = arith.constant 0 : index
    %c0_32 = arith.constant 0 : index
    %44 = vector.load %arg6[%c0_29, %c0_30, %c0_31, %c0_32] : memref<2x4x1x8xf32, #tpu.memory_space<vmem>>, vector<1x4x1x8xf32>
    %45 = vector.shape_cast %44 : vector<1x4x1x8xf32> to vector<4x1x8xf32>
    %46 = vector.broadcast %45 : vector<4x1x8xf32> to vector<4x8x8xf32>
    %47 = arith.addf %43, %46 : vector<4x8x8xf32>
    %c0_33 = arith.constant 0 : index
    %c0_34 = arith.constant 0 : index
    %c0_35 = arith.constant 0 : index
    %c0_36 = arith.constant 0 : index
    %48 = vector.load %arg7[%c0_33, %c0_34, %c0_35, %c0_36] : memref<2x4x32x8xf32, #tpu.memory_space<vmem>>, vector<1x4x32x8xf32>
    %49 = vector.shape_cast %48 : vector<1x4x32x8xf32> to vector<4x32x8xf32>
    "tpu.trace_start"() <{level = 10 : i32, message = "hsd,hde->hse"}> : () -> ()
    %cst_37 = arith.constant dense<0.000000e+00> : vector<4x8x8xf32>
    %50 = tpu.matmul %31, %49, %cst_37 {dimension_numbers = #tpu.dot_dimension_numbers<[2], [1], [1], [2], [0, 0, 0, 1, 1, 2], [0], [0]>} : vector<4x8x32xf32>, vector<4x32x8xf32>, vector<4x8x8xf32> -> vector<4x8x8xf32>
    "tpu.trace_stop"() : () -> ()
    %c0_38 = arith.constant 0 : index
    %c0_39 = arith.constant 0 : index
    %c0_40 = arith.constant 0 : index
    %c0_41 = arith.constant 0 : index
    %51 = vector.load %arg8[%c0_38, %c0_39, %c0_40, %c0_41] : memref<2x4x1x8xf32, #tpu.memory_space<vmem>>, vector<1x4x1x8xf32>
    %52 = vector.shape_cast %51 : vector<1x4x1x8xf32> to vector<4x1x8xf32>
    %53 = vector.broadcast %52 : vector<4x1x8xf32> to vector<4x8x8xf32>
    %54 = arith.addf %50, %53 : vector<4x8x8xf32>
    "tpu.trace_start"() <{level = 10 : i32, message = "hqd,hkd->hqk"}> : () -> ()
    %cst_42 = arith.constant dense<0.000000e+00> : vector<4x8x8xf32>
    %55 = tpu.matmul %40, %47, %cst_42 {dimension_numbers = #tpu.dot_dimension_numbers<[2], [2], [1], [1], [0, 0, 0, 1, 1, 1], [0], [0]>} : vector<4x8x8xf32>, vector<4x8x8xf32>, vector<4x8x8xf32> -> vector<4x8x8xf32>
    "tpu.trace_stop"() : () -> ()
    %cst_43 = arith.constant dense<0xFF800000> : vector<4x8xf32>
    %56 = vector.multi_reduction <maximumf>, %55, %cst_43 [2] : vector<4x8x8xf32> to vector<4x8xf32>
    %57 = vector.shape_cast %56 : vector<4x8xf32> to vector<4x8x1xf32>
    %58 = vector.broadcast %57 : vector<4x8x1xf32> to vector<4x8x8xf32>
    %59 = arith.subf %55, %58 : vector<4x8x8xf32>
    %60 = math.exp %59 : vector<4x8x8xf32>
    %cst_44 = arith.constant dense<0.000000e+00> : vector<4x8xf32>
    %61 = vector.multi_reduction <add>, %60, %cst_44 [2] : vector<4x8x8xf32> to vector<4x8xf32>
    %62 = vector.shape_cast %61 : vector<4x8xf32> to vector<4x8x1xf32>
    %63 = tpu.reciprocal %62 {approx = true} : vector<4x8x1xf32> -> vector<4x8x1xf32>
    %64 = vector.broadcast %63 : vector<4x8x1xf32> to vector<4x8x8xf32>
    %65 = arith.mulf %60, %64 : vector<4x8x8xf32>
    "tpu.trace_start"() <{level = 10 : i32, message = "hqk,hkd->hqd"}> : () -> ()
    %cst_45 = arith.constant dense<0.000000e+00> : vector<4x8x8xf32>
    %66 = tpu.matmul %65, %54, %cst_45 {dimension_numbers = #tpu.dot_dimension_numbers<[2], [1], [1], [2], [0, 0, 0, 1, 1, 2], [0], [0]>} : vector<4x8x8xf32>, vector<4x8x8xf32>, vector<4x8x8xf32> -> vector<4x8x8xf32>
    "tpu.trace_stop"() : () -> ()
    %c0_46 = arith.constant 0 : index
    %c0_47 = arith.constant 0 : index
    %c0_48 = arith.constant 0 : index
    %c0_49 = arith.constant 0 : index
    %67 = vector.load %arg9[%c0_46, %c0_47, %c0_48, %c0_49] : memref<2x4x8x32xf32, #tpu.memory_space<vmem>>, vector<1x4x8x32xf32>
    %68 = vector.shape_cast %67 : vector<1x4x8x32xf32> to vector<4x8x32xf32>
    "tpu.trace_start"() <{level = 10 : i32, message = "hsd,hde->hse"}> : () -> ()
    %cst_50 = arith.constant dense<0.000000e+00> : vector<4x8x32xf32>
    %69 = tpu.matmul %66, %68, %cst_50 {dimension_numbers = #tpu.dot_dimension_numbers<[2], [1], [1], [2], [0, 0, 0, 1, 1, 2], [0], [0]>} : vector<4x8x8xf32>, vector<4x8x32xf32>, vector<4x8x32xf32> -> vector<4x8x32xf32>
    "tpu.trace_stop"() : () -> ()
    %cst_51 = arith.constant dense<0.000000e+00> : vector<8x32xf32>
    %70 = vector.multi_reduction <add>, %69, %cst_51 [0] : vector<4x8x32xf32> to vector<8x32xf32>
    %71 = arith.addf %3, %70 : vector<8x32xf32>
    %c0_52 = arith.constant 0 : index
    %c0_53 = arith.constant 0 : index
    %c0_54 = arith.constant 0 : index
    %72 = vector.load %arg10[%c0_52, %c0_53, %c0_54] : memref<2x1x32xf32, #tpu.memory_space<vmem>>, vector<1x1x32xf32>
    %73 = vector.shape_cast %72 : vector<1x1x32xf32> to vector<1x32xf32>
    %74 = vector.broadcast %73 : vector<1x32xf32> to vector<8x32xf32>
    %75 = arith.addf %71, %74 : vector<8x32xf32>
    %c0_55 = arith.constant 0 : index
    %c0_56 = arith.constant 0 : index
    %c0_57 = arith.constant 0 : index
    %76 = vector.load %arg13[%c0_55, %c0_56, %c0_57] : memref<2x1x32xf32, #tpu.memory_space<vmem>>, vector<1x1x32xf32>
    %77 = vector.shape_cast %76 : vector<1x1x32xf32> to vector<1x32xf32>
    %c0_58 = arith.constant 0 : index
    %c0_59 = arith.constant 0 : index
    %c0_60 = arith.constant 0 : index
    %78 = vector.load %arg14[%c0_58, %c0_59, %c0_60] : memref<2x1x32xf32, #tpu.memory_space<vmem>>, vector<1x1x32xf32>
    %79 = vector.shape_cast %78 : vector<1x1x32xf32> to vector<1x32xf32>
    %cst_61 = arith.constant dense<0.000000e+00> : vector<8xf32>
    %80 = vector.multi_reduction <add>, %75, %cst_61 [1] : vector<8x32xf32> to vector<8xf32>
    %81 = vector.shape_cast %80 : vector<8xf32> to vector<8x1xf32>
    %cst_62 = arith.constant 3.200000e+01 : f32
    %82 = vector.broadcast %cst_62 : f32 to vector<8x1xf32>
    %83 = arith.divf %81, %82 : vector<8x1xf32>
    %84 = vector.broadcast %83 : vector<8x1xf32> to vector<8x32xf32>
    %85 = arith.subf %75, %84 : vector<8x32xf32>
    %86 = arith.mulf %85, %85 : vector<8x32xf32>
    %cst_63 = arith.constant dense<0.000000e+00> : vector<8xf32>
    %87 = vector.multi_reduction <add>, %86, %cst_63 [1] : vector<8x32xf32> to vector<8xf32>
    %88 = vector.shape_cast %87 : vector<8xf32> to vector<8x1xf32>
    %cst_64 = arith.constant 3.200000e+01 : f32
    %89 = vector.broadcast %cst_64 : f32 to vector<8x1xf32>
    %90 = arith.divf %88, %89 : vector<8x1xf32>
    %91 = vector.broadcast %83 : vector<8x1xf32> to vector<8x32xf32>
    %92 = arith.subf %75, %91 : vector<8x32xf32>
    %cst_65 = arith.constant 9.99999997E-7 : f32
    %93 = vector.broadcast %cst_65 : f32 to vector<8x1xf32>
    %94 = arith.addf %90, %93 : vector<8x1xf32>
    %95 = math.rsqrt %94 : vector<8x1xf32>
    %96 = vector.broadcast %95 : vector<8x1xf32> to vector<8x32xf32>
    %97 = arith.mulf %92, %96 : vector<8x32xf32>
    %98 = vector.broadcast %77 : vector<1x32xf32> to vector<8x32xf32>
    %99 = arith.mulf %97, %98 : vector<8x32xf32>
    %100 = vector.broadcast %79 : vector<1x32xf32> to vector<8x32xf32>
    %101 = arith.addf %99, %100 : vector<8x32xf32>
    %c0_66 = arith.constant 0 : index
    %c0_67 = arith.constant 0 : index
    %c0_68 = arith.constant 0 : index
    %102 = vector.load %arg15[%c0_66, %c0_67, %c0_68] : memref<2x32x128xf32, #tpu.memory_space<vmem>>, vector<1x32x128xf32>
    %103 = vector.shape_cast %102 : vector<1x32x128xf32> to vector<32x128xf32>
    %cst_69 = arith.constant dense<0.000000e+00> : vector<8x128xf32>
    %104 = tpu.matmul %101, %103, %cst_69 {dimension_numbers = #tpu.dot_dimension_numbers<[1], [0], [0], [1], [0, 0, 1, 1], [], []>} : vector<8x32xf32>, vector<32x128xf32>, vector<8x128xf32> -> vector<8x128xf32>
    %c0_70 = arith.constant 0 : index
    %c0_71 = arith.constant 0 : index
    %c0_72 = arith.constant 0 : index
    %105 = vector.load %arg16[%c0_70, %c0_71, %c0_72] : memref<2x1x128xf32, #tpu.memory_space<vmem>>, vector<1x1x128xf32>
    %106 = vector.shape_cast %105 : vector<1x1x128xf32> to vector<1x128xf32>
    %107 = vector.broadcast %106 : vector<1x128xf32> to vector<8x128xf32>
    %108 = arith.addf %104, %107 : vector<8x128xf32>
    %cst_73 = arith.constant 5.000000e-01 : f32
    %109 = vector.broadcast %cst_73 : f32 to vector<8x128xf32>
    %110 = arith.mulf %109, %108 : vector<8x128xf32>
    %cst_74 = arith.constant 0.707106769 : f32
    %111 = vector.broadcast %cst_74 : f32 to vector<8x128xf32>
    %112 = arith.mulf %108, %111 : vector<8x128xf32>
    %113 = math.erf %112 : vector<8x128xf32>
    %cst_75 = arith.constant 1.000000e+00 : f32
    %114 = vector.broadcast %cst_75 : f32 to vector<8x128xf32>
    %115 = arith.addf %114, %113 : vector<8x128xf32>
    %116 = arith.mulf %110, %115 : vector<8x128xf32>
    %c0_76 = arith.constant 0 : index
    %c0_77 = arith.constant 0 : index
    %c0_78 = arith.constant 0 : index
    %117 = vector.load %arg17[%c0_76, %c0_77, %c0_78] : memref<2x128x32xf32, #tpu.memory_space<vmem>>, vector<1x128x32xf32>
    %118 = vector.shape_cast %117 : vector<1x128x32xf32> to vector<128x32xf32>
    %cst_79 = arith.constant dense<0.000000e+00> : vector<8x32xf32>
    %119 = tpu.matmul %116, %118, %cst_79 {dimension_numbers = #tpu.dot_dimension_numbers<[1], [0], [0], [1], [0, 0, 1, 1], [], []>} : vector<8x128xf32>, vector<128x32xf32>, vector<8x32xf32> -> vector<8x32xf32>
    %120 = arith.addf %75, %119 : vector<8x32xf32>
    %c0_80 = arith.constant 0 : index
    %c0_81 = arith.constant 0 : index
    %c0_82 = arith.constant 0 : index
    %121 = vector.load %arg18[%c0_80, %c0_81, %c0_82] : memref<2x1x32xf32, #tpu.memory_space<vmem>>, vector<1x1x32xf32>
    %122 = vector.shape_cast %121 : vector<1x1x32xf32> to vector<1x32xf32>
    %123 = vector.broadcast %122 : vector<1x32xf32> to vector<8x32xf32>
    %124 = arith.addf %120, %123 : vector<8x32xf32>
    %c1 = arith.constant 1 : index
    %c0_83 = arith.constant 0 : index
    %c0_84 = arith.constant 0 : index
    %125 = vector.load %arg11[%c1, %c0_83, %c0_84] : memref<2x1x32xf32, #tpu.memory_space<vmem>>, vector<1x1x32xf32>
    %126 = vector.shape_cast %125 : vector<1x1x32xf32> to vector<1x32xf32>
    %c1_85 = arith.constant 1 : index
    %c0_86 = arith.constant 0 : index
    %c0_87 = arith.constant 0 : index
    %127 = vector.load %arg12[%c1_85, %c0_86, %c0_87] : memref<2x1x32xf32, #tpu.memory_space<vmem>>, vector<1x1x32xf32>
    %128 = vector.shape_cast %127 : vector<1x1x32xf32> to vector<1x32xf32>
    %cst_88 = arith.constant dense<0.000000e+00> : vector<8xf32>
    %129 = vector.multi_reduction <add>, %124, %cst_88 [1] : vector<8x32xf32> to vector<8xf32>
    %130 = vector.shape_cast %129 : vector<8xf32> to vector<8x1xf32>
    %cst_89 = arith.constant 3.200000e+01 : f32
    %131 = vector.broadcast %cst_89 : f32 to vector<8x1xf32>
    %132 = arith.divf %130, %131 : vector<8x1xf32>
    %133 = vector.broadcast %132 : vector<8x1xf32> to vector<8x32xf32>
    %134 = arith.subf %124, %133 : vector<8x32xf32>
    %135 = arith.mulf %134, %134 : vector<8x32xf32>
    %cst_90 = arith.constant dense<0.000000e+00> : vector<8xf32>
    %136 = vector.multi_reduction <add>, %135, %cst_90 [1] : vector<8x32xf32> to vector<8xf32>
    %137 = vector.shape_cast %136 : vector<8xf32> to vector<8x1xf32>
    %cst_91 = arith.constant 3.200000e+01 : f32
    %138 = vector.broadcast %cst_91 : f32 to vector<8x1xf32>
    %139 = arith.divf %137, %138 : vector<8x1xf32>
    %140 = vector.broadcast %132 : vector<8x1xf32> to vector<8x32xf32>
    %141 = arith.subf %124, %140 : vector<8x32xf32>
    %cst_92 = arith.constant 9.99999997E-7 : f32
    %142 = vector.broadcast %cst_92 : f32 to vector<8x1xf32>
    %143 = arith.addf %139, %142 : vector<8x1xf32>
    %144 = math.rsqrt %143 : vector<8x1xf32>
    %145 = vector.broadcast %144 : vector<8x1xf32> to vector<8x32xf32>
    %146 = arith.mulf %141, %145 : vector<8x32xf32>
    %147 = vector.broadcast %126 : vector<1x32xf32> to vector<8x32xf32>
    %148 = arith.mulf %146, %147 : vector<8x32xf32>
    %149 = vector.broadcast %128 : vector<1x32xf32> to vector<8x32xf32>
    %150 = arith.addf %148, %149 : vector<8x32xf32>
    %151 = vector.shape_cast %150 : vector<8x32xf32> to vector<1x8x32xf32>
    %152 = vector.broadcast %151 : vector<1x8x32xf32> to vector<4x8x32xf32>
    %c1_93 = arith.constant 1 : index
    %c0_94 = arith.constant 0 : index
    %c0_95 = arith.constant 0 : index
    %c0_96 = arith.constant 0 : index
    %153 = vector.load %arg3[%c1_93, %c0_94, %c0_95, %c0_96] : memref<2x4x32x8xf32, #tpu.memory_space<vmem>>, vector<1x4x32x8xf32>
    %154 = vector.shape_cast %153 : vector<1x4x32x8xf32> to vector<4x32x8xf32>
    "tpu.trace_start"() <{level = 10 : i32, message = "hsd,hde->hse"}> : () -> ()
    %cst_97 = arith.constant dense<0.000000e+00> : vector<4x8x8xf32>
    %155 = tpu.matmul %152, %154, %cst_97 {dimension_numbers = #tpu.dot_dimension_numbers<[2], [1], [1], [2], [0, 0, 0, 1, 1, 2], [0], [0]>} : vector<4x8x32xf32>, vector<4x32x8xf32>, vector<4x8x8xf32> -> vector<4x8x8xf32>
    "tpu.trace_stop"() : () -> ()
    %c1_98 = arith.constant 1 : index
    %c0_99 = arith.constant 0 : index
    %c0_100 = arith.constant 0 : index
    %c0_101 = arith.constant 0 : index
    %156 = vector.load %arg4[%c1_98, %c0_99, %c0_100, %c0_101] : memref<2x4x1x8xf32, #tpu.memory_space<vmem>>, vector<1x4x1x8xf32>
    %157 = vector.shape_cast %156 : vector<1x4x1x8xf32> to vector<4x1x8xf32>
    %158 = vector.broadcast %157 : vector<4x1x8xf32> to vector<4x8x8xf32>
    %159 = arith.addf %155, %158 : vector<4x8x8xf32>
    %cst_102 = arith.constant 0.353553385 : f32
    %160 = vector.broadcast %cst_102 : f32 to vector<4x8x8xf32>
    %161 = arith.mulf %159, %160 : vector<4x8x8xf32>
    %c1_103 = arith.constant 1 : index
    %c0_104 = arith.constant 0 : index
    %c0_105 = arith.constant 0 : index
    %c0_106 = arith.constant 0 : index
    %162 = vector.load %arg5[%c1_103, %c0_104, %c0_105, %c0_106] : memref<2x4x32x8xf32, #tpu.memory_space<vmem>>, vector<1x4x32x8xf32>
    %163 = vector.shape_cast %162 : vector<1x4x32x8xf32> to vector<4x32x8xf32>
    "tpu.trace_start"() <{level = 10 : i32, message = "hsd,hde->hse"}> : () -> ()
    %cst_107 = arith.constant dense<0.000000e+00> : vector<4x8x8xf32>
    %164 = tpu.matmul %152, %163, %cst_107 {dimension_numbers = #tpu.dot_dimension_numbers<[2], [1], [1], [2], [0, 0, 0, 1, 1, 2], [0], [0]>} : vector<4x8x32xf32>, vector<4x32x8xf32>, vector<4x8x8xf32> -> vector<4x8x8xf32>
    "tpu.trace_stop"() : () -> ()
    %c1_108 = arith.constant 1 : index
    %c0_109 = arith.constant 0 : index
    %c0_110 = arith.constant 0 : index
    %c0_111 = arith.constant 0 : index
    %165 = vector.load %arg6[%c1_108, %c0_109, %c0_110, %c0_111] : memref<2x4x1x8xf32, #tpu.memory_space<vmem>>, vector<1x4x1x8xf32>
    %166 = vector.shape_cast %165 : vector<1x4x1x8xf32> to vector<4x1x8xf32>
    %167 = vector.broadcast %166 : vector<4x1x8xf32> to vector<4x8x8xf32>
    %168 = arith.addf %164, %167 : vector<4x8x8xf32>
    %c1_112 = arith.constant 1 : index
    %c0_113 = arith.constant 0 : index
    %c0_114 = arith.constant 0 : index
    %c0_115 = arith.constant 0 : index
    %169 = vector.load %arg7[%c1_112, %c0_113, %c0_114, %c0_115] : memref<2x4x32x8xf32, #tpu.memory_space<vmem>>, vector<1x4x32x8xf32>
    %170 = vector.shape_cast %169 : vector<1x4x32x8xf32> to vector<4x32x8xf32>
    "tpu.trace_start"() <{level = 10 : i32, message = "hsd,hde->hse"}> : () -> ()
    %cst_116 = arith.constant dense<0.000000e+00> : vector<4x8x8xf32>
    %171 = tpu.matmul %152, %170, %cst_116 {dimension_numbers = #tpu.dot_dimension_numbers<[2], [1], [1], [2], [0, 0, 0, 1, 1, 2], [0], [0]>} : vector<4x8x32xf32>, vector<4x32x8xf32>, vector<4x8x8xf32> -> vector<4x8x8xf32>
    "tpu.trace_stop"() : () -> ()
    %c1_117 = arith.constant 1 : index
    %c0_118 = arith.constant 0 : index
    %c0_119 = arith.constant 0 : index
    %c0_120 = arith.constant 0 : index
    %172 = vector.load %arg8[%c1_117, %c0_118, %c0_119, %c0_120] : memref<2x4x1x8xf32, #tpu.memory_space<vmem>>, vector<1x4x1x8xf32>
    %173 = vector.shape_cast %172 : vector<1x4x1x8xf32> to vector<4x1x8xf32>
    %174 = vector.broadcast %173 : vector<4x1x8xf32> to vector<4x8x8xf32>
    %175 = arith.addf %171, %174 : vector<4x8x8xf32>
    "tpu.trace_start"() <{level = 10 : i32, message = "hqd,hkd->hqk"}> : () -> ()
    %cst_121 = arith.constant dense<0.000000e+00> : vector<4x8x8xf32>
    %176 = tpu.matmul %161, %168, %cst_121 {dimension_numbers = #tpu.dot_dimension_numbers<[2], [2], [1], [1], [0, 0, 0, 1, 1, 1], [0], [0]>} : vector<4x8x8xf32>, vector<4x8x8xf32>, vector<4x8x8xf32> -> vector<4x8x8xf32>
    "tpu.trace_stop"() : () -> ()
    %cst_122 = arith.constant dense<0xFF800000> : vector<4x8xf32>
    %177 = vector.multi_reduction <maximumf>, %176, %cst_122 [2] : vector<4x8x8xf32> to vector<4x8xf32>
    %178 = vector.shape_cast %177 : vector<4x8xf32> to vector<4x8x1xf32>
    %179 = vector.broadcast %178 : vector<4x8x1xf32> to vector<4x8x8xf32>
    %180 = arith.subf %176, %179 : vector<4x8x8xf32>
    %181 = math.exp %180 : vector<4x8x8xf32>
    %cst_123 = arith.constant dense<0.000000e+00> : vector<4x8xf32>
    %182 = vector.multi_reduction <add>, %181, %cst_123 [2] : vector<4x8x8xf32> to vector<4x8xf32>
    %183 = vector.shape_cast %182 : vector<4x8xf32> to vector<4x8x1xf32>
    %184 = tpu.reciprocal %183 {approx = true} : vector<4x8x1xf32> -> vector<4x8x1xf32>
    %185 = vector.broadcast %184 : vector<4x8x1xf32> to vector<4x8x8xf32>
    %186 = arith.mulf %181, %185 : vector<4x8x8xf32>
    "tpu.trace_start"() <{level = 10 : i32, message = "hqk,hkd->hqd"}> : () -> ()
    %cst_124 = arith.constant dense<0.000000e+00> : vector<4x8x8xf32>
    %187 = tpu.matmul %186, %175, %cst_124 {dimension_numbers = #tpu.dot_dimension_numbers<[2], [1], [1], [2], [0, 0, 0, 1, 1, 2], [0], [0]>} : vector<4x8x8xf32>, vector<4x8x8xf32>, vector<4x8x8xf32> -> vector<4x8x8xf32>
    "tpu.trace_stop"() : () -> ()
    %c1_125 = arith.constant 1 : index
    %c0_126 = arith.constant 0 : index
    %c0_127 = arith.constant 0 : index
    %c0_128 = arith.constant 0 : index
    %188 = vector.load %arg9[%c1_125, %c0_126, %c0_127, %c0_128] : memref<2x4x8x32xf32, #tpu.memory_space<vmem>>, vector<1x4x8x32xf32>
    %189 = vector.shape_cast %188 : vector<1x4x8x32xf32> to vector<4x8x32xf32>
    "tpu.trace_start"() <{level = 10 : i32, message = "hsd,hde->hse"}> : () -> ()
    %cst_129 = arith.constant dense<0.000000e+00> : vector<4x8x32xf32>
    %190 = tpu.matmul %187, %189, %cst_129 {dimension_numbers = #tpu.dot_dimension_numbers<[2], [1], [1], [2], [0, 0, 0, 1, 1, 2], [0], [0]>} : vector<4x8x8xf32>, vector<4x8x32xf32>, vector<4x8x32xf32> -> vector<4x8x32xf32>
    "tpu.trace_stop"() : () -> ()
    %cst_130 = arith.constant dense<0.000000e+00> : vector<8x32xf32>
    %191 = vector.multi_reduction <add>, %190, %cst_130 [0] : vector<4x8x32xf32> to vector<8x32xf32>
    %192 = arith.addf %124, %191 : vector<8x32xf32>
    %c1_131 = arith.constant 1 : index
    %c0_132 = arith.constant 0 : index
    %c0_133 = arith.constant 0 : index
    %193 = vector.load %arg10[%c1_131, %c0_132, %c0_133] : memref<2x1x32xf32, #tpu.memory_space<vmem>>, vector<1x1x32xf32>
    %194 = vector.shape_cast %193 : vector<1x1x32xf32> to vector<1x32xf32>
    %195 = vector.broadcast %194 : vector<1x32xf32> to vector<8x32xf32>
    %196 = arith.addf %192, %195 : vector<8x32xf32>
    %c1_134 = arith.constant 1 : index
    %c0_135 = arith.constant 0 : index
    %c0_136 = arith.constant 0 : index
    %197 = vector.load %arg13[%c1_134, %c0_135, %c0_136] : memref<2x1x32xf32, #tpu.memory_space<vmem>>, vector<1x1x32xf32>
    %198 = vector.shape_cast %197 : vector<1x1x32xf32> to vector<1x32xf32>
    %c1_137 = arith.constant 1 : index
    %c0_138 = arith.constant 0 : index
    %c0_139 = arith.constant 0 : index
    %199 = vector.load %arg14[%c1_137, %c0_138, %c0_139] : memref<2x1x32xf32, #tpu.memory_space<vmem>>, vector<1x1x32xf32>
    %200 = vector.shape_cast %199 : vector<1x1x32xf32> to vector<1x32xf32>
    %cst_140 = arith.constant dense<0.000000e+00> : vector<8xf32>
    %201 = vector.multi_reduction <add>, %196, %cst_140 [1] : vector<8x32xf32> to vector<8xf32>
    %202 = vector.shape_cast %201 : vector<8xf32> to vector<8x1xf32>
    %cst_141 = arith.constant 3.200000e+01 : f32
    %203 = vector.broadcast %cst_141 : f32 to vector<8x1xf32>
    %204 = arith.divf %202, %203 : vector<8x1xf32>
    %205 = vector.broadcast %204 : vector<8x1xf32> to vector<8x32xf32>
    %206 = arith.subf %196, %205 : vector<8x32xf32>
    %207 = arith.mulf %206, %206 : vector<8x32xf32>
    %cst_142 = arith.constant dense<0.000000e+00> : vector<8xf32>
    %208 = vector.multi_reduction <add>, %207, %cst_142 [1] : vector<8x32xf32> to vector<8xf32>
    %209 = vector.shape_cast %208 : vector<8xf32> to vector<8x1xf32>
    %cst_143 = arith.constant 3.200000e+01 : f32
    %210 = vector.broadcast %cst_143 : f32 to vector<8x1xf32>
    %211 = arith.divf %209, %210 : vector<8x1xf32>
    %212 = vector.broadcast %204 : vector<8x1xf32> to vector<8x32xf32>
    %213 = arith.subf %196, %212 : vector<8x32xf32>
    %cst_144 = arith.constant 9.99999997E-7 : f32
    %214 = vector.broadcast %cst_144 : f32 to vector<8x1xf32>
    %215 = arith.addf %211, %214 : vector<8x1xf32>
    %216 = math.rsqrt %215 : vector<8x1xf32>
    %217 = vector.broadcast %216 : vector<8x1xf32> to vector<8x32xf32>
    %218 = arith.mulf %213, %217 : vector<8x32xf32>
    %219 = vector.broadcast %198 : vector<1x32xf32> to vector<8x32xf32>
    %220 = arith.mulf %218, %219 : vector<8x32xf32>
    %221 = vector.broadcast %200 : vector<1x32xf32> to vector<8x32xf32>
    %222 = arith.addf %220, %221 : vector<8x32xf32>
    %c1_145 = arith.constant 1 : index
    %c0_146 = arith.constant 0 : index
    %c0_147 = arith.constant 0 : index
    %223 = vector.load %arg15[%c1_145, %c0_146, %c0_147] : memref<2x32x128xf32, #tpu.memory_space<vmem>>, vector<1x32x128xf32>
    %224 = vector.shape_cast %223 : vector<1x32x128xf32> to vector<32x128xf32>
    %cst_148 = arith.constant dense<0.000000e+00> : vector<8x128xf32>
    %225 = tpu.matmul %222, %224, %cst_148 {dimension_numbers = #tpu.dot_dimension_numbers<[1], [0], [0], [1], [0, 0, 1, 1], [], []>} : vector<8x32xf32>, vector<32x128xf32>, vector<8x128xf32> -> vector<8x128xf32>
    %c1_149 = arith.constant 1 : index
    %c0_150 = arith.constant 0 : index
    %c0_151 = arith.constant 0 : index
    %226 = vector.load %arg16[%c1_149, %c0_150, %c0_151] : memref<2x1x128xf32, #tpu.memory_space<vmem>>, vector<1x1x128xf32>
    %227 = vector.shape_cast %226 : vector<1x1x128xf32> to vector<1x128xf32>
    %228 = vector.broadcast %227 : vector<1x128xf32> to vector<8x128xf32>
    %229 = arith.addf %225, %228 : vector<8x128xf32>
    %cst_152 = arith.constant 5.000000e-01 : f32
    %230 = vector.broadcast %cst_152 : f32 to vector<8x128xf32>
    %231 = arith.mulf %230, %229 : vector<8x128xf32>
    %cst_153 = arith.constant 0.707106769 : f32
    %232 = vector.broadcast %cst_153 : f32 to vector<8x128xf32>
    %233 = arith.mulf %229, %232 : vector<8x128xf32>
    %234 = math.erf %233 : vector<8x128xf32>
    %cst_154 = arith.constant 1.000000e+00 : f32
    %235 = vector.broadcast %cst_154 : f32 to vector<8x128xf32>
    %236 = arith.addf %235, %234 : vector<8x128xf32>
    %237 = arith.mulf %231, %236 : vector<8x128xf32>
    %c1_155 = arith.constant 1 : index
    %c0_156 = arith.constant 0 : index
    %c0_157 = arith.constant 0 : index
    %238 = vector.load %arg17[%c1_155, %c0_156, %c0_157] : memref<2x128x32xf32, #tpu.memory_space<vmem>>, vector<1x128x32xf32>
    %239 = vector.shape_cast %238 : vector<1x128x32xf32> to vector<128x32xf32>
    %cst_158 = arith.constant dense<0.000000e+00> : vector<8x32xf32>
    %240 = tpu.matmul %237, %239, %cst_158 {dimension_numbers = #tpu.dot_dimension_numbers<[1], [0], [0], [1], [0, 0, 1, 1], [], []>} : vector<8x128xf32>, vector<128x32xf32>, vector<8x32xf32> -> vector<8x32xf32>
    %241 = arith.addf %196, %240 : vector<8x32xf32>
    %c1_159 = arith.constant 1 : index
    %c0_160 = arith.constant 0 : index
    %c0_161 = arith.constant 0 : index
    %242 = vector.load %arg18[%c1_159, %c0_160, %c0_161] : memref<2x1x32xf32, #tpu.memory_space<vmem>>, vector<1x1x32xf32>
    %243 = vector.shape_cast %242 : vector<1x1x32xf32> to vector<1x32xf32>
    %244 = vector.broadcast %243 : vector<1x32xf32> to vector<8x32xf32>
    %245 = arith.addf %241, %244 : vector<8x32xf32>
    %c0_162 = arith.constant 0 : index
    %c0_163 = arith.constant 0 : index
    %246 = vector.load %arg19[%c0_162, %c0_163] : memref<1x32xf32, #tpu.memory_space<vmem>>, vector<1x32xf32>
    %c0_164 = arith.constant 0 : index
    %c0_165 = arith.constant 0 : index
    %247 = vector.load %arg20[%c0_164, %c0_165] : memref<1x32xf32, #tpu.memory_space<vmem>>, vector<1x32xf32>
    %cst_166 = arith.constant dense<0.000000e+00> : vector<8xf32>
    %248 = vector.multi_reduction <add>, %245, %cst_166 [1] : vector<8x32xf32> to vector<8xf32>
    %249 = vector.shape_cast %248 : vector<8xf32> to vector<8x1xf32>
    %cst_167 = arith.constant 3.200000e+01 : f32
    %250 = vector.broadcast %cst_167 : f32 to vector<8x1xf32>
    %251 = arith.divf %249, %250 : vector<8x1xf32>
    %252 = vector.broadcast %251 : vector<8x1xf32> to vector<8x32xf32>
    %253 = arith.subf %245, %252 : vector<8x32xf32>
    %254 = arith.mulf %253, %253 : vector<8x32xf32>
    %cst_168 = arith.constant dense<0.000000e+00> : vector<8xf32>
    %255 = vector.multi_reduction <add>, %254, %cst_168 [1] : vector<8x32xf32> to vector<8xf32>
    %256 = vector.shape_cast %255 : vector<8xf32> to vector<8x1xf32>
    %cst_169 = arith.constant 3.200000e+01 : f32
    %257 = vector.broadcast %cst_169 : f32 to vector<8x1xf32>
    %258 = arith.divf %256, %257 : vector<8x1xf32>
    %259 = vector.broadcast %251 : vector<8x1xf32> to vector<8x32xf32>
    %260 = arith.subf %245, %259 : vector<8x32xf32>
    %cst_170 = arith.constant 9.99999997E-7 : f32
    %261 = vector.broadcast %cst_170 : f32 to vector<8x1xf32>
    %262 = arith.addf %258, %261 : vector<8x1xf32>
    %263 = math.rsqrt %262 : vector<8x1xf32>
    %264 = vector.broadcast %263 : vector<8x1xf32> to vector<8x32xf32>
    %265 = arith.mulf %260, %264 : vector<8x32xf32>
    %266 = vector.broadcast %246 : vector<1x32xf32> to vector<8x32xf32>
    %267 = arith.mulf %265, %266 : vector<8x32xf32>
    %268 = vector.broadcast %247 : vector<1x32xf32> to vector<8x32xf32>
    %269 = arith.addf %267, %268 : vector<8x32xf32>
    %c0_171 = arith.constant 0 : index
    %c0_172 = arith.constant 0 : index
    %c0_173 = arith.constant 0 : index
    %270 = vector.load %arg21[%c0_171, %c0_172, %c0_173] : memref<1x8x32xf32, #tpu.memory_space<vmem>>, vector<1x8x32xf32>
    %271 = vector.shape_cast %270 : vector<1x8x32xf32> to vector<8x32xf32>
    %272 = vector.shape_cast %269 : vector<8x32xf32> to vector<1x8x32xf32>
    tpu.vector_store %arg21[%c0_171, %c0_172, %c0_173], %272 {strides = array<i32>} : memref<1x8x32xf32, #tpu.memory_space<vmem>>, vector<1x8x32xf32>,
    return
  }
  func.func @transform_0(%arg0: i32) -> (i32, i32, i32) {
    %c0_i32 = arith.constant 0 : i32
    %c0_i32_0 = arith.constant 0 : i32
    %c0_i32_1 = arith.constant 0 : i32
    return %arg0, %c0_i32, %c0_i32_0 : i32, i32, i32
  }
  func.func @transform_1(%arg0: i32) -> (i32, i32) {
    %c0_i32 = arith.constant 0 : i32
    %c0_i32_0 = arith.constant 0 : i32
    %c0_i32_1 = arith.constant 0 : i32
    return %c0_i32, %c0_i32_0 : i32, i32
  }
  func.func @transform_2(%arg0: i32) -> (i32, i32, i32, i32) {
    %c0_i32 = arith.constant 0 : i32
    %c0_i32_0 = arith.constant 0 : i32
    %c0_i32_1 = arith.constant 0 : i32
    %c0_i32_2 = arith.constant 0 : i32
    %c0_i32_3 = arith.constant 0 : i32
    return %c0_i32, %c0_i32_0, %c0_i32_1, %c0_i32_2 : i32, i32, i32, i32
  }
  func.func @transform_3(%arg0: i32) -> (i32, i32, i32, i32) {
    %c0_i32 = arith.constant 0 : i32
    %c0_i32_0 = arith.constant 0 : i32
    %c0_i32_1 = arith.constant 0 : i32
    %c0_i32_2 = arith.constant 0 : i32
    %c0_i32_3 = arith.constant 0 : i32
    return %c0_i32, %c0_i32_0, %c0_i32_1, %c0_i32_2 : i32, i32, i32, i32
  }
  func.func @transform_4(%arg0: i32) -> (i32, i32, i32, i32) {
    %c0_i32 = arith.constant 0 : i32
    %c0_i32_0 = arith.constant 0 : i32
    %c0_i32_1 = arith.constant 0 : i32
    %c0_i32_2 = arith.constant 0 : i32
    %c0_i32_3 = arith.constant 0 : i32
    return %c0_i32, %c0_i32_0, %c0_i32_1, %c0_i32_2 : i32, i32, i32, i32
  }
  func.func @transform_5(%arg0: i32) -> (i32, i32, i32, i32) {
    %c0_i32 = arith.constant 0 : i32
    %c0_i32_0 = arith.constant 0 : i32
    %c0_i32_1 = arith.constant 0 : i32
    %c0_i32_2 = arith.constant 0 : i32
    %c0_i32_3 = arith.constant 0 : i32
    return %c0_i32, %c0_i32_0, %c0_i32_1, %c0_i32_2 : i32, i32, i32, i32
  }
  func.func @transform_6(%arg0: i32) -> (i32, i32, i32, i32) {
    %c0_i32 = arith.constant 0 : i32
    %c0_i32_0 = arith.constant 0 : i32
    %c0_i32_1 = arith.constant 0 : i32
    %c0_i32_2 = arith.constant 0 : i32
    %c0_i32_3 = arith.constant 0 : i32
    return %c0_i32, %c0_i32_0, %c0_i32_1, %c0_i32_2 : i32, i32, i32, i32
  }
  func.func @transform_7(%arg0: i32) -> (i32, i32, i32, i32) {
    %c0_i32 = arith.constant 0 : i32
    %c0_i32_0 = arith.constant 0 : i32
    %c0_i32_1 = arith.constant 0 : i32
    %c0_i32_2 = arith.constant 0 : i32
    %c0_i32_3 = arith.constant 0 : i32
    return %c0_i32, %c0_i32_0, %c0_i32_1, %c0_i32_2 : i32, i32, i32, i32
  }
  func.func @transform_8(%arg0: i32) -> (i32, i32, i32, i32) {
    %c0_i32 = arith.constant 0 : i32
    %c0_i32_0 = arith.constant 0 : i32
    %c0_i32_1 = arith.constant 0 : i32
    %c0_i32_2 = arith.constant 0 : i32
    %c0_i32_3 = arith.constant 0 : i32
    return %c0_i32, %c0_i32_0, %c0_i32_1, %c0_i32_2 : i32, i32, i32, i32
  }
  func.func @transform_9(%arg0: i32) -> (i32, i32, i32) {
    %c0_i32 = arith.constant 0 : i32
    %c0_i32_0 = arith.constant 0 : i32
    %c0_i32_1 = arith.constant 0 : i32
    %c0_i32_2 = arith.constant 0 : i32
    return %c0_i32, %c0_i32_0, %c0_i32_1 : i32, i32, i32
  }
  func.func @transform_10(%arg0: i32) -> (i32, i32, i32) {
    %c0_i32 = arith.constant 0 : i32
    %c0_i32_0 = arith.constant 0 : i32
    %c0_i32_1 = arith.constant 0 : i32
    %c0_i32_2 = arith.constant 0 : i32
    return %c0_i32, %c0_i32_0, %c0_i32_1 : i32, i32, i32
  }
  func.func @transform_11(%arg0: i32) -> (i32, i32, i32) {
    %c0_i32 = arith.constant 0 : i32
    %c0_i32_0 = arith.constant 0 : i32
    %c0_i32_1 = arith.constant 0 : i32
    %c0_i32_2 = arith.constant 0 : i32
    return %c0_i32, %c0_i32_0, %c0_i32_1 : i32, i32, i32
  }
  func.func @transform_12(%arg0: i32) -> (i32, i32, i32) {
    %c0_i32 = arith.constant 0 : i32
    %c0_i32_0 = arith.constant 0 : i32
    %c0_i32_1 = arith.constant 0 : i32
    %c0_i32_2 = arith.constant 0 : i32
    return %c0_i32, %c0_i32_0, %c0_i32_1 : i32, i32, i32
  }
  func.func @transform_13(%arg0: i32) -> (i32, i32, i32) {
    %c0_i32 = arith.constant 0 : i32
    %c0_i32_0 = arith.constant 0 : i32
    %c0_i32_1 = arith.constant 0 : i32
    %c0_i32_2 = arith.constant 0 : i32
    return %c0_i32, %c0_i32_0, %c0_i32_1 : i32, i32, i32
  }
  func.func @transform_14(%arg0: i32) -> (i32, i32, i32) {
    %c0_i32 = arith.constant 0 : i32
    %c0_i32_0 = arith.constant 0 : i32
    %c0_i32_1 = arith.constant 0 : i32
    %c0_i32_2 = arith.constant 0 : i32
    return %c0_i32, %c0_i32_0, %c0_i32_1 : i32, i32, i32
  }
  func.func @transform_15(%arg0: i32) -> (i32, i32, i32) {
    %c0_i32 = arith.constant 0 : i32
    %c0_i32_0 = arith.constant 0 : i32
    %c0_i32_1 = arith.constant 0 : i32
    %c0_i32_2 = arith.constant 0 : i32
    return %c0_i32, %c0_i32_0, %c0_i32_1 : i32, i32, i32
  }
  func.func @transform_16(%arg0: i32) -> (i32, i32, i32) {
    %c0_i32 = arith.constant 0 : i32
    %c0_i32_0 = arith.constant 0 : i32
    %c0_i32_1 = arith.constant 0 : i32
    %c0_i32_2 = arith.constant 0 : i32
    return %c0_i32, %c0_i32_0, %c0_i32_1 : i32, i32, i32
  }
  func.func @transform_17(%arg0: i32) -> (i32, i32, i32) {
    %c0_i32 = arith.constant 0 : i32
    %c0_i32_0 = arith.constant 0 : i32
    %c0_i32_1 = arith.constant 0 : i32
    %c0_i32_2 = arith.constant 0 : i32
    return %c0_i32, %c0_i32_0, %c0_i32_1 : i32, i32, i32
  }
  func.func @transform_18(%arg0: i32) -> (i32, i32) {
    %c0_i32 = arith.constant 0 : i32
    %c0_i32_0 = arith.constant 0 : i32
    %c0_i32_1 = arith.constant 0 : i32
    return %c0_i32, %c0_i32_0 : i32, i32
  }
  func.func @transform_19(%arg0: i32) -> (i32, i32) {
    %c0_i32 = arith.constant 0 : i32
    %c0_i32_0 = arith.constant 0 : i32
    %c0_i32_1 = arith.constant 0 : i32
    return %c0_i32, %c0_i32_0 : i32, i32
  }
  func.func @transform_20(%arg0: i32) -> (i32, i32, i32) {
    %c0_i32 = arith.constant 0 : i32
    %c0_i32_0 = arith.constant 0 : i32
    %c0_i32_1 = arith.constant 0 : i32
    return %arg0, %c0_i32, %c0_i32_0 : i32, i32, i32
  }
}

</mosaic_0001>

<llo_original>
// kernel: transformer_encoder.1
$region0: #{transformer_encoder.1}
  #allocation0 [shape = 'u32[]', space=smem, size = 0x4, offset = 0x4, fixed_abs, tag = 'smem constant byte address 0x4 - core index']
  #allocation1 [shape = 'u32[144,128]{1,0:T(1,128)}', space=vmem, size = 0x12000, scoped, tag = 'internal scratch']
  %s0 = inlined_call_operand.vmem [shape: f32[2,8,32], index: 0, kind: input, shape index: {}]
  %s1 = inlined_call_operand.vmem [shape: f32[8,32], index: 1, kind: input, shape index: {}]
  %s2 = inlined_call_operand.vmem [shape: f32[2,4,32,8], index: 2, kind: input, shape index: {}]
  %s3 = inlined_call_operand.vmem [shape: f32[2,4,1,8], index: 3, kind: input, shape index: {}]
  %s4 = inlined_call_operand.vmem [shape: f32[2,4,32,8], index: 4, kind: input, shape index: {}]
  %s5 = inlined_call_operand.vmem [shape: f32[2,4,1,8], index: 5, kind: input, shape index: {}]
  %s6 = inlined_call_operand.vmem [shape: f32[2,4,32,8], index: 6, kind: input, shape index: {}]
  %s7 = inlined_call_operand.vmem [shape: f32[2,4,1,8], index: 7, kind: input, shape index: {}]
  %s8 = inlined_call_operand.vmem [shape: f32[2,4,8,32], index: 8, kind: input, shape index: {}]
  %s9 = inlined_call_operand.vmem [shape: f32[2,1,32], index: 9, kind: input, shape index: {}]
  %s10 = inlined_call_operand.vmem [shape: f32[2,1,32], index: 10, kind: input, shape index: {}]
  %s11 = inlined_call_operand.vmem [shape: f32[2,1,32], index: 11, kind: input, shape index: {}]
  %s12 = inlined_call_operand.vmem [shape: f32[2,1,32], index: 12, kind: input, shape index: {}]
  %s13 = inlined_call_operand.vmem [shape: f32[2,1,32], index: 13, kind: input, shape index: {}]
  %s14 = inlined_call_operand.vmem [shape: f32[2,32,128], index: 14, kind: input, shape index: {}]
  %s15 = inlined_call_operand.vmem [shape: f32[2,1,128], index: 15, kind: input, shape index: {}]
  %s16 = inlined_call_operand.vmem [shape: f32[2,128,32], index: 16, kind: input, shape index: {}]
  %s17 = inlined_call_operand.vmem [shape: f32[2,1,32], index: 17, kind: input, shape index: {}]
  %s18 = inlined_call_operand.vmem [shape: f32[1,32], index: 18, kind: input, shape index: {}]
  %s19 = inlined_call_operand.vmem [shape: f32[1,32], index: 19, kind: input, shape index: {}]
  %s20 = inlined_call_operand.hbm [shape: f32[2,8,32], index: 20, kind: output, shape index: {}]
  %s21 = sld [smem:[#allocation0]]
  $region113: #{transformer_encoder.1} parent=0
    _
  %s23 = ssub.s32 1, %s21
  %s24 = scalar_select 0, %s23, %s21
  $region1: #{transformer_encoder.1} parent=0
    #allocation2 [shape = 'u8[8192]{0}', space=vmem, size = 0x2000, scoped, tag = 'output window, operand 0']
    #allocation3 [shape = 's32[2]{0}', space=sflag, size = 0x8, scoped, tag = 'scoped memory for transformer_encoder.1']
    %25 = vsyncpa [#allocation3], 0
    %s26 = scalar_lea.sflag [#allocation3], 1
    %27 = vsyncpa %s26, 0
    loop: start=0, step=1, limit=4
    $region2: #{transformer_encoder.1} parent=1 // loop_pre_header
      _
    $region3: #{transformer_encoder.1} parent=1 // loop_header
      %s29 = sphi 0, %s33
      %p30 = scmp.ge.s32.totalorder %s29, 4
      %s39 = sphi 0, %s41
      %s42 = sphi 0, %s39
      %s43 = sphi 0, %s42
      %s59 = sphi 0, %s43
      %s63 = sphi 0, %s63
      %s65 = sphi 0, %s63
      %s66 = sphi 0, %s65
      %s80 = sphi 0, %s66
      %s84 = sphi 0, %s84
      %s86 = sphi 0, %s84
      %s87 = sphi 0, %s86
      %s101 = sphi 0, %s87
      %s105 = sphi 0, %s105
      %s107 = sphi 0, %s105
      %s108 = sphi 0, %s107
      %s122 = sphi 0, %s108
      %s126 = sphi 0, %s126
      %s128 = sphi 0, %s126
      %s129 = sphi 0, %s128
      %s143 = sphi 0, %s129
      %s147 = sphi 0, %s147
      %s149 = sphi 0, %s147
      %s150 = sphi 0, %s149
      %s164 = sphi 0, %s150
      %s168 = sphi 0, %s168
      %s170 = sphi 0, %s168
      %s171 = sphi 0, %s170
      %s185 = sphi 0, %s171
      %s189 = sphi 0, %s189
      %s191 = sphi 0, %s189
      %s192 = sphi 0, %s191
      %s206 = sphi 0, %s192
      %s210 = sphi 0, %s210
      %s212 = sphi 0, %s210
      %s213 = sphi 0, %s212
      %s227 = sphi 0, %s213
      %s231 = sphi 0, %s231
      %s233 = sphi 0, %s231
      %s234 = sphi 0, %s233
      %s248 = sphi 0, %s234
      %s252 = sphi 0, %s252
      %s254 = sphi 0, %s252
      %s255 = sphi 0, %s254
      %s269 = sphi 0, %s255
      %s273 = sphi 0, %s273
      %s275 = sphi 0, %s273
      %s276 = sphi 0, %s275
      %s290 = sphi 0, %s276
      %s294 = sphi 0, %s294
      %s296 = sphi 0, %s294
      %s297 = sphi 0, %s296
      %s311 = sphi 0, %s297
      %s315 = sphi 0, %s315
      %s317 = sphi 0, %s315
      %s318 = sphi 0, %s317
      %s332 = sphi 0, %s318
      %s336 = sphi 0, %s336
      %s338 = sphi 0, %s336
      %s339 = sphi 0, %s338
      %s353 = sphi 0, %s339
      %s357 = sphi 0, %s357
      %s359 = sphi 0, %s357
      %s360 = sphi 0, %s359
      %s374 = sphi 0, %s360
      %s378 = sphi 0, %s378
      %s380 = sphi 0, %s378
      %s381 = sphi 0, %s380
      %s395 = sphi 0, %s381
      %s399 = sphi 0, %s399
      %s401 = sphi 0, %s399
      %s402 = sphi 0, %s401
      %s416 = sphi 0, %s402
      %s420 = sphi 0, %s420
      %s422 = sphi 0, %s420
      %s423 = sphi 0, %s422
      %s437 = sphi 0, %s423
      %s441 = sphi 0, %s441
      %s443 = sphi 0, %s441
      %s444 = sphi 0, %s443
      %s458 = sphi 0, %s444
      %s464 = sphi 0, %s466
      %s467 = sphi 0, %s464
      %s468 = sphi 0, %s467
      %s484 = sphi 0, %s468
    $region4: #{transformer_encoder.1} parent=1 // loop_header_branch
      %32 = sbr.rel (%p30) target = $region8
    $region5: #{transformer_encoder.1} parent=1 // loop_body
      %s34 = ssub.s32 %s29, 1
      %s35 = ssub.s32 %s29, 2
      %s36 = sadd.s32 %s29, 1
      %s37 = ssub.s32 %s29, %s36
      %p38 = scmp.eq.s32.totalorder %s37, 0
      %s40 = sadd.s32 %s39, 1
      %s41 = scalar_select %p38, %s39, %s40
      %p44 = pneg %p38
      %p45 = scmp.eq.s32.totalorder %s29, 1
      %p46 = por %p44, %p45
      %p47 = scmp.ne.s32.totalorder %s39, %s42
      %p48 = scmp.eq.s32.totalorder %s29, 0
      %p49 = por %p47, %p48
      %p50 = scmp.ne.s32.totalorder %s39, %s42
      %p51 = scmp.eq.s32.totalorder %s34, 1
      %p52 = por %p50, %p51
      %p53 = scmp.ne.s32.totalorder %s42, %s43
      %p54 = scmp.eq.s32.totalorder %s34, 0
      %p55 = por %p53, %p54
      %p56 = scmp.ne.s32.totalorder %s42, %s43
      %p57 = scmp.eq.s32.totalorder %s35, 1
      %p58 = por %p56, %p57
      %p60 = scmp.ne.s32.totalorder %s43, %s59
      %p61 = scmp.eq.s32.totalorder %s35, 0
      %p62 = por %p60, %p61
      %s64 = sadd.s32 %s63, 1
      %p67 = scmp.eq.s32.totalorder %s29, 1
      %p68 = scmp.ne.s32.totalorder %s63, %s65
      %p69 = scmp.eq.s32.totalorder %s29, 0
      %p70 = por %p68, %p69
      %p71 = scmp.ne.s32.totalorder %s63, %s65
      %p72 = scmp.eq.s32.totalorder %s34, 1
      %p73 = por %p71, %p72
      %p74 = scmp.ne.s32.totalorder %s65, %s66
      %p75 = scmp.eq.s32.totalorder %s34, 0
      %p76 = por %p74, %p75
      %p77 = scmp.ne.s32.totalorder %s65, %s66
      %p78 = scmp.eq.s32.totalorder %s35, 1
      %p79 = por %p77, %p78
      %p81 = scmp.ne.s32.totalorder %s66, %s80
      %p82 = scmp.eq.s32.totalorder %s35, 0
      %p83 = por %p81, %p82
      %s85 = sadd.s32 %s84, 1
      %p88 = scmp.eq.s32.totalorder %s29, 1
      %p89 = scmp.ne.s32.totalorder %s84, %s86
      %p90 = scmp.eq.s32.totalorder %s29, 0
      %p91 = por %p89, %p90
      %p92 = scmp.ne.s32.totalorder %s84, %s86
      %p93 = scmp.eq.s32.totalorder %s34, 1
      %p94 = por %p92, %p93
      %p95 = scmp.ne.s32.totalorder %s86, %s87
      %p96 = scmp.eq.s32.totalorder %s34, 0
      %p97 = por %p95, %p96
      %p98 = scmp.ne.s32.totalorder %s86, %s87
      %p99 = scmp.eq.s32.totalorder %s35, 1
      %p100 = por %p98, %p99
      %p102 = scmp.ne.s32.totalorder %s87, %s101
      %p103 = scmp.eq.s32.totalorder %s35, 0
      %p104 = por %p102, %p103
      %s106 = sadd.s32 %s105, 1
      %p109 = scmp.eq.s32.totalorder %s29, 1
      %p110 = scmp.ne.s32.totalorder %s105, %s107
      %p111 = scmp.eq.s32.totalorder %s29, 0
      %p112 = por %p110, %p111
      %p113 = scmp.ne.s32.totalorder %s105, %s107
      %p114 = scmp.eq.s32.totalorder %s34, 1
      %p115 = por %p113, %p114
      %p116 = scmp.ne.s32.totalorder %s107, %s108
      %p117 = scmp.eq.s32.totalorder %s34, 0
      %p118 = por %p116, %p117
      %p119 = scmp.ne.s32.totalorder %s107, %s108
      %p120 = scmp.eq.s32.totalorder %s35, 1
      %p121 = por %p119, %p120
      %p123 = scmp.ne.s32.totalorder %s108, %s122
      %p124 = scmp.eq.s32.totalorder %s35, 0
      %p125 = por %p123, %p124
      %s127 = sadd.s32 %s126, 1
      %p130 = scmp.eq.s32.totalorder %s29, 1
      %p131 = scmp.ne.s32.totalorder %s126, %s128
      %p132 = scmp.eq.s32.totalorder %s29, 0
      %p133 = por %p131, %p132
      %p134 = scmp.ne.s32.totalorder %s126, %s128
      %p135 = scmp.eq.s32.totalorder %s34, 1
      %p136 = por %p134, %p135
      %p137 = scmp.ne.s32.totalorder %s128, %s129
      %p138 = scmp.eq.s32.totalorder %s34, 0
      %p139 = por %p137, %p138
      %p140 = scmp.ne.s32.totalorder %s128, %s129
      %p141 = scmp.eq.s32.totalorder %s35, 1
      %p142 = por %p140, %p141
      %p144 = scmp.ne.s32.totalorder %s129, %s143
      %p145 = scmp.eq.s32.totalorder %s35, 0
      %p146 = por %p144, %p145
      %s148 = sadd.s32 %s147, 1
      %p151 = scmp.eq.s32.totalorder %s29, 1
      %p152 = scmp.ne.s32.totalorder %s147, %s149
      %p153 = scmp.eq.s32.totalorder %s29, 0
      %p154 = por %p152, %p153
      %p155 = scmp.ne.s32.totalorder %s147, %s149
      %p156 = scmp.eq.s32.totalorder %s34, 1
      %p157 = por %p155, %p156
      %p158 = scmp.ne.s32.totalorder %s149, %s150
      %p159 = scmp.eq.s32.totalorder %s34, 0
      %p160 = por %p158, %p159
      %p161 = scmp.ne.s32.totalorder %s149, %s150
      %p162 = scmp.eq.s32.totalorder %s35, 1
      %p163 = por %p161, %p162
      %p165 = scmp.ne.s32.totalorder %s150, %s164
      %p166 = scmp.eq.s32.totalorder %s35, 0
      %p167 = por %p165, %p166
      %s169 = sadd.s32 %s168, 1
      %p172 = scmp.eq.s32.totalorder %s29, 1
      %p173 = scmp.ne.s32.totalorder %s168, %s170
      %p174 = scmp.eq.s32.totalorder %s29, 0
      %p175 = por %p173, %p174
      %p176 = scmp.ne.s32.totalorder %s168, %s170
      %p177 = scmp.eq.s32.totalorder %s34, 1
      %p178 = por %p176, %p177
      %p179 = scmp.ne.s32.totalorder %s170, %s171
      %p180 = scmp.eq.s32.totalorder %s34, 0
      %p181 = por %p179, %p180
      %p182 = scmp.ne.s32.totalorder %s170, %s171
      %p183 = scmp.eq.s32.totalorder %s35, 1
      %p184 = por %p182, %p183
      %p186 = scmp.ne.s32.totalorder %s171, %s185
      %p187 = scmp.eq.s32.totalorder %s35, 0
      %p188 = por %p186, %p187
      %s190 = sadd.s32 %s189, 1
      %p193 = scmp.eq.s32.totalorder %s29, 1
      %p194 = scmp.ne.s32.totalorder %s189, %s191
      %p195 = scmp.eq.s32.totalorder %s29, 0
      %p196 = por %p194, %p195
      %p197 = scmp.ne.s32.totalorder %s189, %s191
      %p198 = scmp.eq.s32.totalorder %s34, 1
      %p199 = por %p197, %p198
      %p200 = scmp.ne.s32.totalorder %s191, %s192
      %p201 = scmp.eq.s32.totalorder %s34, 0
      %p202 = por %p200, %p201
      %p203 = scmp.ne.s32.totalorder %s191, %s192
      %p204 = scmp.eq.s32.totalorder %s35, 1
      %p205 = por %p203, %p204
      %p207 = scmp.ne.s32.totalorder %s192, %s206
      %p208 = scmp.eq.s32.totalorder %s35, 0
      %p209 = por %p207, %p208
      %s211 = sadd.s32 %s210, 1
      %p214 = scmp.eq.s32.totalorder %s29, 1
      %p215 = scmp.ne.s32.totalorder %s210, %s212
      %p216 = scmp.eq.s32.totalorder %s29, 0
      %p217 = por %p215, %p216
      %p218 = scmp.ne.s32.totalorder %s210, %s212
      %p219 = scmp.eq.s32.totalorder %s34, 1
      %p220 = por %p218, %p219
      %p221 = scmp.ne.s32.totalorder %s212, %s213
      %p222 = scmp.eq.s32.totalorder %s34, 0
      %p223 = por %p221, %p222
      %p224 = scmp.ne.s32.totalorder %s212, %s213
      %p225 = scmp.eq.s32.totalorder %s35, 1
      %p226 = por %p224, %p225
      %p228 = scmp.ne.s32.totalorder %s213, %s227
      %p229 = scmp.eq.s32.totalorder %s35, 0
      %p230 = por %p228, %p229
      %s232 = sadd.s32 %s231, 1
      %p235 = scmp.eq.s32.totalorder %s29, 1
      %p236 = scmp.ne.s32.totalorder %s231, %s233
      %p237 = scmp.eq.s32.totalorder %s29, 0
      %p238 = por %p236, %p237
      %p239 = scmp.ne.s32.totalorder %s231, %s233
      %p240 = scmp.eq.s32.totalorder %s34, 1
      %p241 = por %p239, %p240
      %p242 = scmp.ne.s32.totalorder %s233, %s234
      %p243 = scmp.eq.s32.totalorder %s34, 0
      %p244 = por %p242, %p243
      %p245 = scmp.ne.s32.totalorder %s233, %s234
      %p246 = scmp.eq.s32.totalorder %s35, 1
      %p247 = por %p245, %p246
      %p249 = scmp.ne.s32.totalorder %s234, %s248
      %p250 = scmp.eq.s32.totalorder %s35, 0
      %p251 = por %p249, %p250
      %s253 = sadd.s32 %s252, 1
      %p256 = scmp.eq.s32.totalorder %s29, 1
      %p257 = scmp.ne.s32.totalorder %s252, %s254
      %p258 = scmp.eq.s32.totalorder %s29, 0
      %p259 = por %p257, %p258
      %p260 = scmp.ne.s32.totalorder %s252, %s254
      %p261 = scmp.eq.s32.totalorder %s34, 1
      %p262 = por %p260, %p261
      %p263 = scmp.ne.s32.totalorder %s254, %s255
      %p264 = scmp.eq.s32.totalorder %s34, 0
      %p265 = por %p263, %p264
      %p266 = scmp.ne.s32.totalorder %s254, %s255
      %p267 = scmp.eq.s32.totalorder %s35, 1
      %p268 = por %p266, %p267
      %p270 = scmp.ne.s32.totalorder %s255, %s269
      %p271 = scmp.eq.s32.totalorder %s35, 0
      %p272 = por %p270, %p271
      %s274 = sadd.s32 %s273, 1
      %p277 = scmp.eq.s32.totalorder %s29, 1
      %p278 = scmp.ne.s32.totalorder %s273, %s275
      %p279 = scmp.eq.s32.totalorder %s29, 0
      %p280 = por %p278, %p279
      %p281 = scmp.ne.s32.totalorder %s273, %s275
      %p282 = scmp.eq.s32.totalorder %s34, 1
      %p283 = por %p281, %p282
      %p284 = scmp.ne.s32.totalorder %s275, %s276
      %p285 = scmp.eq.s32.totalorder %s34, 0
      %p286 = por %p284, %p285
      %p287 = scmp.ne.s32.totalorder %s275, %s276
      %p288 = scmp.eq.s32.totalorder %s35, 1
      %p289 = por %p287, %p288
      %p291 = scmp.ne.s32.totalorder %s276, %s290
      %p292 = scmp.eq.s32.totalorder %s35, 0
      %p293 = por %p291, %p292
      %s295 = sadd.s32 %s294, 1
      %p298 = scmp.eq.s32.totalorder %s29, 1
      %p299 = scmp.ne.s32.totalorder %s294, %s296
      %p300 = scmp.eq.s32.totalorder %s29, 0
      %p301 = por %p299, %p300
      %p302 = scmp.ne.s32.totalorder %s294, %s296
      %p303 = scmp.eq.s32.totalorder %s34, 1
      %p304 = por %p302, %p303
      %p305 = scmp.ne.s32.totalorder %s296, %s297
      %p306 = scmp.eq.s32.totalorder %s34, 0
      %p307 = por %p305, %p306
      %p308 = scmp.ne.s32.totalorder %s296, %s297
      %p309 = scmp.eq.s32.totalorder %s35, 1
      %p310 = por %p308, %p309
      %p312 = scmp.ne.s32.totalorder %s297, %s311
      %p313 = scmp.eq.s32.totalorder %s35, 0
      %p314 = por %p312, %p313
      %s316 = sadd.s32 %s315, 1
      %p319 = scmp.eq.s32.totalorder %s29, 1
      %p320 = scmp.ne.s32.totalorder %s315, %s317
      %p321 = scmp.eq.s32.totalorder %s29, 0
      %p322 = por %p320, %p321
      %p323 = scmp.ne.s32.totalorder %s315, %s317
      %p324 = scmp.eq.s32.totalorder %s34, 1
      %p325 = por %p323, %p324
      %p326 = scmp.ne.s32.totalorder %s317, %s318
      %p327 = scmp.eq.s32.totalorder %s34, 0
      %p328 = por %p326, %p327
      %p329 = scmp.ne.s32.totalorder %s317, %s318
      %p330 = scmp.eq.s32.totalorder %s35, 1
      %p331 = por %p329, %p330
      %p333 = scmp.ne.s32.totalorder %s318, %s332
      %p334 = scmp.eq.s32.totalorder %s35, 0
      %p335 = por %p333, %p334
      %s337 = sadd.s32 %s336, 1
      %p340 = scmp.eq.s32.totalorder %s29, 1
      %p341 = scmp.ne.s32.totalorder %s336, %s338
      %p342 = scmp.eq.s32.totalorder %s29, 0
      %p343 = por %p341, %p342
      %p344 = scmp.ne.s32.totalorder %s336, %s338
      %p345 = scmp.eq.s32.totalorder %s34, 1
      %p346 = por %p344, %p345
      %p347 = scmp.ne.s32.totalorder %s338, %s339
      %p348 = scmp.eq.s32.totalorder %s34, 0
      %p349 = por %p347, %p348
      %p350 = scmp.ne.s32.totalorder %s338, %s339
      %p351 = scmp.eq.s32.totalorder %s35, 1
      %p352 = por %p350, %p351
      %p354 = scmp.ne.s32.totalorder %s339, %s353
      %p355 = scmp.eq.s32.totalorder %s35, 0
      %p356 = por %p354, %p355
      %s358 = sadd.s32 %s357, 1
      %p361 = scmp.eq.s32.totalorder %s29, 1
      %p362 = scmp.ne.s32.totalorder %s357, %s359
      %p363 = scmp.eq.s32.totalorder %s29, 0
      %p364 = por %p362, %p363
      %p365 = scmp.ne.s32.totalorder %s357, %s359
      %p366 = scmp.eq.s32.totalorder %s34, 1
      %p367 = por %p365, %p366
      %p368 = scmp.ne.s32.totalorder %s359, %s360
      %p369 = scmp.eq.s32.totalorder %s34, 0
      %p370 = por %p368, %p369
      %p371 = scmp.ne.s32.totalorder %s359, %s360
      %p372 = scmp.eq.s32.totalorder %s35, 1
      %p373 = por %p371, %p372
      %p375 = scmp.ne.s32.totalorder %s360, %s374
      %p376 = scmp.eq.s32.totalorder %s35, 0
      %p377 = por %p375, %p376
      %s379 = sadd.s32 %s378, 1
      %p382 = scmp.eq.s32.totalorder %s29, 1
      %p383 = scmp.ne.s32.totalorder %s378, %s380
      %p384 = scmp.eq.s32.totalorder %s29, 0
      %p385 = por %p383, %p384
      %p386 = scmp.ne.s32.totalorder %s378, %s380
      %p387 = scmp.eq.s32.totalorder %s34, 1
      %p388 = por %p386, %p387
      %p389 = scmp.ne.s32.totalorder %s380, %s381
      %p390 = scmp.eq.s32.totalorder %s34, 0
      %p391 = por %p389, %p390
      %p392 = scmp.ne.s32.totalorder %s380, %s381
      %p393 = scmp.eq.s32.totalorder %s35, 1
      %p394 = por %p392, %p393
      %p396 = scmp.ne.s32.totalorder %s381, %s395
      %p397 = scmp.eq.s32.totalorder %s35, 0
      %p398 = por %p396, %p397
      %s400 = sadd.s32 %s399, 1
      %p403 = scmp.eq.s32.totalorder %s29, 1
      %p404 = scmp.ne.s32.totalorder %s399, %s401
      %p405 = scmp.eq.s32.totalorder %s29, 0
      %p406 = por %p404, %p405
      %p407 = scmp.ne.s32.totalorder %s399, %s401
      %p408 = scmp.eq.s32.totalorder %s34, 1
      %p409 = por %p407, %p408
      %p410 = scmp.ne.s32.totalorder %s401, %s402
      %p411 = scmp.eq.s32.totalorder %s34, 0
      %p412 = por %p410, %p411
      %p413 = scmp.ne.s32.totalorder %s401, %s402
      %p414 = scmp.eq.s32.totalorder %s35, 1
      %p415 = por %p413, %p414
      %p417 = scmp.ne.s32.totalorder %s402, %s416
      %p418 = scmp.eq.s32.totalorder %s35, 0
      %p419 = por %p417, %p418
      %s421 = sadd.s32 %s420, 1
      %p424 = scmp.eq.s32.totalorder %s29, 1
      %p425 = scmp.ne.s32.totalorder %s420, %s422
      %p426 = scmp.eq.s32.totalorder %s29, 0
      %p427 = por %p425, %p426
      %p428 = scmp.ne.s32.totalorder %s420, %s422
      %p429 = scmp.eq.s32.totalorder %s34, 1
      %p430 = por %p428, %p429
      %p431 = scmp.ne.s32.totalorder %s422, %s423
      %p432 = scmp.eq.s32.totalorder %s34, 0
      %p433 = por %p431, %p432
      %p434 = scmp.ne.s32.totalorder %s422, %s423
      %p435 = scmp.eq.s32.totalorder %s35, 1
      %p436 = por %p434, %p435
      %p438 = scmp.ne.s32.totalorder %s423, %s437
      %p439 = scmp.eq.s32.totalorder %s35, 0
      %p440 = por %p438, %p439
      %s442 = sadd.s32 %s441, 1
      %p445 = scmp.eq.s32.totalorder %s29, 1
      %p446 = scmp.ne.s32.totalorder %s441, %s443
      %p447 = scmp.eq.s32.totalorder %s29, 0
      %p448 = por %p446, %p447
      %p449 = scmp.ne.s32.totalorder %s441, %s443
      %p450 = scmp.eq.s32.totalorder %s34, 1
      %p451 = por %p449, %p450
      %p452 = scmp.ne.s32.totalorder %s443, %s444
      %p453 = scmp.eq.s32.totalorder %s34, 0
      %p454 = por %p452, %p453
      %p455 = scmp.ne.s32.totalorder %s443, %s444
      %p456 = scmp.eq.s32.totalorder %s35, 1
      %p457 = por %p455, %p456
      %p459 = scmp.ne.s32.totalorder %s444, %s458
      %p460 = scmp.eq.s32.totalorder %s35, 0
      %p461 = por %p459, %p460
      %s462 = ssub.s32 %s29, %s36
      %p463 = scmp.eq.s32.totalorder %s462, 0
      %s465 = sadd.s32 %s464, 1
      %s466 = scalar_select %p463, %s464, %s465
      %p469 = pneg %p463
      %p470 = scmp.eq.s32.totalorder %s29, 1
      %p471 = por %p469, %p470
      %p472 = scmp.ne.s32.totalorder %s464, %s467
      %p473 = scmp.eq.s32.totalorder %s29, 0
      %p474 = por %p472, %p473
      %p475 = scmp.ne.s32.totalorder %s464, %s467
      %p476 = scmp.eq.s32.totalorder %s34, 1
      %p477 = por %p475, %p476
      %p478 = scmp.ne.s32.totalorder %s467, %s468
      %p479 = scmp.eq.s32.totalorder %s34, 0
      %p480 = por %p478, %p479
      %p481 = scmp.ne.s32.totalorder %s467, %s468
      %p482 = scmp.eq.s32.totalorder %s35, 1
      %p483 = por %p481, %p482
      %p485 = scmp.ne.s32.totalorder %s468, %s484
      %p486 = scmp.eq.s32.totalorder %s35, 0
      %p487 = por %p485, %p486
      %p488 = scmp.le.s32.totalorder 1, %s29
      %p489 = scmp.lt.s32.totalorder %s29, 3
      %p490 = pnand %p488, %p489
      %p491 = pneg %p490
      // Predicated region
      $region9: #{transformer_encoder.1} parent=5 // pred_check
        _
      $region10: #{transformer_encoder.1} parent=5 // pred_check_branch
        %493 = sbr.rel (%p490) target = $region12
      $region11: #{transformer_encoder.1} parent=5 // pred_region
        %s494 = ssub.s32 %s29, 1
        // Predicated region
        $region13: #{transformer_encoder.1} parent=11 // pred_check
          %p495 = pneg %p76
        $region14: #{transformer_encoder.1} parent=11 // pred_check_branch
          %497 = sbr.rel (%p495) target = $region16
        $region15: #{transformer_encoder.1} parent=11 // pred_region
          _
        $region16: #{transformer_encoder.1} parent=11 // pred_fallthru
          _
        // Predicated region
        $region17: #{transformer_encoder.1} parent=11 // pred_check
          %p498 = pneg %p97
        $region18: #{transformer_encoder.1} parent=11 // pred_check_branch
          %500 = sbr.rel (%p498) target = $region20
        $region19: #{transformer_encoder.1} parent=11 // pred_region
          _
        $region20: #{transformer_encoder.1} parent=11 // pred_fallthru
          _
        // Predicated region
        $region21: #{transformer_encoder.1} parent=11 // pred_check
          %p501 = pneg %p118
        $region22: #{transformer_encoder.1} parent=11 // pred_check_branch
          %503 = sbr.rel (%p501) target = $region24
        $region23: #{transformer_encoder.1} parent=11 // pred_region
          _
        $region24: #{transformer_encoder.1} parent=11 // pred_fallthru
          _
        // Predicated region
        $region25: #{transformer_encoder.1} parent=11 // pred_check
          %p504 = pneg %p139
        $region26: #{transformer_encoder.1} parent=11 // pred_check_branch
          %506 = sbr.rel (%p504) target = $region28
        $region27: #{transformer_encoder.1} parent=11 // pred_region
          _
        $region28: #{transformer_encoder.1} parent=11 // pred_fallthru
          _
        // Predicated region
        $region29: #{transformer_encoder.1} parent=11 // pred_check
          %p507 = pneg %p160
        $region30: #{transformer_encoder.1} parent=11 // pred_check_branch
          %509 = sbr.rel (%p507) target = $region32
        $region31: #{transformer_encoder.1} parent=11 // pred_region
          _
        $region32: #{transformer_encoder.1} parent=11 // pred_fallthru
          _
        // Predicated region
        $region33: #{transformer_encoder.1} parent=11 // pred_check
          %p510 = pneg %p181
        $region34: #{transformer_encoder.1} parent=11 // pred_check_branch
          %512 = sbr.rel (%p510) target = $region36
        $region35: #{transformer_encoder.1} parent=11 // pred_region
          _
        $region36: #{transformer_encoder.1} parent=11 // pred_fallthru
          _
        // Predicated region
        $region37: #{transformer_encoder.1} parent=11 // pred_check
          %p513 = pneg %p202
        $region38: #{transformer_encoder.1} parent=11 // pred_check_branch
          %515 = sbr.rel (%p513) target = $region40
        $region39: #{transformer_encoder.1} parent=11 // pred_region
          _
        $region40: #{transformer_encoder.1} parent=11 // pred_fallthru
          _
        // Predicated region
        $region41: #{transformer_encoder.1} parent=11 // pred_check
          %p516 = pneg %p223
        $region42: #{transformer_encoder.1} parent=11 // pred_check_branch
          %518 = sbr.rel (%p516) target = $region44
        $region43: #{transformer_encoder.1} parent=11 // pred_region
          _
        $region44: #{transformer_encoder.1} parent=11 // pred_fallthru
          _
        // Predicated region
        $region45: #{transformer_encoder.1} parent=11 // pred_check
          %p519 = pneg %p244
        $region46: #{transformer_encoder.1} parent=11 // pred_check_branch
          %521 = sbr.rel (%p519) target = $region48
        $region47: #{transformer_encoder.1} parent=11 // pred_region
          _
        $region48: #{transformer_encoder.1} parent=11 // pred_fallthru
          _
        // Predicated region
        $region49: #{transformer_encoder.1} parent=11 // pred_check
          %p522 = pneg %p265
        $region50: #{transformer_encoder.1} parent=11 // pred_check_branch
          %524 = sbr.rel (%p522) target = $region52
        $region51: #{transformer_encoder.1} parent=11 // pred_region
          _
        $region52: #{transformer_encoder.1} parent=11 // pred_fallthru
          _
        // Predicated region
        $region53: #{transformer_encoder.1} parent=11 // pred_check
          %p525 = pneg %p286
        $region54: #{transformer_encoder.1} parent=11 // pred_check_branch
          %527 = sbr.rel (%p525) target = $region56
        $region55: #{transformer_encoder.1} parent=11 // pred_region
          _
        $region56: #{transformer_encoder.1} parent=11 // pred_fallthru
          _
        // Predicated region
        $region57: #{transformer_encoder.1} parent=11 // pred_check
          %p528 = pneg %p307
        $region58: #{transformer_encoder.1} parent=11 // pred_check_branch
          %530 = sbr.rel (%p528) target = $region60
        $region59: #{transformer_encoder.1} parent=11 // pred_region
          _
        $region60: #{transformer_encoder.1} parent=11 // pred_fallthru
          _
        // Predicated region
        $region61: #{transformer_encoder.1} parent=11 // pred_check
          %p531 = pneg %p328
        $region62: #{transformer_encoder.1} parent=11 // pred_check_branch
          %533 = sbr.rel (%p531) target = $region64
        $region63: #{transformer_encoder.1} parent=11 // pred_region
          _
        $region64: #{transformer_encoder.1} parent=11 // pred_fallthru
          _
        // Predicated region
        $region65: #{transformer_encoder.1} parent=11 // pred_check
          %p534 = pneg %p349
        $region66: #{transformer_encoder.1} parent=11 // pred_check_branch
          %536 = sbr.rel (%p534) target = $region68
        $region67: #{transformer_encoder.1} parent=11 // pred_region
          _
        $region68: #{transformer_encoder.1} parent=11 // pred_fallthru
          _
        // Predicated region
        $region69: #{transformer_encoder.1} parent=11 // pred_check
          %p537 = pneg %p370
        $region70: #{transformer_encoder.1} parent=11 // pred_check_branch
          %539 = sbr.rel (%p537) target = $region72
        $region71: #{transformer_encoder.1} parent=11 // pred_region
          _
        $region72: #{transformer_encoder.1} parent=11 // pred_fallthru
          _
        // Predicated region
        $region73: #{transformer_encoder.1} parent=11 // pred_check
          %p540 = pneg %p391
        $region74: #{transformer_encoder.1} parent=11 // pred_check_branch
          %542 = sbr.rel (%p540) target = $region76
        $region75: #{transformer_encoder.1} parent=11 // pred_region
          _
        $region76: #{transformer_encoder.1} parent=11 // pred_fallthru
          _
        // Predicated region
        $region77: #{transformer_encoder.1} parent=11 // pred_check
          %p543 = pneg %p412
        $region78: #{transformer_encoder.1} parent=11 // pred_check_branch
          %545 = sbr.rel (%p543) target = $region80
        $region79: #{transformer_encoder.1} parent=11 // pred_region
          _
        $region80: #{transformer_encoder.1} parent=11 // pred_fallthru
          _
        // Predicated region
        $region81: #{transformer_encoder.1} parent=11 // pred_check
          %p546 = pneg %p433
        $region82: #{transformer_encoder.1} parent=11 // pred_check_branch
          %548 = sbr.rel (%p546) target = $region84
        $region83: #{transformer_encoder.1} parent=11 // pred_region
          _
        $region84: #{transformer_encoder.1} parent=11 // pred_fallthru
          _
        // Predicated region
        $region85: #{transformer_encoder.1} parent=11 // pred_check
          %p549 = pneg %p454
        $region86: #{transformer_encoder.1} parent=11 // pred_check_branch
          %551 = sbr.rel (%p549) target = $region88
        $region87: #{transformer_encoder.1} parent=11 // pred_region
          _
        $region88: #{transformer_encoder.1} parent=11 // pred_fallthru
          _
      $region12: #{transformer_encoder.1} parent=5 // pred_fallthru
        _
      %p552 = scmp.lt.s32.totalorder %s29, 2
      // Predicated region
      $region89: #{transformer_encoder.1} parent=5 // pred_check
        %p553 = pneg %p552
      $region90: #{transformer_encoder.1} parent=5 // pred_check_branch
        %555 = sbr.rel (%p553) target = $region92
      $region91: #{transformer_encoder.1} parent=5 // pred_region
        // Predicated region
        $region93: #{transformer_encoder.1} parent=91 // pred_check
          %p556 = pneg %p49
        $region94: #{transformer_encoder.1} parent=91 // pred_check_branch
          %558 = sbr.rel (%p556) target = $region96
        $region95: #{transformer_encoder.1} parent=91 // pred_region
          %p559 = scmp.lt.s32.totalorder %s29, 1
          %s560 = scalar_select %p559, %s29, 1
          %s561 = smul.addr %s560, 8
          %s562 = scalar_lea.vmem %s0, %s561
        $region96: #{transformer_encoder.1} parent=91 // pred_fallthru
          _
      $region92: #{transformer_encoder.1} parent=5 // pred_fallthru
        _
      %p563 = scmp.le.s32.totalorder 1, %s29
      %p564 = scmp.lt.s32.totalorder %s29, 3
      %p565 = pnand %p563, %p564
      %p566 = pneg %p565
      // Predicated region
      $region97: #{transformer_encoder.1} parent=5 // pred_check
        _
      $region98: #{transformer_encoder.1} parent=5 // pred_check_branch
        %568 = sbr.rel (%p565) target = $region100
      $region99: #{transformer_encoder.1} parent=5 // pred_region
        %s569 = ssub.s32 %s29, 1
        %p570 = scmp.lt.s32.totalorder %s34, 1
        %s571 = scalar_select %p570, %s34, 1
        %s572 = smul.addr %s571, 8
        %s573 = scalar_lea.vmem %s0, %s572
        %p574 = pneg %p55
        %p575 = pneg %p52
        %p576 = pneg %p76
        %p577 = pneg %p73
        %p578 = pneg %p97
        %p579 = pneg %p94
        %p580 = pneg %p118
        %p581 = pneg %p115
        %p582 = pneg %p139
        %p583 = pneg %p136
        %p584 = pneg %p160
        %p585 = pneg %p157
        %p586 = pneg %p181
        %p587 = pneg %p178
        %p588 = pneg %p202
        %p589 = pneg %p199
        %p590 = pneg %p223
        %p591 = pneg %p220
        %p592 = pneg %p244
        %p593 = pneg %p241
        %p594 = pneg %p265
        %p595 = pneg %p262
        %p596 = pneg %p286
        %p597 = pneg %p283
        %p598 = pneg %p307
        %p599 = pneg %p304
        %p600 = pneg %p328
        %p601 = pneg %p325
        %p602 = pneg %p349
        %p603 = pneg %p346
        %p604 = pneg %p370
        %p605 = pneg %p367
        %p606 = pneg %p391
        %p607 = pneg %p388
        %p608 = pneg %p412
        %p609 = pneg %p409
        %p610 = pneg %p433
        %p611 = pneg %p430
        %p612 = pneg %p454
        %p613 = pneg %p451
        %p614 = pneg %p480
        %p615 = pneg %p477
        %s616 = sand.u32 %s467, 1
        %s617 = scalar_lea.sflag [#allocation3], %s616
        %s618 = sand.u32 %s467, 1
        %s619 = smul.addr %s618, 8
        %s620 = scalar_lea.vmem [#allocation2], %s619
        %p621 = scmp.lt.s32.totalorder %s34, 1
        %s622 = scalar_select %p621, %s34, 1
        %s623 = smul.addr %s622, 8
        %s624 = scalar_lea.vmem %s0, %s623
        %v625 = vld [vmem:[%s624] sm:$0xff]
        %v626 = vld [vmem:[%s1] sm:$0xff]
        %v627 = vadd.f32 %v625, %v626
        %v628 = vld [vmem:[%s10] sm:$0x1]
        %v629 = vld [vmem:[%s11] sm:$0x1]
        %vm630 = vcmask 261120
        %v631 = vsel %vm630, %v627, 0.0
        %632 = vadd.xlane.f32.xlu0 %v631
        %v633 = vpop.xlane.xlu0 %632
        %v634 = vrcp.pop 32.0
        %v635 = vmul.f32 %v633, %v634
        %v636 = vsub.f32 %v627, %v635
        %v637 = vmul.f32 %v636, %v636
        %v638 = vsel %vm630, %v637, 0.0
        %639 = vadd.xlane.f32.xlu0 %v638
        %v640 = vpop.xlane.xlu0 %639
        %v641 = vmul.f32 %v640, %v634
        %v642 = vadd.f32 %v641, 1e-06
        %v643 = vrsqrt.pop %v642
        %v644 = vmul.f32 %v636, %v643
        %v646 = vlaneseq
        %v647 = vshrl.u32 %v646, 7
        %v648 = vsub.s32 0, %v647
        %v649 = vrot.slane %v628, %v648
        %v651 = vmul.f32 %v644, %v649
        %v653 = vlaneseq
        %v654 = vshrl.u32 %v653, 7
        %v655 = vsub.s32 0, %v654
        %v656 = vrot.slane %v629, %v655
        %v658 = vadd.f32 %v651, %v656
        %v659 = vld [vmem:[%s2] sm:$0xff]
        %v660 = vld [vmem:[%s2 + $0x8] sm:$0xff]
        %v661 = vld [vmem:[%s2 + $0x10] sm:$0xff]
        %v662 = vld [vmem:[%s2 + $0x18] sm:$0xff]
        %v663 = vld [vmem:[%s2 + $0x20] sm:$0xff]
        %v664 = vld [vmem:[%s2 + $0x28] sm:$0xff]
        %v665 = vld [vmem:[%s2 + $0x30] sm:$0xff]
        %v666 = vld [vmem:[%s2 + $0x38] sm:$0xff]
        %v667 = vld [vmem:[%s2 + $0x40] sm:$0xff]
        %v668 = vld [vmem:[%s2 + $0x48] sm:$0xff]
        %v669 = vld [vmem:[%s2 + $0x50] sm:$0xff]
        %v670 = vld [vmem:[%s2 + $0x58] sm:$0xff]
        %v671 = vld [vmem:[%s2 + $0x60] sm:$0xff]
        %v672 = vld [vmem:[%s2 + $0x68] sm:$0xff]
        %v673 = vld [vmem:[%s2 + $0x70] sm:$0xff]
        %v674 = vld [vmem:[%s2 + $0x78] sm:$0xff]
        %v675 = vld [vmem:[%s3] sm:$0x1]
        %v676 = vld [vmem:[%s3 + $0x1] sm:$0x1]
        %v677 = vld [vmem:[%s3 + $0x2] sm:$0x1]
        %v678 = vld [vmem:[%s3 + $0x3] sm:$0x1]
        %v683 = vlaneseq
        %v684 = vshrl.u32 %v683, 7
        %v685 = vsub.s32 0, %v684
        %v686 = vrot.slane %v675, %v685
        %v687 = vlaneseq
        %v688 = vshrl.u32 %v687, 7
        %v689 = vsub.s32 0, %v688
        %v690 = vrot.slane %v676, %v689
        %v691 = vlaneseq
        %v692 = vshrl.u32 %v691, 7
        %v693 = vsub.s32 0, %v692
        %v694 = vrot.slane %v677, %v693
        %v695 = vlaneseq
        %v696 = vshrl.u32 %v695, 7
        %v697 = vsub.s32 0, %v696
        %v698 = vrot.slane %v678, %v697
        %v704 = vsel %vm630, %v658, 0
        %706 = vmatprep.subr.mxu0 0.0
        %707 = vmatpush1.msra.mxu0 %v659
        %708 = vmatprep.subr.mxu0 0.0
        %709 = vmatpush1.msra.mxu0 %v660
        %710 = vmatprep.subr.mxu0 0.0
        %711 = vmatpush1.msra.mxu0 %v661
        %712 = vmatprep.subr.mxu0 0.0
        %713 = vmatpush1.msra.mxu0 %v662
        %714 = vmatprep.subr.mxu0 0.0
        %715 = vmatpush1.msra.mxu0 0.0
        %716 = vmatprep.subr.mxu0 0.0
        %717 = vmatpush1.msra.mxu0 0.0
        %718 = vmatprep.subr.mxu0 0.0
        %719 = vmatpush1.msra.mxu0 0.0
        %720 = vmatprep.subr.mxu0 0.0
        %721 = vmatpush1.msra.mxu0 0.0
        %722 = vmatprep.subr.mxu0 0.0
        %723 = vmatpush1.msra.mxu0 0.0
        %724 = vmatprep.subr.mxu0 0.0
        %725 = vmatpush1.msra.mxu0 0.0
        %726 = vmatprep.subr.mxu0 0.0
        %727 = vmatpush1.msra.mxu0 0.0
        %728 = vmatprep.subr.mxu0 0.0
        %729 = vmatpush1.msra.mxu0 0.0
        %730 = vmatprep.subr.mxu0 0.0
        %731 = vmatpush1.msra.mxu0 0.0
        %732 = vmatprep.subr.mxu0 0.0
        %733 = vmatpush1.msra.mxu0 0.0
        %734 = vmatprep.subr.mxu0 0.0
        %735 = vmatpush1.msra.mxu0 0.0
        %736 = vmatprep.subr.mxu0 0.0
        %737 = vmatpush1.msra.mxu0 0.0
        %738 = vmatprep.subr.mxu0 0.0
        %739 = vmatpush1.msra.mxu0 0.0
        %740 = vmatprep.subr.mxu0 0.0
        %741 = vmatpush1.msra.mxu0 0.0
        %742 = vmatprep.subr.mxu0 0.0
        %743 = vmatpush1.msra.mxu0 0.0
        %744 = vmatprep.subr.mxu0 0.0
        %745 = vmatpush1.msra.mxu0 0.0
        %746 = vmatprep.subr.mxu0 0.0
        %747 = vmatpush1.msra.mxu0 0.0
        %748 = vmatprep.subr.mxu0 0.0
        %749 = vmatpush1.msra.mxu0 0.0
        %750 = vmatprep.subr.mxu0 0.0
        %751 = vmatpush1.msra.mxu0 0.0
        %752 = vmatprep.subr.mxu0 0.0
        %753 = vmatpush1.msra.mxu0 0.0
        %754 = vmatprep.subr.mxu0 0.0
        %755 = vmatpush1.msra.mxu0 0.0
        %756 = vmatprep.subr.mxu0 0.0
        %757 = vmatpush1.msra.mxu0 0.0
        %758 = vmatprep.subr.mxu0 0.0
        %759 = vmatpush1.msra.mxu0 0.0
        %760 = vmatprep.subr.mxu0 0.0
        %761 = vmatpush1.msra.mxu0 0.0
        %762 = vmatprep.subr.mxu0 0.0
        %763 = vmatpush1.msra.mxu0 0.0
        %764 = vmatprep.subr.mxu0 0.0
        %765 = vmatpush1.msra.mxu0 0.0
        %766 = vmatprep.subr.mxu0 0.0
        %767 = vmatpush1.msra.mxu0 0.0
        %768 = vmatprep.subr.mxu0 0.0
        %769 = vmatpush1.msra.mxu0 0.0
        %770 = vmatprep.mubr.f32.mxu0 0.0
        %771 = vmatmul.mubr.f32.gmra.mrb[0].mxu0 %v704
        %v772 = vpop.f32.mrb[0].mxu0
        %v773 = vadd.f32 %v686, %v772
        %v774 = vpop.f32.mrb[0].mxu0
        %775 = vdwg.mxu0
        %776 = vmatprep.subr.mxu0 0.0
        %777 = vmatpush1.msra.mxu0 %v663
        %778 = vmatprep.subr.mxu0 0.0
        %779 = vmatpush1.msra.mxu0 %v664
        %780 = vmatprep.subr.mxu0 0.0
        %781 = vmatpush1.msra.mxu0 %v665
        %782 = vmatprep.subr.mxu0 0.0
        %783 = vmatpush1.msra.mxu0 %v666
        %784 = vmatprep.subr.mxu0 0.0
        %785 = vmatpush1.msra.mxu0 0.0
        %786 = vmatprep.subr.mxu0 0.0
        %787 = vmatpush1.msra.mxu0 0.0
        %788 = vmatprep.subr.mxu0 0.0
        %789 = vmatpush1.msra.mxu0 0.0
        %790 = vmatprep.subr.mxu0 0.0
        %791 = vmatpush1.msra.mxu0 0.0
        %792 = vmatprep.subr.mxu0 0.0
        %793 = vmatpush1.msra.mxu0 0.0
        %794 = vmatprep.subr.mxu0 0.0
        %795 = vmatpush1.msra.mxu0 0.0
        %796 = vmatprep.subr.mxu0 0.0
        %797 = vmatpush1.msra.mxu0 0.0
        %798 = vmatprep.subr.mxu0 0.0
        %799 = vmatpush1.msra.mxu0 0.0
        %800 = vmatprep.subr.mxu0 0.0
        %801 = vmatpush1.msra.mxu0 0.0
        %802 = vmatprep.subr.mxu0 0.0
        %803 = vmatpush1.msra.mxu0 0.0
        %804 = vmatprep.subr.mxu0 0.0
        %805 = vmatpush1.msra.mxu0 0.0
        %806 = vmatprep.subr.mxu0 0.0
        %807 = vmatpush1.msra.mxu0 0.0
        %808 = vmatprep.subr.mxu0 0.0
        %809 = vmatpush1.msra.mxu0 0.0
        %810 = vmatprep.subr.mxu0 0.0
        %811 = vmatpush1.msra.mxu0 0.0
        %812 = vmatprep.subr.mxu0 0.0
        %813 = vmatpush1.msra.mxu0 0.0
        %814 = vmatprep.subr.mxu0 0.0
        %815 = vmatpush1.msra.mxu0 0.0
        %816 = vmatprep.subr.mxu0 0.0
        %817 = vmatpush1.msra.mxu0 0.0
        %818 = vmatprep.subr.mxu0 0.0
        %819 = vmatpush1.msra.mxu0 0.0
        %820 = vmatprep.subr.mxu0 0.0
        %821 = vmatpush1.msra.mxu0 0.0
        %822 = vmatprep.subr.mxu0 0.0
        %823 = vmatpush1.msra.mxu0 0.0
        %824 = vmatprep.subr.mxu0 0.0
        %825 = vmatpush1.msra.mxu0 0.0
        %826 = vmatprep.subr.mxu0 0.0
        %827 = vmatpush1.msra.mxu0 0.0
        %828 = vmatprep.subr.mxu0 0.0
        %829 = vmatpush1.msra.mxu0 0.0
        %830 = vmatprep.subr.mxu0 0.0
        %831 = vmatpush1.msra.mxu0 0.0
        %832 = vmatprep.subr.mxu0 0.0
        %833 = vmatpush1.msra.mxu0 0.0
        %834 = vmatprep.subr.mxu0 0.0
        %835 = vmatpush1.msra.mxu0 0.0
        %836 = vmatprep.subr.mxu0 0.0
        %837 = vmatpush1.msra.mxu0 0.0
        %838 = vmatprep.subr.mxu0 0.0
        %839 = vmatpush1.msra.mxu0 0.0
        %840 = vmatprep.mubr.f32.mxu0 0.0
        %841 = vmatmul.mubr.f32.gmra.mrb[0].mxu0 %v704
        %v842 = vpop.f32.mrb[0].mxu0
        %v843 = vadd.f32 %v690, %v842
        %v844 = vpop.f32.mrb[0].mxu0
        %845 = vdwg.mxu0
        %846 = vmatprep.subr.mxu0 0.0
        %847 = vmatpush1.msra.mxu0 %v667
        %848 = vmatprep.subr.mxu0 0.0
        %849 = vmatpush1.msra.mxu0 %v668
        %850 = vmatprep.subr.mxu0 0.0
        %851 = vmatpush1.msra.mxu0 %v669
        %852 = vmatprep.subr.mxu0 0.0
        %853 = vmatpush1.msra.mxu0 %v670
        %854 = vmatprep.subr.mxu0 0.0
        %855 = vmatpush1.msra.mxu0 0.0
        %856 = vmatprep.subr.mxu0 0.0
        %857 = vmatpush1.msra.mxu0 0.0
        %858 = vmatprep.subr.mxu0 0.0
        %859 = vmatpush1.msra.mxu0 0.0
        %860 = vmatprep.subr.mxu0 0.0
        %861 = vmatpush1.msra.mxu0 0.0
        %862 = vmatprep.subr.mxu0 0.0
        %863 = vmatpush1.msra.mxu0 0.0
        %864 = vmatprep.subr.mxu0 0.0
        %865 = vmatpush1.msra.mxu0 0.0
        %866 = vmatprep.subr.mxu0 0.0
        %867 = vmatpush1.msra.mxu0 0.0
        %868 = vmatprep.subr.mxu0 0.0
        %869 = vmatpush1.msra.mxu0 0.0
        %870 = vmatprep.subr.mxu0 0.0
        %871 = vmatpush1.msra.mxu0 0.0
        %872 = vmatprep.subr.mxu0 0.0
        %873 = vmatpush1.msra.mxu0 0.0
        %874 = vmatprep.subr.mxu0 0.0
        %875 = vmatpush1.msra.mxu0 0.0
        %876 = vmatprep.subr.mxu0 0.0
        %877 = vmatpush1.msra.mxu0 0.0
        %878 = vmatprep.subr.mxu0 0.0
        %879 = vmatpush1.msra.mxu0 0.0
        %880 = vmatprep.subr.mxu0 0.0
        %881 = vmatpush1.msra.mxu0 0.0
        %882 = vmatprep.subr.mxu0 0.0
        %883 = vmatpush1.msra.mxu0 0.0
        %884 = vmatprep.subr.mxu0 0.0
        %885 = vmatpush1.msra.mxu0 0.0
        %886 = vmatprep.subr.mxu0 0.0
        %887 = vmatpush1.msra.mxu0 0.0
        %888 = vmatprep.subr.mxu0 0.0
        %889 = vmatpush1.msra.mxu0 0.0
        %890 = vmatprep.subr.mxu0 0.0
        %891 = vmatpush1.msra.mxu0 0.0
        %892 = vmatprep.subr.mxu0 0.0
        %893 = vmatpush1.msra.mxu0 0.0
        %894 = vmatprep.subr.mxu0 0.0
        %895 = vmatpush1.msra.mxu0 0.0
        %896 = vmatprep.subr.mxu0 0.0
        %897 = vmatpush1.msra.mxu0 0.0
        %898 = vmatprep.subr.mxu0 0.0
        %899 = vmatpush1.msra.mxu0 0.0
        %900 = vmatprep.subr.mxu0 0.0
        %901 = vmatpush1.msra.mxu0 0.0
        %902 = vmatprep.subr.mxu0 0.0
        %903 = vmatpush1.msra.mxu0 0.0
        %904 = vmatprep.subr.mxu0 0.0
        %905 = vmatpush1.msra.mxu0 0.0
        %906 = vmatprep.subr.mxu0 0.0
        %907 = vmatpush1.msra.mxu0 0.0
        %908 = vmatprep.subr.mxu0 0.0
        %909 = vmatpush1.msra.mxu0 0.0
        %910 = vmatprep.mubr.f32.mxu0 0.0
        %911 = vmatmul.mubr.f32.gmra.mrb[0].mxu0 %v704
        %v912 = vpop.f32.mrb[0].mxu0
        %v913 = vadd.f32 %v694, %v912
        %v914 = vpop.f32.mrb[0].mxu0
        %915 = vdwg.mxu0
        %916 = vmatprep.subr.mxu0 0.0
        %917 = vmatpush1.msra.mxu0 %v671
        %918 = vmatprep.subr.mxu0 0.0
        %919 = vmatpush1.msra.mxu0 %v672
        %920 = vmatprep.subr.mxu0 0.0
        %921 = vmatpush1.msra.mxu0 %v673
        %922 = vmatprep.subr.mxu0 0.0
        %923 = vmatpush1.msra.mxu0 %v674
        %924 = vmatprep.subr.mxu0 0.0
        %925 = vmatpush1.msra.mxu0 0.0
        %926 = vmatprep.subr.mxu0 0.0
        %927 = vmatpush1.msra.mxu0 0.0
        %928 = vmatprep.subr.mxu0 0.0
        %929 = vmatpush1.msra.mxu0 0.0
        %930 = vmatprep.subr.mxu0 0.0
        %931 = vmatpush1.msra.mxu0 0.0
        %932 = vmatprep.subr.mxu0 0.0
        %933 = vmatpush1.msra.mxu0 0.0
        %934 = vmatprep.subr.mxu0 0.0
        %935 = vmatpush1.msra.mxu0 0.0
        %936 = vmatprep.subr.mxu0 0.0
        %937 = vmatpush1.msra.mxu0 0.0
        %938 = vmatprep.subr.mxu0 0.0
        %939 = vmatpush1.msra.mxu0 0.0
        %940 = vmatprep.subr.mxu0 0.0
        %941 = vmatpush1.msra.mxu0 0.0
        %942 = vmatprep.subr.mxu0 0.0
        %943 = vmatpush1.msra.mxu0 0.0
        %944 = vmatprep.subr.mxu0 0.0
        %945 = vmatpush1.msra.mxu0 0.0
        %946 = vmatprep.subr.mxu0 0.0
        %947 = vmatpush1.msra.mxu0 0.0
        %948 = vmatprep.subr.mxu0 0.0
        %949 = vmatpush1.msra.mxu0 0.0
        %950 = vmatprep.subr.mxu0 0.0
        %951 = vmatpush1.msra.mxu0 0.0
        %952 = vmatprep.subr.mxu0 0.0
        %953 = vmatpush1.msra.mxu0 0.0
        %954 = vmatprep.subr.mxu0 0.0
        %955 = vmatpush1.msra.mxu0 0.0
        %956 = vmatprep.subr.mxu0 0.0
        %957 = vmatpush1.msra.mxu0 0.0
        %958 = vmatprep.subr.mxu0 0.0
        %959 = vmatpush1.msra.mxu0 0.0
        %960 = vmatprep.subr.mxu0 0.0
        %961 = vmatpush1.msra.mxu0 0.0
        %962 = vmatprep.subr.mxu0 0.0
        %963 = vmatpush1.msra.mxu0 0.0
        %964 = vmatprep.subr.mxu0 0.0
        %965 = vmatpush1.msra.mxu0 0.0
        %966 = vmatprep.subr.mxu0 0.0
        %967 = vmatpush1.msra.mxu0 0.0
        %968 = vmatprep.subr.mxu0 0.0
        %969 = vmatpush1.msra.mxu0 0.0
        %970 = vmatprep.subr.mxu0 0.0
        %971 = vmatpush1.msra.mxu0 0.0
        %972 = vmatprep.subr.mxu0 0.0
        %973 = vmatpush1.msra.mxu0 0.0
        %974 = vmatprep.subr.mxu0 0.0
        %975 = vmatpush1.msra.mxu0 0.0
        %976 = vmatprep.subr.mxu0 0.0
        %977 = vmatpush1.msra.mxu0 0.0
        %978 = vmatprep.subr.mxu0 0.0
        %979 = vmatpush1.msra.mxu0 0.0
        %980 = vmatprep.mubr.f32.mxu0 0.0
        %981 = vmatmul.mubr.f32.gmra.mrb[0].mxu0 %v704
        %v982 = vpop.f32.mrb[0].mxu0
        %v983 = vadd.f32 %v698, %v982
        %v984 = vpop.f32.mrb[0].mxu0
        %985 = vdwg.mxu0
        %v986 = vmul.f32 %v773, 0.35355338
        %v987 = vmul.f32 %v843, 0.35355338
        %v988 = vmul.f32 %v913, 0.35355338
        %v989 = vmul.f32 %v983, 0.35355338
        %v990 = vld [vmem:[%s4] sm:$0xff]
        %v991 = vld [vmem:[%s4 + $0x8] sm:$0xff]
        %v992 = vld [vmem:[%s4 + $0x10] sm:$0xff]
        %v993 = vld [vmem:[%s4 + $0x18] sm:$0xff]
        %v994 = vld [vmem:[%s4 + $0x20] sm:$0xff]
        %v995 = vld [vmem:[%s4 + $0x28] sm:$0xff]
        %v996 = vld [vmem:[%s4 + $0x30] sm:$0xff]
        %v997 = vld [vmem:[%s4 + $0x38] sm:$0xff]
        %v998 = vld [vmem:[%s4 + $0x40] sm:$0xff]
        %v999 = vld [vmem:[%s4 + $0x48] sm:$0xff]
        %v1000 = vld [vmem:[%s4 + $0x50] sm:$0xff]
        %v1001 = vld [vmem:[%s4 + $0x58] sm:$0xff]
        %v1002 = vld [vmem:[%s4 + $0x60] sm:$0xff]
        %v1003 = vld [vmem:[%s4 + $0x68] sm:$0xff]
        %v1004 = vld [vmem:[%s4 + $0x70] sm:$0xff]
        %v1005 = vld [vmem:[%s4 + $0x78] sm:$0xff]
        %v1006 = vld [vmem:[%s5] sm:$0x1]
        %v1007 = vld [vmem:[%s5 + $0x1] sm:$0x1]
        %v1008 = vld [vmem:[%s5 + $0x2] sm:$0x1]
        %v1009 = vld [vmem:[%s5 + $0x3] sm:$0x1]
        %v1014 = vlaneseq
        %v1015 = vshrl.u32 %v1014, 7
        %v1016 = vsub.s32 0, %v1015
        %v1017 = vrot.slane %v1006, %v1016
        %v1018 = vlaneseq
        %v1019 = vshrl.u32 %v1018, 7
        %v1020 = vsub.s32 0, %v1019
        %v1021 = vrot.slane %v1007, %v1020
        %v1022 = vlaneseq
        %v1023 = vshrl.u32 %v1022, 7
        %v1024 = vsub.s32 0, %v1023
        %v1025 = vrot.slane %v1008, %v1024
        %v1026 = vlaneseq
        %v1027 = vshrl.u32 %v1026, 7
        %v1028 = vsub.s32 0, %v1027
        %v1029 = vrot.slane %v1009, %v1028
        %1034 = vmatprep.subr.mxu0 0.0
        %1035 = vmatpush1.msra.mxu0 %v990
        %1036 = vmatprep.subr.mxu0 0.0
        %1037 = vmatpush1.msra.mxu0 %v991
        %1038 = vmatprep.subr.mxu0 0.0
        %1039 = vmatpush1.msra.mxu0 %v992
        %1040 = vmatprep.subr.mxu0 0.0
        %1041 = vmatpush1.msra.mxu0 %v993
        %1042 = vmatprep.subr.mxu0 0.0
        %1043 = vmatpush1.msra.mxu0 0.0
        %1044 = vmatprep.subr.mxu0 0.0
        %1045 = vmatpush1.msra.mxu0 0.0
        %1046 = vmatprep.subr.mxu0 0.0
        %1047 = vmatpush1.msra.mxu0 0.0
        %1048 = vmatprep.subr.mxu0 0.0
        %1049 = vmatpush1.msra.mxu0 0.0
        %1050 = vmatprep.subr.mxu0 0.0
        %1051 = vmatpush1.msra.mxu0 0.0
        %1052 = vmatprep.subr.mxu0 0.0
        %1053 = vmatpush1.msra.mxu0 0.0
        %1054 = vmatprep.subr.mxu0 0.0
        %1055 = vmatpush1.msra.mxu0 0.0
        %1056 = vmatprep.subr.mxu0 0.0
        %1057 = vmatpush1.msra.mxu0 0.0
        %1058 = vmatprep.subr.mxu0 0.0
        %1059 = vmatpush1.msra.mxu0 0.0
        %1060 = vmatprep.subr.mxu0 0.0
        %1061 = vmatpush1.msra.mxu0 0.0
        %1062 = vmatprep.subr.mxu0 0.0
        %1063 = vmatpush1.msra.mxu0 0.0
        %1064 = vmatprep.subr.mxu0 0.0
        %1065 = vmatpush1.msra.mxu0 0.0
        %1066 = vmatprep.subr.mxu0 0.0
        %1067 = vmatpush1.msra.mxu0 0.0
        %1068 = vmatprep.subr.mxu0 0.0
        %1069 = vmatpush1.msra.mxu0 0.0
        %1070 = vmatprep.subr.mxu0 0.0
        %1071 = vmatpush1.msra.mxu0 0.0
        %1072 = vmatprep.subr.mxu0 0.0
        %1073 = vmatpush1.msra.mxu0 0.0
        %1074 = vmatprep.subr.mxu0 0.0
        %1075 = vmatpush1.msra.mxu0 0.0
        %1076 = vmatprep.subr.mxu0 0.0
        %1077 = vmatpush1.msra.mxu0 0.0
        %1078 = vmatprep.subr.mxu0 0.0
        %1079 = vmatpush1.msra.mxu0 0.0
        %1080 = vmatprep.subr.mxu0 0.0
        %1081 = vmatpush1.msra.mxu0 0.0
        %1082 = vmatprep.subr.mxu0 0.0
        %1083 = vmatpush1.msra.mxu0 0.0
        %1084 = vmatprep.subr.mxu0 0.0
        %1085 = vmatpush1.msra.mxu0 0.0
        %1086 = vmatprep.subr.mxu0 0.0
        %1087 = vmatpush1.msra.mxu0 0.0
        %1088 = vmatprep.subr.mxu0 0.0
        %1089 = vmatpush1.msra.mxu0 0.0
        %1090 = vmatprep.subr.mxu0 0.0
        %1091 = vmatpush1.msra.mxu0 0.0
        %1092 = vmatprep.subr.mxu0 0.0
        %1093 = vmatpush1.msra.mxu0 0.0
        %1094 = vmatprep.subr.mxu0 0.0
        %1095 = vmatpush1.msra.mxu0 0.0
        %1096 = vmatprep.subr.mxu0 0.0
        %1097 = vmatpush1.msra.mxu0 0.0
        %1098 = vmatprep.mubr.f32.mxu0 0.0
        %1099 = vmatmul.mubr.f32.gmra.mrb[0].mxu0 %v704
        %v1100 = vpop.f32.mrb[0].mxu0
        %v1101 = vadd.f32 %v1017, %v1100
        %v1102 = vpop.f32.mrb[0].mxu0
        %1103 = vdwg.mxu0
        %1104 = vmatprep.subr.mxu0 0.0
        %1105 = vmatpush1.msra.mxu0 %v994
        %1106 = vmatprep.subr.mxu0 0.0
        %1107 = vmatpush1.msra.mxu0 %v995
        %1108 = vmatprep.subr.mxu0 0.0
        %1109 = vmatpush1.msra.mxu0 %v996
        %1110 = vmatprep.subr.mxu0 0.0
        %1111 = vmatpush1.msra.mxu0 %v997
        %1112 = vmatprep.subr.mxu0 0.0
        %1113 = vmatpush1.msra.mxu0 0.0
        %1114 = vmatprep.subr.mxu0 0.0
        %1115 = vmatpush1.msra.mxu0 0.0
        %1116 = vmatprep.subr.mxu0 0.0
        %1117 = vmatpush1.msra.mxu0 0.0
        %1118 = vmatprep.subr.mxu0 0.0
        %1119 = vmatpush1.msra.mxu0 0.0
        %1120 = vmatprep.subr.mxu0 0.0
        %1121 = vmatpush1.msra.mxu0 0.0
        %1122 = vmatprep.subr.mxu0 0.0
        %1123 = vmatpush1.msra.mxu0 0.0
        %1124 = vmatprep.subr.mxu0 0.0
        %1125 = vmatpush1.msra.mxu0 0.0
        %1126 = vmatprep.subr.mxu0 0.0
        %1127 = vmatpush1.msra.mxu0 0.0
        %1128 = vmatprep.subr.mxu0 0.0
        %1129 = vmatpush1.msra.mxu0 0.0
        %1130 = vmatprep.subr.mxu0 0.0
        %1131 = vmatpush1.msra.mxu0 0.0
        %1132 = vmatprep.subr.mxu0 0.0
        %1133 = vmatpush1.msra.mxu0 0.0
        %1134 = vmatprep.subr.mxu0 0.0
        %1135 = vmatpush1.msra.mxu0 0.0
        %1136 = vmatprep.subr.mxu0 0.0
        %1137 = vmatpush1.msra.mxu0 0.0
        %1138 = vmatprep.subr.mxu0 0.0
        %1139 = vmatpush1.msra.mxu0 0.0
        %1140 = vmatprep.subr.mxu0 0.0
        %1141 = vmatpush1.msra.mxu0 0.0
        %1142 = vmatprep.subr.mxu0 0.0
        %1143 = vmatpush1.msra.mxu0 0.0
        %1144 = vmatprep.subr.mxu0 0.0
        %1145 = vmatpush1.msra.mxu0 0.0
        %1146 = vmatprep.subr.mxu0 0.0
        %1147 = vmatpush1.msra.mxu0 0.0
        %1148 = vmatprep.subr.mxu0 0.0
        %1149 = vmatpush1.msra.mxu0 0.0
        %1150 = vmatprep.subr.mxu0 0.0
        %1151 = vmatpush1.msra.mxu0 0.0
        %1152 = vmatprep.subr.mxu0 0.0
        %1153 = vmatpush1.msra.mxu0 0.0
        %1154 = vmatprep.subr.mxu0 0.0
        %1155 = vmatpush1.msra.mxu0 0.0
        %1156 = vmatprep.subr.mxu0 0.0
        %1157 = vmatpush1.msra.mxu0 0.0
        %1158 = vmatprep.subr.mxu0 0.0
        %1159 = vmatpush1.msra.mxu0 0.0
        %1160 = vmatprep.subr.mxu0 0.0
        %1161 = vmatpush1.msra.mxu0 0.0
        %1162 = vmatprep.subr.mxu0 0.0
        %1163 = vmatpush1.msra.mxu0 0.0
        %1164 = vmatprep.subr.mxu0 0.0
        %1165 = vmatpush1.msra.mxu0 0.0
        %1166 = vmatprep.subr.mxu0 0.0
        %1167 = vmatpush1.msra.mxu0 0.0
        %1168 = vmatprep.mubr.f32.mxu0 0.0
        %1169 = vmatmul.mubr.f32.gmra.mrb[0].mxu0 %v704
        %v1170 = vpop.f32.mrb[0].mxu0
        %v1171 = vadd.f32 %v1021, %v1170
        %v1172 = vpop.f32.mrb[0].mxu0
        %1173 = vdwg.mxu0
        %1174 = vmatprep.subr.mxu0 0.0
        %1175 = vmatpush1.msra.mxu0 %v998
        %1176 = vmatprep.subr.mxu0 0.0
        %1177 = vmatpush1.msra.mxu0 %v999
        %1178 = vmatprep.subr.mxu0 0.0
        %1179 = vmatpush1.msra.mxu0 %v1000
        %1180 = vmatprep.subr.mxu0 0.0
        %1181 = vmatpush1.msra.mxu0 %v1001
        %1182 = vmatprep.subr.mxu0 0.0
        %1183 = vmatpush1.msra.mxu0 0.0
        %1184 = vmatprep.subr.mxu0 0.0
        %1185 = vmatpush1.msra.mxu0 0.0
        %1186 = vmatprep.subr.mxu0 0.0
        %1187 = vmatpush1.msra.mxu0 0.0
        %1188 = vmatprep.subr.mxu0 0.0
        %1189 = vmatpush1.msra.mxu0 0.0
        %1190 = vmatprep.subr.mxu0 0.0
        %1191 = vmatpush1.msra.mxu0 0.0
        %1192 = vmatprep.subr.mxu0 0.0
        %1193 = vmatpush1.msra.mxu0 0.0
        %1194 = vmatprep.subr.mxu0 0.0
        %1195 = vmatpush1.msra.mxu0 0.0
        %1196 = vmatprep.subr.mxu0 0.0
        %1197 = vmatpush1.msra.mxu0 0.0
        %1198 = vmatprep.subr.mxu0 0.0
        %1199 = vmatpush1.msra.mxu0 0.0
        %1200 = vmatprep.subr.mxu0 0.0
        %1201 = vmatpush1.msra.mxu0 0.0
        %1202 = vmatprep.subr.mxu0 0.0
        %1203 = vmatpush1.msra.mxu0 0.0
        %1204 = vmatprep.subr.mxu0 0.0
        %1205 = vmatpush1.msra.mxu0 0.0
        %1206 = vmatprep.subr.mxu0 0.0
        %1207 = vmatpush1.msra.mxu0 0.0
        %1208 = vmatprep.subr.mxu0 0.0
        %1209 = vmatpush1.msra.mxu0 0.0
        %1210 = vmatprep.subr.mxu0 0.0
        %1211 = vmatpush1.msra.mxu0 0.0
        %1212 = vmatprep.subr.mxu0 0.0
        %1213 = vmatpush1.msra.mxu0 0.0
        %1214 = vmatprep.subr.mxu0 0.0
        %1215 = vmatpush1.msra.mxu0 0.0
        %1216 = vmatprep.subr.mxu0 0.0
        %1217 = vmatpush1.msra.mxu0 0.0
        %1218 = vmatprep.subr.mxu0 0.0
        %1219 = vmatpush1.msra.mxu0 0.0
        %1220 = vmatprep.subr.mxu0 0.0
        %1221 = vmatpush1.msra.mxu0 0.0
        %1222 = vmatprep.subr.mxu0 0.0
        %1223 = vmatpush1.msra.mxu0 0.0
        %1224 = vmatprep.subr.mxu0 0.0
        %1225 = vmatpush1.msra.mxu0 0.0
        %1226 = vmatprep.subr.mxu0 0.0
        %1227 = vmatpush1.msra.mxu0 0.0
        %1228 = vmatprep.subr.mxu0 0.0
        %1229 = vmatpush1.msra.mxu0 0.0
        %1230 = vmatprep.subr.mxu0 0.0
        %1231 = vmatpush1.msra.mxu0 0.0
        %1232 = vmatprep.subr.mxu0 0.0
        %1233 = vmatpush1.msra.mxu0 0.0
        %1234 = vmatprep.subr.mxu0 0.0
        %1235 = vmatpush1.msra.mxu0 0.0
        %1236 = vmatprep.subr.mxu0 0.0
        %1237 = vmatpush1.msra.mxu0 0.0
        %1238 = vmatprep.mubr.f32.mxu0 0.0
        %1239 = vmatmul.mubr.f32.gmra.mrb[0].mxu0 %v704
        %v1240 = vpop.f32.mrb[0].mxu0
        %v1241 = vadd.f32 %v1025, %v1240
        %v1242 = vpop.f32.mrb[0].mxu0
        %1243 = vdwg.mxu0
        %1244 = vmatprep.subr.mxu0 0.0
        %1245 = vmatpush1.msra.mxu0 %v1002
        %1246 = vmatprep.subr.mxu0 0.0
        %1247 = vmatpush1.msra.mxu0 %v1003
        %1248 = vmatprep.subr.mxu0 0.0
        %1249 = vmatpush1.msra.mxu0 %v1004
        %1250 = vmatprep.subr.mxu0 0.0
        %1251 = vmatpush1.msra.mxu0 %v1005
        %1252 = vmatprep.subr.mxu0 0.0
        %1253 = vmatpush1.msra.mxu0 0.0
        %1254 = vmatprep.subr.mxu0 0.0
        %1255 = vmatpush1.msra.mxu0 0.0
        %1256 = vmatprep.subr.mxu0 0.0
        %1257 = vmatpush1.msra.mxu0 0.0
        %1258 = vmatprep.subr.mxu0 0.0
        %1259 = vmatpush1.msra.mxu0 0.0
        %1260 = vmatprep.subr.mxu0 0.0
        %1261 = vmatpush1.msra.mxu0 0.0
        %1262 = vmatprep.subr.mxu0 0.0
        %1263 = vmatpush1.msra.mxu0 0.0
        %1264 = vmatprep.subr.mxu0 0.0
        %1265 = vmatpush1.msra.mxu0 0.0
        %1266 = vmatprep.subr.mxu0 0.0
        %1267 = vmatpush1.msra.mxu0 0.0
        %1268 = vmatprep.subr.mxu0 0.0
        %1269 = vmatpush1.msra.mxu0 0.0
        %1270 = vmatprep.subr.mxu0 0.0
        %1271 = vmatpush1.msra.mxu0 0.0
        %1272 = vmatprep.subr.mxu0 0.0
        %1273 = vmatpush1.msra.mxu0 0.0
        %1274 = vmatprep.subr.mxu0 0.0
        %1275 = vmatpush1.msra.mxu0 0.0
        %1276 = vmatprep.subr.mxu0 0.0
        %1277 = vmatpush1.msra.mxu0 0.0
        %1278 = vmatprep.subr.mxu0 0.0
        %1279 = vmatpush1.msra.mxu0 0.0
        %1280 = vmatprep.subr.mxu0 0.0
        %1281 = vmatpush1.msra.mxu0 0.0
        %1282 = vmatprep.subr.mxu0 0.0
        %1283 = vmatpush1.msra.mxu0 0.0
        %1284 = vmatprep.subr.mxu0 0.0
        %1285 = vmatpush1.msra.mxu0 0.0
        %1286 = vmatprep.subr.mxu0 0.0
        %1287 = vmatpush1.msra.mxu0 0.0
        %1288 = vmatprep.subr.mxu0 0.0
        %1289 = vmatpush1.msra.mxu0 0.0
        %1290 = vmatprep.subr.mxu0 0.0
        %1291 = vmatpush1.msra.mxu0 0.0
        %1292 = vmatprep.subr.mxu0 0.0
        %1293 = vmatpush1.msra.mxu0 0.0
        %1294 = vmatprep.subr.mxu0 0.0
        %1295 = vmatpush1.msra.mxu0 0.0
        %1296 = vmatprep.subr.mxu0 0.0
        %1297 = vmatpush1.msra.mxu0 0.0
        %1298 = vmatprep.subr.mxu0 0.0
        %1299 = vmatpush1.msra.mxu0 0.0
        %1300 = vmatprep.subr.mxu0 0.0
        %1301 = vmatpush1.msra.mxu0 0.0
        %1302 = vmatprep.subr.mxu0 0.0
        %1303 = vmatpush1.msra.mxu0 0.0
        %1304 = vmatprep.subr.mxu0 0.0
        %1305 = vmatpush1.msra.mxu0 0.0
        %1306 = vmatprep.subr.mxu0 0.0
        %1307 = vmatpush1.msra.mxu0 0.0
        %1308 = vmatprep.mubr.f32.mxu0 0.0
        %1309 = vmatmul.mubr.f32.gmra.mrb[0].mxu0 %v704
        %v1310 = vpop.f32.mrb[0].mxu0
        %v1311 = vadd.f32 %v1029, %v1310
        %v1312 = vpop.f32.mrb[0].mxu0
        %1313 = vdwg.mxu0
        %v1314 = vld [vmem:[%s6] sm:$0xff]
        %v1315 = vld [vmem:[%s6 + $0x8] sm:$0xff]
        %v1316 = vld [vmem:[%s6 + $0x10] sm:$0xff]
        %v1317 = vld [vmem:[%s6 + $0x18] sm:$0xff]
        %v1318 = vld [vmem:[%s6 + $0x20] sm:$0xff]
        %v1319 = vld [vmem:[%s6 + $0x28] sm:$0xff]
        %v1320 = vld [vmem:[%s6 + $0x30] sm:$0xff]
        %v1321 = vld [vmem:[%s6 + $0x38] sm:$0xff]
        %v1322 = vld [vmem:[%s6 + $0x40] sm:$0xff]
        %v1323 = vld [vmem:[%s6 + $0x48] sm:$0xff]
        %v1324 = vld [vmem:[%s6 + $0x50] sm:$0xff]
        %v1325 = vld [vmem:[%s6 + $0x58] sm:$0xff]
        %v1326 = vld [vmem:[%s6 + $0x60] sm:$0xff]
        %v1327 = vld [vmem:[%s6 + $0x68] sm:$0xff]
        %v1328 = vld [vmem:[%s6 + $0x70] sm:$0xff]
        %v1329 = vld [vmem:[%s6 + $0x78] sm:$0xff]
        %v1330 = vld [vmem:[%s7] sm:$0x1]
        %v1331 = vld [vmem:[%s7 + $0x1] sm:$0x1]
        %v1332 = vld [vmem:[%s7 + $0x2] sm:$0x1]
        %v1333 = vld [vmem:[%s7 + $0x3] sm:$0x1]
        %v1338 = vlaneseq
        %v1339 = vshrl.u32 %v1338, 7
        %v1340 = vsub.s32 0, %v1339
        %v1341 = vrot.slane %v1330, %v1340
        %v1342 = vlaneseq
        %v1343 = vshrl.u32 %v1342, 7
        %v1344 = vsub.s32 0, %v1343
        %v1345 = vrot.slane %v1331, %v1344
        %v1346 = vlaneseq
        %v1347 = vshrl.u32 %v1346, 7
        %v1348 = vsub.s32 0, %v1347
        %v1349 = vrot.slane %v1332, %v1348
        %v1350 = vlaneseq
        %v1351 = vshrl.u32 %v1350, 7
        %v1352 = vsub.s32 0, %v1351
        %v1353 = vrot.slane %v1333, %v1352
        %1358 = vmatprep.subr.mxu0 0.0
        %1359 = vmatpush1.msra.mxu0 %v1314
        %1360 = vmatprep.subr.mxu0 0.0
        %1361 = vmatpush1.msra.mxu0 %v1315
        %1362 = vmatprep.subr.mxu0 0.0
        %1363 = vmatpush1.msra.mxu0 %v1316
        %1364 = vmatprep.subr.mxu0 0.0
        %1365 = vmatpush1.msra.mxu0 %v1317
        %1366 = vmatprep.subr.mxu0 0.0
        %1367 = vmatpush1.msra.mxu0 0.0
        %1368 = vmatprep.subr.mxu0 0.0
        %1369 = vmatpush1.msra.mxu0 0.0
        %1370 = vmatprep.subr.mxu0 0.0
        %1371 = vmatpush1.msra.mxu0 0.0
        %1372 = vmatprep.subr.mxu0 0.0
        %1373 = vmatpush1.msra.mxu0 0.0
        %1374 = vmatprep.subr.mxu0 0.0
        %1375 = vmatpush1.msra.mxu0 0.0
        %1376 = vmatprep.subr.mxu0 0.0
        %1377 = vmatpush1.msra.mxu0 0.0
        %1378 = vmatprep.subr.mxu0 0.0
        %1379 = vmatpush1.msra.mxu0 0.0
        %1380 = vmatprep.subr.mxu0 0.0
        %1381 = vmatpush1.msra.mxu0 0.0
        %1382 = vmatprep.subr.mxu0 0.0
        %1383 = vmatpush1.msra.mxu0 0.0
        %1384 = vmatprep.subr.mxu0 0.0
        %1385 = vmatpush1.msra.mxu0 0.0
        %1386 = vmatprep.subr.mxu0 0.0
        %1387 = vmatpush1.msra.mxu0 0.0
        %1388 = vmatprep.subr.mxu0 0.0
        %1389 = vmatpush1.msra.mxu0 0.0
        %1390 = vmatprep.subr.mxu0 0.0
        %1391 = vmatpush1.msra.mxu0 0.0
        %1392 = vmatprep.subr.mxu0 0.0
        %1393 = vmatpush1.msra.mxu0 0.0
        %1394 = vmatprep.subr.mxu0 0.0
        %1395 = vmatpush1.msra.mxu0 0.0
        %1396 = vmatprep.subr.mxu0 0.0
        %1397 = vmatpush1.msra.mxu0 0.0
        %1398 = vmatprep.subr.mxu0 0.0
        %1399 = vmatpush1.msra.mxu0 0.0
        %1400 = vmatprep.subr.mxu0 0.0
        %1401 = vmatpush1.msra.mxu0 0.0
        %1402 = vmatprep.subr.mxu0 0.0
        %1403 = vmatpush1.msra.mxu0 0.0
        %1404 = vmatprep.subr.mxu0 0.0
        %1405 = vmatpush1.msra.mxu0 0.0
        %1406 = vmatprep.subr.mxu0 0.0
        %1407 = vmatpush1.msra.mxu0 0.0
        %1408 = vmatprep.subr.mxu0 0.0
        %1409 = vmatpush1.msra.mxu0 0.0
        %1410 = vmatprep.subr.mxu0 0.0
        %1411 = vmatpush1.msra.mxu0 0.0
        %1412 = vmatprep.subr.mxu0 0.0
        %1413 = vmatpush1.msra.mxu0 0.0
        %1414 = vmatprep.subr.mxu0 0.0
        %1415 = vmatpush1.msra.mxu0 0.0
        %1416 = vmatprep.subr.mxu0 0.0
        %1417 = vmatpush1.msra.mxu0 0.0
        %1418 = vmatprep.subr.mxu0 0.0
        %1419 = vmatpush1.msra.mxu0 0.0
        %1420 = vmatprep.subr.mxu0 0.0
        %1421 = vmatpush1.msra.mxu0 0.0
        %1422 = vmatprep.mubr.f32.mxu0 0.0
        %1423 = vmatmul.mubr.f32.gmra.mrb[0].mxu0 %v704
        %v1424 = vpop.f32.mrb[0].mxu0
        %v1425 = vadd.f32 %v1341, %v1424
        %v1426 = vpop.f32.mrb[0].mxu0
        %1427 = vdwg.mxu0
        %1428 = vmatprep.subr.mxu0 0.0
        %1429 = vmatpush1.msra.mxu0 %v1318
        %1430 = vmatprep.subr.mxu0 0.0
        %1431 = vmatpush1.msra.mxu0 %v1319
        %1432 = vmatprep.subr.mxu0 0.0
        %1433 = vmatpush1.msra.mxu0 %v1320
        %1434 = vmatprep.subr.mxu0 0.0
        %1435 = vmatpush1.msra.mxu0 %v1321
        %1436 = vmatprep.subr.mxu0 0.0
        %1437 = vmatpush1.msra.mxu0 0.0
        %1438 = vmatprep.subr.mxu0 0.0
        %1439 = vmatpush1.msra.mxu0 0.0
        %1440 = vmatprep.subr.mxu0 0.0
        %1441 = vmatpush1.msra.mxu0 0.0
        %1442 = vmatprep.subr.mxu0 0.0
        %1443 = vmatpush1.msra.mxu0 0.0
        %1444 = vmatprep.subr.mxu0 0.0
        %1445 = vmatpush1.msra.mxu0 0.0
        %1446 = vmatprep.subr.mxu0 0.0
        %1447 = vmatpush1.msra.mxu0 0.0
        %1448 = vmatprep.subr.mxu0 0.0
        %1449 = vmatpush1.msra.mxu0 0.0
        %1450 = vmatprep.subr.mxu0 0.0
        %1451 = vmatpush1.msra.mxu0 0.0
        %1452 = vmatprep.subr.mxu0 0.0
        %1453 = vmatpush1.msra.mxu0 0.0
        %1454 = vmatprep.subr.mxu0 0.0
        %1455 = vmatpush1.msra.mxu0 0.0
        %1456 = vmatprep.subr.mxu0 0.0
        %1457 = vmatpush1.msra.mxu0 0.0
        %1458 = vmatprep.subr.mxu0 0.0
        %1459 = vmatpush1.msra.mxu0 0.0
        %1460 = vmatprep.subr.mxu0 0.0
        %1461 = vmatpush1.msra.mxu0 0.0
        %1462 = vmatprep.subr.mxu0 0.0
        %1463 = vmatpush1.msra.mxu0 0.0
        %1464 = vmatprep.subr.mxu0 0.0
        %1465 = vmatpush1.msra.mxu0 0.0
        %1466 = vmatprep.subr.mxu0 0.0
        %1467 = vmatpush1.msra.mxu0 0.0
        %1468 = vmatprep.subr.mxu0 0.0
        %1469 = vmatpush1.msra.mxu0 0.0
        %1470 = vmatprep.subr.mxu0 0.0
        %1471 = vmatpush1.msra.mxu0 0.0
        %1472 = vmatprep.subr.mxu0 0.0
        %1473 = vmatpush1.msra.mxu0 0.0
        %1474 = vmatprep.subr.mxu0 0.0
        %1475 = vmatpush1.msra.mxu0 0.0
        %1476 = vmatprep.subr.mxu0 0.0
        %1477 = vmatpush1.msra.mxu0 0.0
        %1478 = vmatprep.subr.mxu0 0.0
        %1479 = vmatpush1.msra.mxu0 0.0
        %1480 = vmatprep.subr.mxu0 0.0
        %1481 = vmatpush1.msra.mxu0 0.0
        %1482 = vmatprep.subr.mxu0 0.0
        %1483 = vmatpush1.msra.mxu0 0.0
        %1484 = vmatprep.subr.mxu0 0.0
        %1485 = vmatpush1.msra.mxu0 0.0
        %1486 = vmatprep.subr.mxu0 0.0
        %1487 = vmatpush1.msra.mxu0 0.0
        %1488 = vmatprep.subr.mxu0 0.0
        %1489 = vmatpush1.msra.mxu0 0.0
        %1490 = vmatprep.subr.mxu0 0.0
        %1491 = vmatpush1.msra.mxu0 0.0
        %1492 = vmatprep.mubr.f32.mxu0 0.0
        %1493 = vmatmul.mubr.f32.gmra.mrb[0].mxu0 %v704
        %v1494 = vpop.f32.mrb[0].mxu0
        %v1495 = vadd.f32 %v1345, %v1494
        %v1496 = vpop.f32.mrb[0].mxu0
        %1497 = vdwg.mxu0
        %1498 = vmatprep.subr.mxu0 0.0
        %1499 = vmatpush1.msra.mxu0 %v1322
        %1500 = vmatprep.subr.mxu0 0.0
        %1501 = vmatpush1.msra.mxu0 %v1323
        %1502 = vmatprep.subr.mxu0 0.0
        %1503 = vmatpush1.msra.mxu0 %v1324
        %1504 = vmatprep.subr.mxu0 0.0
        %1505 = vmatpush1.msra.mxu0 %v1325
        %1506 = vmatprep.subr.mxu0 0.0
        %1507 = vmatpush1.msra.mxu0 0.0
        %1508 = vmatprep.subr.mxu0 0.0
        %1509 = vmatpush1.msra.mxu0 0.0
        %1510 = vmatprep.subr.mxu0 0.0
        %1511 = vmatpush1.msra.mxu0 0.0
        %1512 = vmatprep.subr.mxu0 0.0
        %1513 = vmatpush1.msra.mxu0 0.0
        %1514 = vmatprep.subr.mxu0 0.0
        %1515 = vmatpush1.msra.mxu0 0.0
        %1516 = vmatprep.subr.mxu0 0.0
        %1517 = vmatpush1.msra.mxu0 0.0
        %1518 = vmatprep.subr.mxu0 0.0
        %1519 = vmatpush1.msra.mxu0 0.0
        %1520 = vmatprep.subr.mxu0 0.0
        %1521 = vmatpush1.msra.mxu0 0.0
        %1522 = vmatprep.subr.mxu0 0.0
        %1523 = vmatpush1.msra.mxu0 0.0
        %1524 = vmatprep.subr.mxu0 0.0
        %1525 = vmatpush1.msra.mxu0 0.0
        %1526 = vmatprep.subr.mxu0 0.0
        %1527 = vmatpush1.msra.mxu0 0.0
        %1528 = vmatprep.subr.mxu0 0.0
        %1529 = vmatpush1.msra.mxu0 0.0
        %1530 = vmatprep.subr.mxu0 0.0
        %1531 = vmatpush1.msra.mxu0 0.0
        %1532 = vmatprep.subr.mxu0 0.0
        %1533 = vmatpush1.msra.mxu0 0.0
        %1534 = vmatprep.subr.mxu0 0.0
        %1535 = vmatpush1.msra.mxu0 0.0
        %1536 = vmatprep.subr.mxu0 0.0
        %1537 = vmatpush1.msra.mxu0 0.0
        %1538 = vmatprep.subr.mxu0 0.0
        %1539 = vmatpush1.msra.mxu0 0.0
        %1540 = vmatprep.subr.mxu0 0.0
        %1541 = vmatpush1.msra.mxu0 0.0
        %1542 = vmatprep.subr.mxu0 0.0
        %1543 = vmatpush1.msra.mxu0 0.0
        %1544 = vmatprep.subr.mxu0 0.0
        %1545 = vmatpush1.msra.mxu0 0.0
        %1546 = vmatprep.subr.mxu0 0.0
        %1547 = vmatpush1.msra.mxu0 0.0
        %1548 = vmatprep.subr.mxu0 0.0
        %1549 = vmatpush1.msra.mxu0 0.0
        %1550 = vmatprep.subr.mxu0 0.0
        %1551 = vmatpush1.msra.mxu0 0.0
        %1552 = vmatprep.subr.mxu0 0.0
        %1553 = vmatpush1.msra.mxu0 0.0
        %1554 = vmatprep.subr.mxu0 0.0
        %1555 = vmatpush1.msra.mxu0 0.0
        %1556 = vmatprep.subr.mxu0 0.0
        %1557 = vmatpush1.msra.mxu0 0.0
        %1558 = vmatprep.subr.mxu0 0.0
        %1559 = vmatpush1.msra.mxu0 0.0
        %1560 = vmatprep.subr.mxu0 0.0
        %1561 = vmatpush1.msra.mxu0 0.0
        %1562 = vmatprep.mubr.f32.mxu0 0.0
        %1563 = vmatmul.mubr.f32.gmra.mrb[0].mxu0 %v704
        %v1564 = vpop.f32.mrb[0].mxu0
        %v1565 = vadd.f32 %v1349, %v1564
        %v1566 = vpop.f32.mrb[0].mxu0
        %1567 = vdwg.mxu0
        %1568 = vmatprep.subr.mxu0 0.0
        %1569 = vmatpush1.msra.mxu0 %v1326
        %1570 = vmatprep.subr.mxu0 0.0
        %1571 = vmatpush1.msra.mxu0 %v1327
        %1572 = vmatprep.subr.mxu0 0.0
        %1573 = vmatpush1.msra.mxu0 %v1328
        %1574 = vmatprep.subr.mxu0 0.0
        %1575 = vmatpush1.msra.mxu0 %v1329
        %1576 = vmatprep.subr.mxu0 0.0
        %1577 = vmatpush1.msra.mxu0 0.0
        %1578 = vmatprep.subr.mxu0 0.0
        %1579 = vmatpush1.msra.mxu0 0.0
        %1580 = vmatprep.subr.mxu0 0.0
        %1581 = vmatpush1.msra.mxu0 0.0
        %1582 = vmatprep.subr.mxu0 0.0
        %1583 = vmatpush1.msra.mxu0 0.0
        %1584 = vmatprep.subr.mxu0 0.0
        %1585 = vmatpush1.msra.mxu0 0.0
        %1586 = vmatprep.subr.mxu0 0.0
        %1587 = vmatpush1.msra.mxu0 0.0
        %1588 = vmatprep.subr.mxu0 0.0
        %1589 = vmatpush1.msra.mxu0 0.0
        %1590 = vmatprep.subr.mxu0 0.0
        %1591 = vmatpush1.msra.mxu0 0.0
        %1592 = vmatprep.subr.mxu0 0.0
        %1593 = vmatpush1.msra.mxu0 0.0
        %1594 = vmatprep.subr.mxu0 0.0
        %1595 = vmatpush1.msra.mxu0 0.0
        %1596 = vmatprep.subr.mxu0 0.0
        %1597 = vmatpush1.msra.mxu0 0.0
        %1598 = vmatprep.subr.mxu0 0.0
        %1599 = vmatpush1.msra.mxu0 0.0
        %1600 = vmatprep.subr.mxu0 0.0
        %1601 = vmatpush1.msra.mxu0 0.0
        %1602 = vmatprep.subr.mxu0 0.0
        %1603 = vmatpush1.msra.mxu0 0.0
        %1604 = vmatprep.subr.mxu0 0.0
        %1605 = vmatpush1.msra.mxu0 0.0
        %1606 = vmatprep.subr.mxu0 0.0
        %1607 = vmatpush1.msra.mxu0 0.0
        %1608 = vmatprep.subr.mxu0 0.0
        %1609 = vmatpush1.msra.mxu0 0.0
        %1610 = vmatprep.subr.mxu0 0.0
        %1611 = vmatpush1.msra.mxu0 0.0
        %1612 = vmatprep.subr.mxu0 0.0
        %1613 = vmatpush1.msra.mxu0 0.0
        %1614 = vmatprep.subr.mxu0 0.0
        %1615 = vmatpush1.msra.mxu0 0.0
        %1616 = vmatprep.subr.mxu0 0.0
        %1617 = vmatpush1.msra.mxu0 0.0
        %1618 = vmatprep.subr.mxu0 0.0
        %1619 = vmatpush1.msra.mxu0 0.0
        %1620 = vmatprep.subr.mxu0 0.0
        %1621 = vmatpush1.msra.mxu0 0.0
        %1622 = vmatprep.subr.mxu0 0.0
        %1623 = vmatpush1.msra.mxu0 0.0
        %1624 = vmatprep.subr.mxu0 0.0
        %1625 = vmatpush1.msra.mxu0 0.0
        %1626 = vmatprep.subr.mxu0 0.0
        %1627 = vmatpush1.msra.mxu0 0.0
        %1628 = vmatprep.subr.mxu0 0.0
        %1629 = vmatpush1.msra.mxu0 0.0
        %1630 = vmatprep.subr.mxu0 0.0
        %1631 = vmatpush1.msra.mxu0 0.0
        %1632 = vmatprep.mubr.f32.mxu0 0.0
        %1633 = vmatmul.mubr.f32.gmra.mrb[0].mxu0 %v704
        %v1634 = vpop.f32.mrb[0].mxu0
        %v1635 = vadd.f32 %v1353, %v1634
        %v1636 = vpop.f32.mrb[0].mxu0
        %1637 = vdwg.mxu0
        %vm1638 = vcmask 64512
        %v1640 = vsel %vm1638, %v986, 0
        %v1643 = vsel %vm1638, %v1101, 0
        %1645 = vmatprep.subr.mxu0 0.0
        %1646 = vmatpush1.xpose.msra.mxu0 %v1643
        %1647 = vmatprep.subr.mxu0 0.0
        %1648 = vmatpush1.xpose.msra.mxu0 0.0
        %1649 = vmatprep.subr.mxu0 0.0
        %1650 = vmatpush1.xpose.msra.mxu0 0.0
        %1651 = vmatprep.subr.mxu0 0.0
        %1652 = vmatpush1.xpose.msra.mxu0 0.0
        %1653 = vmatprep.subr.mxu0 0.0
        %1654 = vmatpush1.xpose.msra.mxu0 0.0
        %1655 = vmatprep.subr.mxu0 0.0
        %1656 = vmatpush1.xpose.msra.mxu0 0.0
        %1657 = vmatprep.subr.mxu0 0.0
        %1658 = vmatpush1.xpose.msra.mxu0 0.0
        %1659 = vmatprep.subr.mxu0 0.0
        %1660 = vmatpush1.xpose.msra.mxu0 0.0
        %1661 = vmatprep.subr.mxu0 0.0
        %1662 = vmatpush1.xpose.msra.mxu0 0.0
        %1663 = vmatprep.subr.mxu0 0.0
        %1664 = vmatpush1.xpose.msra.mxu0 0.0
        %1665 = vmatprep.subr.mxu0 0.0
        %1666 = vmatpush1.xpose.msra.mxu0 0.0
        %1667 = vmatprep.subr.mxu0 0.0
        %1668 = vmatpush1.xpose.msra.mxu0 0.0
        %1669 = vmatprep.subr.mxu0 0.0
        %1670 = vmatpush1.xpose.msra.mxu0 0.0
        %1671 = vmatprep.subr.mxu0 0.0
        %1672 = vmatpush1.xpose.msra.mxu0 0.0
        %1673 = vmatprep.subr.mxu0 0.0
        %1674 = vmatpush1.xpose.msra.mxu0 0.0
        %1675 = vmatprep.subr.mxu0 0.0
        %1676 = vmatpush1.xpose.msra.mxu0 0.0
        %1677 = vmatprep.subr.mxu0 0.0
        %1678 = vmatpush1.xpose.msra.mxu0 0.0
        %1679 = vmatprep.subr.mxu0 0.0
        %1680 = vmatpush1.xpose.msra.mxu0 0.0
        %1681 = vmatprep.subr.mxu0 0.0
        %1682 = vmatpush1.xpose.msra.mxu0 0.0
        %1683 = vmatprep.subr.mxu0 0.0
        %1684 = vmatpush1.xpose.msra.mxu0 0.0
        %1685 = vmatprep.subr.mxu0 0.0
        %1686 = vmatpush1.xpose.msra.mxu0 0.0
        %1687 = vmatprep.subr.mxu0 0.0
        %1688 = vmatpush1.xpose.msra.mxu0 0.0
        %1689 = vmatprep.subr.mxu0 0.0
        %1690 = vmatpush1.xpose.msra.mxu0 0.0
        %1691 = vmatprep.subr.mxu0 0.0
        %1692 = vmatpush1.xpose.msra.mxu0 0.0
        %1693 = vmatprep.subr.mxu0 0.0
        %1694 = vmatpush1.xpose.msra.mxu0 0.0
        %1695 = vmatprep.subr.mxu0 0.0
        %1696 = vmatpush1.xpose.msra.mxu0 0.0
        %1697 = vmatprep.subr.mxu0 0.0
        %1698 = vmatpush1.xpose.msra.mxu0 0.0
        %1699 = vmatprep.subr.mxu0 0.0
        %1700 = vmatpush1.xpose.msra.mxu0 0.0
        %1701 = vmatprep.subr.mxu0 0.0
        %1702 = vmatpush1.xpose.msra.mxu0 0.0
        %1703 = vmatprep.subr.mxu0 0.0
        %1704 = vmatpush1.xpose.msra.mxu0 0.0
        %1705 = vmatprep.subr.mxu0 0.0
        %1706 = vmatpush1.xpose.msra.mxu0 0.0
        %1707 = vmatprep.subr.mxu0 0.0
        %1708 = vmatpush1.xpose.msra.mxu0 0.0
        %1709 = vmatprep.mubr.f32.mxu0 0.0
        %1710 = vmatmul.mubr.f32.gmra.mrb[0].mxu0 %v1640
        %v1711 = vpop.f32.mrb[0].mxu0
        %v1712 = vadd.f32 0.0, %v1711
        %v1713 = vpop.f32.mrb[0].mxu0
        %1714 = vdwg.mxu0
        %v1716 = vsel %vm1638, %v987, 0
        %v1719 = vsel %vm1638, %v1171, 0
        %1721 = vmatprep.subr.mxu0 0.0
        %1722 = vmatpush1.xpose.msra.mxu0 %v1719
        %1723 = vmatprep.subr.mxu0 0.0
        %1724 = vmatpush1.xpose.msra.mxu0 0.0
        %1725 = vmatprep.subr.mxu0 0.0
        %1726 = vmatpush1.xpose.msra.mxu0 0.0
        %1727 = vmatprep.subr.mxu0 0.0
        %1728 = vmatpush1.xpose.msra.mxu0 0.0
        %1729 = vmatprep.subr.mxu0 0.0
        %1730 = vmatpush1.xpose.msra.mxu0 0.0
        %1731 = vmatprep.subr.mxu0 0.0
        %1732 = vmatpush1.xpose.msra.mxu0 0.0
        %1733 = vmatprep.subr.mxu0 0.0
        %1734 = vmatpush1.xpose.msra.mxu0 0.0
        %1735 = vmatprep.subr.mxu0 0.0
        %1736 = vmatpush1.xpose.msra.mxu0 0.0
        %1737 = vmatprep.subr.mxu0 0.0
        %1738 = vmatpush1.xpose.msra.mxu0 0.0
        %1739 = vmatprep.subr.mxu0 0.0
        %1740 = vmatpush1.xpose.msra.mxu0 0.0
        %1741 = vmatprep.subr.mxu0 0.0
        %1742 = vmatpush1.xpose.msra.mxu0 0.0
        %1743 = vmatprep.subr.mxu0 0.0
        %1744 = vmatpush1.xpose.msra.mxu0 0.0
        %1745 = vmatprep.subr.mxu0 0.0
        %1746 = vmatpush1.xpose.msra.mxu0 0.0
        %1747 = vmatprep.subr.mxu0 0.0
        %1748 = vmatpush1.xpose.msra.mxu0 0.0
        %1749 = vmatprep.subr.mxu0 0.0
        %1750 = vmatpush1.xpose.msra.mxu0 0.0
        %1751 = vmatprep.subr.mxu0 0.0
        %1752 = vmatpush1.xpose.msra.mxu0 0.0
        %1753 = vmatprep.subr.mxu0 0.0
        %1754 = vmatpush1.xpose.msra.mxu0 0.0
        %1755 = vmatprep.subr.mxu0 0.0
        %1756 = vmatpush1.xpose.msra.mxu0 0.0
        %1757 = vmatprep.subr.mxu0 0.0
        %1758 = vmatpush1.xpose.msra.mxu0 0.0
        %1759 = vmatprep.subr.mxu0 0.0
        %1760 = vmatpush1.xpose.msra.mxu0 0.0
        %1761 = vmatprep.subr.mxu0 0.0
        %1762 = vmatpush1.xpose.msra.mxu0 0.0
        %1763 = vmatprep.subr.mxu0 0.0
        %1764 = vmatpush1.xpose.msra.mxu0 0.0
        %1765 = vmatprep.subr.mxu0 0.0
        %1766 = vmatpush1.xpose.msra.mxu0 0.0
        %1767 = vmatprep.subr.mxu0 0.0
        %1768 = vmatpush1.xpose.msra.mxu0 0.0
        %1769 = vmatprep.subr.mxu0 0.0
        %1770 = vmatpush1.xpose.msra.mxu0 0.0
        %1771 = vmatprep.subr.mxu0 0.0
        %1772 = vmatpush1.xpose.msra.mxu0 0.0
        %1773 = vmatprep.subr.mxu0 0.0
        %1774 = vmatpush1.xpose.msra.mxu0 0.0
        %1775 = vmatprep.subr.mxu0 0.0
        %1776 = vmatpush1.xpose.msra.mxu0 0.0
        %1777 = vmatprep.subr.mxu0 0.0
        %1778 = vmatpush1.xpose.msra.mxu0 0.0
        %1779 = vmatprep.subr.mxu0 0.0
        %1780 = vmatpush1.xpose.msra.mxu0 0.0
        %1781 = vmatprep.subr.mxu0 0.0
        %1782 = vmatpush1.xpose.msra.mxu0 0.0
        %1783 = vmatprep.subr.mxu0 0.0
        %1784 = vmatpush1.xpose.msra.mxu0 0.0
        %1785 = vmatprep.mubr.f32.mxu0 0.0
        %1786 = vmatmul.mubr.f32.gmra.mrb[0].mxu0 %v1716
        %v1787 = vpop.f32.mrb[0].mxu0
        %v1788 = vadd.f32 0.0, %v1787
        %v1789 = vpop.f32.mrb[0].mxu0
        %1790 = vdwg.mxu0
        %v1792 = vsel %vm1638, %v988, 0
        %v1795 = vsel %vm1638, %v1241, 0
        %1797 = vmatprep.subr.mxu0 0.0
        %1798 = vmatpush1.xpose.msra.mxu0 %v1795
        %1799 = vmatprep.subr.mxu0 0.0
        %1800 = vmatpush1.xpose.msra.mxu0 0.0
        %1801 = vmatprep.subr.mxu0 0.0
        %1802 = vmatpush1.xpose.msra.mxu0 0.0
        %1803 = vmatprep.subr.mxu0 0.0
        %1804 = vmatpush1.xpose.msra.mxu0 0.0
        %1805 = vmatprep.subr.mxu0 0.0
        %1806 = vmatpush1.xpose.msra.mxu0 0.0
        %1807 = vmatprep.subr.mxu0 0.0
        %1808 = vmatpush1.xpose.msra.mxu0 0.0
        %1809 = vmatprep.subr.mxu0 0.0
        %1810 = vmatpush1.xpose.msra.mxu0 0.0
        %1811 = vmatprep.subr.mxu0 0.0
        %1812 = vmatpush1.xpose.msra.mxu0 0.0
        %1813 = vmatprep.subr.mxu0 0.0
        %1814 = vmatpush1.xpose.msra.mxu0 0.0
        %1815 = vmatprep.subr.mxu0 0.0
        %1816 = vmatpush1.xpose.msra.mxu0 0.0
        %1817 = vmatprep.subr.mxu0 0.0
        %1818 = vmatpush1.xpose.msra.mxu0 0.0
        %1819 = vmatprep.subr.mxu0 0.0
        %1820 = vmatpush1.xpose.msra.mxu0 0.0
        %1821 = vmatprep.subr.mxu0 0.0
        %1822 = vmatpush1.xpose.msra.mxu0 0.0
        %1823 = vmatprep.subr.mxu0 0.0
        %1824 = vmatpush1.xpose.msra.mxu0 0.0
        %1825 = vmatprep.subr.mxu0 0.0
        %1826 = vmatpush1.xpose.msra.mxu0 0.0
        %1827 = vmatprep.subr.mxu0 0.0
        %1828 = vmatpush1.xpose.msra.mxu0 0.0
        %1829 = vmatprep.subr.mxu0 0.0
        %1830 = vmatpush1.xpose.msra.mxu0 0.0
        %1831 = vmatprep.subr.mxu0 0.0
        %1832 = vmatpush1.xpose.msra.mxu0 0.0
        %1833 = vmatprep.subr.mxu0 0.0
        %1834 = vmatpush1.xpose.msra.mxu0 0.0
        %1835 = vmatprep.subr.mxu0 0.0
        %1836 = vmatpush1.xpose.msra.mxu0 0.0
        %1837 = vmatprep.subr.mxu0 0.0
        %1838 = vmatpush1.xpose.msra.mxu0 0.0
        %1839 = vmatprep.subr.mxu0 0.0
        %1840 = vmatpush1.xpose.msra.mxu0 0.0
        %1841 = vmatprep.subr.mxu0 0.0
        %1842 = vmatpush1.xpose.msra.mxu0 0.0
        %1843 = vmatprep.subr.mxu0 0.0
        %1844 = vmatpush1.xpose.msra.mxu0 0.0
        %1845 = vmatprep.subr.mxu0 0.0
        %1846 = vmatpush1.xpose.msra.mxu0 0.0
        %1847 = vmatprep.subr.mxu0 0.0
        %1848 = vmatpush1.xpose.msra.mxu0 0.0
        %1849 = vmatprep.subr.mxu0 0.0
        %1850 = vmatpush1.xpose.msra.mxu0 0.0
        %1851 = vmatprep.subr.mxu0 0.0
        %1852 = vmatpush1.xpose.msra.mxu0 0.0
        %1853 = vmatprep.subr.mxu0 0.0
        %1854 = vmatpush1.xpose.msra.mxu0 0.0
        %1855 = vmatprep.subr.mxu0 0.0
        %1856 = vmatpush1.xpose.msra.mxu0 0.0
        %1857 = vmatprep.subr.mxu0 0.0
        %1858 = vmatpush1.xpose.msra.mxu0 0.0
        %1859 = vmatprep.subr.mxu0 0.0
        %1860 = vmatpush1.xpose.msra.mxu0 0.0
        %1861 = vmatprep.mubr.f32.mxu0 0.0
        %1862 = vmatmul.mubr.f32.gmra.mrb[0].mxu0 %v1792
        %v1863 = vpop.f32.mrb[0].mxu0
        %v1864 = vadd.f32 0.0, %v1863
        %v1865 = vpop.f32.mrb[0].mxu0
        %1866 = vdwg.mxu0
        %v1868 = vsel %vm1638, %v989, 0
        %v1871 = vsel %vm1638, %v1311, 0
        %1873 = vmatprep.subr.mxu0 0.0
        %1874 = vmatpush1.xpose.msra.mxu0 %v1871
        %1875 = vmatprep.subr.mxu0 0.0
        %1876 = vmatpush1.xpose.msra.mxu0 0.0
        %1877 = vmatprep.subr.mxu0 0.0
        %1878 = vmatpush1.xpose.msra.mxu0 0.0
        %1879 = vmatprep.subr.mxu0 0.0
        %1880 = vmatpush1.xpose.msra.mxu0 0.0
        %1881 = vmatprep.subr.mxu0 0.0
        %1882 = vmatpush1.xpose.msra.mxu0 0.0
        %1883 = vmatprep.subr.mxu0 0.0
        %1884 = vmatpush1.xpose.msra.mxu0 0.0
        %1885 = vmatprep.subr.mxu0 0.0
        %1886 = vmatpush1.xpose.msra.mxu0 0.0
        %1887 = vmatprep.subr.mxu0 0.0
        %1888 = vmatpush1.xpose.msra.mxu0 0.0
        %1889 = vmatprep.subr.mxu0 0.0
        %1890 = vmatpush1.xpose.msra.mxu0 0.0
        %1891 = vmatprep.subr.mxu0 0.0
        %1892 = vmatpush1.xpose.msra.mxu0 0.0
        %1893 = vmatprep.subr.mxu0 0.0
        %1894 = vmatpush1.xpose.msra.mxu0 0.0
        %1895 = vmatprep.subr.mxu0 0.0
        %1896 = vmatpush1.xpose.msra.mxu0 0.0
        %1897 = vmatprep.subr.mxu0 0.0
        %1898 = vmatpush1.xpose.msra.mxu0 0.0
        %1899 = vmatprep.subr.mxu0 0.0
        %1900 = vmatpush1.xpose.msra.mxu0 0.0
        %1901 = vmatprep.subr.mxu0 0.0
        %1902 = vmatpush1.xpose.msra.mxu0 0.0
        %1903 = vmatprep.subr.mxu0 0.0
        %1904 = vmatpush1.xpose.msra.mxu0 0.0
        %1905 = vmatprep.subr.mxu0 0.0
        %1906 = vmatpush1.xpose.msra.mxu0 0.0
        %1907 = vmatprep.subr.mxu0 0.0
        %1908 = vmatpush1.xpose.msra.mxu0 0.0
        %1909 = vmatprep.subr.mxu0 0.0
        %1910 = vmatpush1.xpose.msra.mxu0 0.0
        %1911 = vmatprep.subr.mxu0 0.0
        %1912 = vmatpush1.xpose.msra.mxu0 0.0
        %1913 = vmatprep.subr.mxu0 0.0
        %1914 = vmatpush1.xpose.msra.mxu0 0.0
        %1915 = vmatprep.subr.mxu0 0.0
        %1916 = vmatpush1.xpose.msra.mxu0 0.0
        %1917 = vmatprep.subr.mxu0 0.0
        %1918 = vmatpush1.xpose.msra.mxu0 0.0
        %1919 = vmatprep.subr.mxu0 0.0
        %1920 = vmatpush1.xpose.msra.mxu0 0.0
        %1921 = vmatprep.subr.mxu0 0.0
        %1922 = vmatpush1.xpose.msra.mxu0 0.0
        %1923 = vmatprep.subr.mxu0 0.0
        %1924 = vmatpush1.xpose.msra.mxu0 0.0
        %1925 = vmatprep.subr.mxu0 0.0
        %1926 = vmatpush1.xpose.msra.mxu0 0.0
        %1927 = vmatprep.subr.mxu0 0.0
        %1928 = vmatpush1.xpose.msra.mxu0 0.0
        %1929 = vmatprep.subr.mxu0 0.0
        %1930 = vmatpush1.xpose.msra.mxu0 0.0
        %1931 = vmatprep.subr.mxu0 0.0
        %1932 = vmatpush1.xpose.msra.mxu0 0.0
        %1933 = vmatprep.subr.mxu0 0.0
        %1934 = vmatpush1.xpose.msra.mxu0 0.0
        %1935 = vmatprep.subr.mxu0 0.0
        %1936 = vmatpush1.xpose.msra.mxu0 0.0
        %1937 = vmatprep.mubr.f32.mxu0 0.0
        %1938 = vmatmul.mubr.f32.gmra.mrb[0].mxu0 %v1868
        %v1939 = vpop.f32.mrb[0].mxu0
        %v1940 = vadd.f32 0.0, %v1939
        %v1941 = vpop.f32.mrb[0].mxu0
        %1942 = vdwg.mxu0
        %v1943 = vsel %vm1638, %v1712, -inf
        %1944 = vmax.xlane.f32.xlu0 %v1943
        %v1945 = vpop.xlane.xlu0 %1944
        %v1946 = vsel %vm1638, %v1788, -inf
        %1947 = vmax.xlane.f32.xlu0 %v1946
        %v1948 = vpop.xlane.xlu0 %1947
        %v1949 = vsel %vm1638, %v1864, -inf
        %1950 = vmax.xlane.f32.xlu0 %v1949
        %v1951 = vpop.xlane.xlu0 %1950
        %v1952 = vsel %vm1638, %v1940, -inf
        %1953 = vmax.xlane.f32.xlu0 %v1952
        %v1954 = vpop.xlane.xlu0 %1953
        %v1955 = vsub.f32 %v1712, %v1945
        %v1956 = vsub.f32 %v1788, %v1948
        %v1957 = vsub.f32 %v1864, %v1951
        %v1958 = vsub.f32 %v1940, %v1954
        %v1959 = vmul.f32 %v1955, 1.442695
        %v1960 = vpow.pop %v1959
        %v1961 = vmul.f32 %v1956, 1.442695
        %v1962 = vpow.pop %v1961
        %v1963 = vmul.f32 %v1957, 1.442695
        %v1964 = vpow.pop %v1963
        %v1965 = vmul.f32 %v1958, 1.442695
        %v1966 = vpow.pop %v1965
        %v1967 = vsel %vm1638, %v1960, 0.0
        %1968 = vadd.xlane.f32.xlu0 %v1967
        %v1969 = vpop.xlane.xlu0 %1968
        %v1970 = vsel %vm1638, %v1962, 0.0
        %1971 = vadd.xlane.f32.xlu0 %v1970
        %v1972 = vpop.xlane.xlu0 %1971
        %v1973 = vsel %vm1638, %v1964, 0.0
        %1974 = vadd.xlane.f32.xlu0 %v1973
        %v1975 = vpop.xlane.xlu0 %1974
        %v1976 = vsel %vm1638, %v1966, 0.0
        %1977 = vadd.xlane.f32.xlu0 %v1976
        %v1978 = vpop.xlane.xlu0 %1977
        %v1979 = vrcp.pop %v1969
        %v1980 = vrcp.pop %v1972
        %v1981 = vrcp.pop %v1975
        %v1982 = vrcp.pop %v1978
        %v1983 = vmul.f32 %v1960, %v1979
        %v1984 = vmul.f32 %v1962, %v1980
        %v1985 = vmul.f32 %v1964, %v1981
        %v1986 = vmul.f32 %v1966, %v1982
        %v1988 = vsel %vm1638, %v1983, 0
        %1990 = vmatprep.subr.mxu0 0.0
        %1991 = vmatpush1.msra.mxu0 %v1425
        %1992 = vmatprep.subr.mxu0 0.0
        %1993 = vmatpush1.msra.mxu0 0.0
        %1994 = vmatprep.subr.mxu0 0.0
        %1995 = vmatpush1.msra.mxu0 0.0
        %1996 = vmatprep.subr.mxu0 0.0
        %1997 = vmatpush1.msra.mxu0 0.0
        %1998 = vmatprep.subr.mxu0 0.0
        %1999 = vmatpush1.msra.mxu0 0.0
        %2000 = vmatprep.subr.mxu0 0.0
        %2001 = vmatpush1.msra.mxu0 0.0
        %2002 = vmatprep.subr.mxu0 0.0
        %2003 = vmatpush1.msra.mxu0 0.0
        %2004 = vmatprep.subr.mxu0 0.0
        %2005 = vmatpush1.msra.mxu0 0.0
        %2006 = vmatprep.subr.mxu0 0.0
        %2007 = vmatpush1.msra.mxu0 0.0
        %2008 = vmatprep.subr.mxu0 0.0
        %2009 = vmatpush1.msra.mxu0 0.0
        %2010 = vmatprep.subr.mxu0 0.0
        %2011 = vmatpush1.msra.mxu0 0.0
        %2012 = vmatprep.subr.mxu0 0.0
        %2013 = vmatpush1.msra.mxu0 0.0
        %2014 = vmatprep.subr.mxu0 0.0
        %2015 = vmatpush1.msra.mxu0 0.0
        %2016 = vmatprep.subr.mxu0 0.0
        %2017 = vmatpush1.msra.mxu0 0.0
        %2018 = vmatprep.subr.mxu0 0.0
        %2019 = vmatpush1.msra.mxu0 0.0
        %2020 = vmatprep.subr.mxu0 0.0
        %2021 = vmatpush1.msra.mxu0 0.0
        %2022 = vmatprep.subr.mxu0 0.0
        %2023 = vmatpush1.msra.mxu0 0.0
        %2024 = vmatprep.subr.mxu0 0.0
        %2025 = vmatpush1.msra.mxu0 0.0
        %2026 = vmatprep.subr.mxu0 0.0
        %2027 = vmatpush1.msra.mxu0 0.0
        %2028 = vmatprep.subr.mxu0 0.0
        %2029 = vmatpush1.msra.mxu0 0.0
        %2030 = vmatprep.subr.mxu0 0.0
        %2031 = vmatpush1.msra.mxu0 0.0
        %2032 = vmatprep.subr.mxu0 0.0
        %2033 = vmatpush1.msra.mxu0 0.0
        %2034 = vmatprep.subr.mxu0 0.0
        %2035 = vmatpush1.msra.mxu0 0.0
        %2036 = vmatprep.subr.mxu0 0.0
        %2037 = vmatpush1.msra.mxu0 0.0
        %2038 = vmatprep.subr.mxu0 0.0
        %2039 = vmatpush1.msra.mxu0 0.0
        %2040 = vmatprep.subr.mxu0 0.0
        %2041 = vmatpush1.msra.mxu0 0.0
        %2042 = vmatprep.subr.mxu0 0.0
        %2043 = vmatpush1.msra.mxu0 0.0
        %2044 = vmatprep.subr.mxu0 0.0
        %2045 = vmatpush1.msra.mxu0 0.0
        %2046 = vmatprep.subr.mxu0 0.0
        %2047 = vmatpush1.msra.mxu0 0.0
        %2048 = vmatprep.subr.mxu0 0.0
        %2049 = vmatpush1.msra.mxu0 0.0
        %2050 = vmatprep.subr.mxu0 0.0
        %2051 = vmatpush1.msra.mxu0 0.0
        %2052 = vmatprep.subr.mxu0 0.0
        %2053 = vmatpush1.msra.mxu0 0.0
        %2054 = vmatprep.mubr.f32.mxu0 0.0
        %2055 = vmatmul.mubr.f32.gmra.mrb[0].mxu0 %v1988
        %v2056 = vpop.f32.mrb[0].mxu0
        %v2057 = vadd.f32 0.0, %v2056
        %v2058 = vpop.f32.mrb[0].mxu0
        %2059 = vdwg.mxu0
        %v2061 = vsel %vm1638, %v1984, 0
        %2063 = vmatprep.subr.mxu0 0.0
        %2064 = vmatpush1.msra.mxu0 %v1495
        %2065 = vmatprep.subr.mxu0 0.0
        %2066 = vmatpush1.msra.mxu0 0.0
        %2067 = vmatprep.subr.mxu0 0.0
        %2068 = vmatpush1.msra.mxu0 0.0
        %2069 = vmatprep.subr.mxu0 0.0
        %2070 = vmatpush1.msra.mxu0 0.0
        %2071 = vmatprep.subr.mxu0 0.0
        %2072 = vmatpush1.msra.mxu0 0.0
        %2073 = vmatprep.subr.mxu0 0.0
        %2074 = vmatpush1.msra.mxu0 0.0
        %2075 = vmatprep.subr.mxu0 0.0
        %2076 = vmatpush1.msra.mxu0 0.0
        %2077 = vmatprep.subr.mxu0 0.0
        %2078 = vmatpush1.msra.mxu0 0.0
        %2079 = vmatprep.subr.mxu0 0.0
        %2080 = vmatpush1.msra.mxu0 0.0
        %2081 = vmatprep.subr.mxu0 0.0
        %2082 = vmatpush1.msra.mxu0 0.0
        %2083 = vmatprep.subr.mxu0 0.0
        %2084 = vmatpush1.msra.mxu0 0.0
        %2085 = vmatprep.subr.mxu0 0.0
        %2086 = vmatpush1.msra.mxu0 0.0
        %2087 = vmatprep.subr.mxu0 0.0
        %2088 = vmatpush1.msra.mxu0 0.0
        %2089 = vmatprep.subr.mxu0 0.0
        %2090 = vmatpush1.msra.mxu0 0.0
        %2091 = vmatprep.subr.mxu0 0.0
        %2092 = vmatpush1.msra.mxu0 0.0
        %2093 = vmatprep.subr.mxu0 0.0
        %2094 = vmatpush1.msra.mxu0 0.0
        %2095 = vmatprep.subr.mxu0 0.0
        %2096 = vmatpush1.msra.mxu0 0.0
        %2097 = vmatprep.subr.mxu0 0.0
        %2098 = vmatpush1.msra.mxu0 0.0
        %2099 = vmatprep.subr.mxu0 0.0
        %2100 = vmatpush1.msra.mxu0 0.0
        %2101 = vmatprep.subr.mxu0 0.0
        %2102 = vmatpush1.msra.mxu0 0.0
        %2103 = vmatprep.subr.mxu0 0.0
        %2104 = vmatpush1.msra.mxu0 0.0
        %2105 = vmatprep.subr.mxu0 0.0
        %2106 = vmatpush1.msra.mxu0 0.0
        %2107 = vmatprep.subr.mxu0 0.0
        %2108 = vmatpush1.msra.mxu0 0.0
        %2109 = vmatprep.subr.mxu0 0.0
        %2110 = vmatpush1.msra.mxu0 0.0
        %2111 = vmatprep.subr.mxu0 0.0
        %2112 = vmatpush1.msra.mxu0 0.0
        %2113 = vmatprep.subr.mxu0 0.0
        %2114 = vmatpush1.msra.mxu0 0.0
        %2115 = vmatprep.subr.mxu0 0.0
        %2116 = vmatpush1.msra.mxu0 0.0
        %2117 = vmatprep.subr.mxu0 0.0
        %2118 = vmatpush1.msra.mxu0 0.0
        %2119 = vmatprep.subr.mxu0 0.0
        %2120 = vmatpush1.msra.mxu0 0.0
        %2121 = vmatprep.subr.mxu0 0.0
        %2122 = vmatpush1.msra.mxu0 0.0
        %2123 = vmatprep.subr.mxu0 0.0
        %2124 = vmatpush1.msra.mxu0 0.0
        %2125 = vmatprep.subr.mxu0 0.0
        %2126 = vmatpush1.msra.mxu0 0.0
        %2127 = vmatprep.mubr.f32.mxu0 0.0
        %2128 = vmatmul.mubr.f32.gmra.mrb[0].mxu0 %v2061
        %v2129 = vpop.f32.mrb[0].mxu0
        %v2130 = vadd.f32 0.0, %v2129
        %v2131 = vpop.f32.mrb[0].mxu0
        %2132 = vdwg.mxu0
        %v2134 = vsel %vm1638, %v1985, 0
        %2136 = vmatprep.subr.mxu0 0.0
        %2137 = vmatpush1.msra.mxu0 %v1565
        %2138 = vmatprep.subr.mxu0 0.0
        %2139 = vmatpush1.msra.mxu0 0.0
        %2140 = vmatprep.subr.mxu0 0.0
        %2141 = vmatpush1.msra.mxu0 0.0
        %2142 = vmatprep.subr.mxu0 0.0
        %2143 = vmatpush1.msra.mxu0 0.0
        %2144 = vmatprep.subr.mxu0 0.0
        %2145 = vmatpush1.msra.mxu0 0.0
        %2146 = vmatprep.subr.mxu0 0.0
        %2147 = vmatpush1.msra.mxu0 0.0
        %2148 = vmatprep.subr.mxu0 0.0
        %2149 = vmatpush1.msra.mxu0 0.0
        %2150 = vmatprep.subr.mxu0 0.0
        %2151 = vmatpush1.msra.mxu0 0.0
        %2152 = vmatprep.subr.mxu0 0.0
        %2153 = vmatpush1.msra.mxu0 0.0
        %2154 = vmatprep.subr.mxu0 0.0
        %2155 = vmatpush1.msra.mxu0 0.0
        %2156 = vmatprep.subr.mxu0 0.0
        %2157 = vmatpush1.msra.mxu0 0.0
        %2158 = vmatprep.subr.mxu0 0.0
        %2159 = vmatpush1.msra.mxu0 0.0
        %2160 = vmatprep.subr.mxu0 0.0
        %2161 = vmatpush1.msra.mxu0 0.0
        %2162 = vmatprep.subr.mxu0 0.0
        %2163 = vmatpush1.msra.mxu0 0.0
        %2164 = vmatprep.subr.mxu0 0.0
        %2165 = vmatpush1.msra.mxu0 0.0
        %2166 = vmatprep.subr.mxu0 0.0
        %2167 = vmatpush1.msra.mxu0 0.0
        %2168 = vmatprep.subr.mxu0 0.0
        %2169 = vmatpush1.msra.mxu0 0.0
        %2170 = vmatprep.subr.mxu0 0.0
        %2171 = vmatpush1.msra.mxu0 0.0
        %2172 = vmatprep.subr.mxu0 0.0
        %2173 = vmatpush1.msra.mxu0 0.0
        %2174 = vmatprep.subr.mxu0 0.0
        %2175 = vmatpush1.msra.mxu0 0.0
        %2176 = vmatprep.subr.mxu0 0.0
        %2177 = vmatpush1.msra.mxu0 0.0
        %2178 = vmatprep.subr.mxu0 0.0
        %2179 = vmatpush1.msra.mxu0 0.0
        %2180 = vmatprep.subr.mxu0 0.0
        %2181 = vmatpush1.msra.mxu0 0.0
        %2182 = vmatprep.subr.mxu0 0.0
        %2183 = vmatpush1.msra.mxu0 0.0
        %2184 = vmatprep.subr.mxu0 0.0
        %2185 = vmatpush1.msra.mxu0 0.0
        %2186 = vmatprep.subr.mxu0 0.0
        %2187 = vmatpush1.msra.mxu0 0.0
        %2188 = vmatprep.subr.mxu0 0.0
        %2189 = vmatpush1.msra.mxu0 0.0
        %2190 = vmatprep.subr.mxu0 0.0
        %2191 = vmatpush1.msra.mxu0 0.0
        %2192 = vmatprep.subr.mxu0 0.0
        %2193 = vmatpush1.msra.mxu0 0.0
        %2194 = vmatprep.subr.mxu0 0.0
        %2195 = vmatpush1.msra.mxu0 0.0
        %2196 = vmatprep.subr.mxu0 0.0
        %2197 = vmatpush1.msra.mxu0 0.0
        %2198 = vmatprep.subr.mxu0 0.0
        %2199 = vmatpush1.msra.mxu0 0.0
        %2200 = vmatprep.mubr.f32.mxu0 0.0
        %2201 = vmatmul.mubr.f32.gmra.mrb[0].mxu0 %v2134
        %v2202 = vpop.f32.mrb[0].mxu0
        %v2203 = vadd.f32 0.0, %v2202
        %v2204 = vpop.f32.mrb[0].mxu0
        %2205 = vdwg.mxu0
        %v2207 = vsel %vm1638, %v1986, 0
        %2209 = vmatprep.subr.mxu0 0.0
        %2210 = vmatpush1.msra.mxu0 %v1635
        %2211 = vmatprep.subr.mxu0 0.0
        %2212 = vmatpush1.msra.mxu0 0.0
        %2213 = vmatprep.subr.mxu0 0.0
        %2214 = vmatpush1.msra.mxu0 0.0
        %2215 = vmatprep.subr.mxu0 0.0
        %2216 = vmatpush1.msra.mxu0 0.0
        %2217 = vmatprep.subr.mxu0 0.0
        %2218 = vmatpush1.msra.mxu0 0.0
        %2219 = vmatprep.subr.mxu0 0.0
        %2220 = vmatpush1.msra.mxu0 0.0
        %2221 = vmatprep.subr.mxu0 0.0
        %2222 = vmatpush1.msra.mxu0 0.0
        %2223 = vmatprep.subr.mxu0 0.0
        %2224 = vmatpush1.msra.mxu0 0.0
        %2225 = vmatprep.subr.mxu0 0.0
        %2226 = vmatpush1.msra.mxu0 0.0
        %2227 = vmatprep.subr.mxu0 0.0
        %2228 = vmatpush1.msra.mxu0 0.0
        %2229 = vmatprep.subr.mxu0 0.0
        %2230 = vmatpush1.msra.mxu0 0.0
        %2231 = vmatprep.subr.mxu0 0.0
        %2232 = vmatpush1.msra.mxu0 0.0
        %2233 = vmatprep.subr.mxu0 0.0
        %2234 = vmatpush1.msra.mxu0 0.0
        %2235 = vmatprep.subr.mxu0 0.0
        %2236 = vmatpush1.msra.mxu0 0.0
        %2237 = vmatprep.subr.mxu0 0.0
        %2238 = vmatpush1.msra.mxu0 0.0
        %2239 = vmatprep.subr.mxu0 0.0
        %2240 = vmatpush1.msra.mxu0 0.0
        %2241 = vmatprep.subr.mxu0 0.0
        %2242 = vmatpush1.msra.mxu0 0.0
        %2243 = vmatprep.subr.mxu0 0.0
        %2244 = vmatpush1.msra.mxu0 0.0
        %2245 = vmatprep.subr.mxu0 0.0
        %2246 = vmatpush1.msra.mxu0 0.0
        %2247 = vmatprep.subr.mxu0 0.0
        %2248 = vmatpush1.msra.mxu0 0.0
        %2249 = vmatprep.subr.mxu0 0.0
        %2250 = vmatpush1.msra.mxu0 0.0
        %2251 = vmatprep.subr.mxu0 0.0
        %2252 = vmatpush1.msra.mxu0 0.0
        %2253 = vmatprep.subr.mxu0 0.0
        %2254 = vmatpush1.msra.mxu0 0.0
        %2255 = vmatprep.subr.mxu0 0.0
        %2256 = vmatpush1.msra.mxu0 0.0
        %2257 = vmatprep.subr.mxu0 0.0
        %2258 = vmatpush1.msra.mxu0 0.0
        %2259 = vmatprep.subr.mxu0 0.0
        %2260 = vmatpush1.msra.mxu0 0.0
        %2261 = vmatprep.subr.mxu0 0.0
        %2262 = vmatpush1.msra.mxu0 0.0
        %2263 = vmatprep.subr.mxu0 0.0
        %2264 = vmatpush1.msra.mxu0 0.0
        %2265 = vmatprep.subr.mxu0 0.0
        %2266 = vmatpush1.msra.mxu0 0.0
        %2267 = vmatprep.subr.mxu0 0.0
        %2268 = vmatpush1.msra.mxu0 0.0
        %2269 = vmatprep.subr.mxu0 0.0
        %2270 = vmatpush1.msra.mxu0 0.0
        %2271 = vmatprep.subr.mxu0 0.0
        %2272 = vmatpush1.msra.mxu0 0.0
        %2273 = vmatprep.mubr.f32.mxu0 0.0
        %2274 = vmatmul.mubr.f32.gmra.mrb[0].mxu0 %v2207
        %v2275 = vpop.f32.mrb[0].mxu0
        %v2276 = vadd.f32 0.0, %v2275
        %v2277 = vpop.f32.mrb[0].mxu0
        %2278 = vdwg.mxu0
        %v2279 = vld [vmem:[%s8] sm:$0xff]
        %v2280 = vld [vmem:[%s8 + $0x8] sm:$0xff]
        %v2281 = vld [vmem:[%s8 + $0x10] sm:$0xff]
        %v2282 = vld [vmem:[%s8 + $0x18] sm:$0xff]
        %v2284 = vsel %vm1638, %v2057, 0
        %2286 = vmatprep.subr.mxu0 0.0
        %2287 = vmatpush1.msra.mxu0 %v2279
        %2288 = vmatprep.subr.mxu0 0.0
        %2289 = vmatpush1.msra.mxu0 0.0
        %2290 = vmatprep.subr.mxu0 0.0
        %2291 = vmatpush1.msra.mxu0 0.0
        %2292 = vmatprep.subr.mxu0 0.0
        %2293 = vmatpush1.msra.mxu0 0.0
        %2294 = vmatprep.subr.mxu0 0.0
        %2295 = vmatpush1.msra.mxu0 0.0
        %2296 = vmatprep.subr.mxu0 0.0
        %2297 = vmatpush1.msra.mxu0 0.0
        %2298 = vmatprep.subr.mxu0 0.0
        %2299 = vmatpush1.msra.mxu0 0.0
        %2300 = vmatprep.subr.mxu0 0.0
        %2301 = vmatpush1.msra.mxu0 0.0
        %2302 = vmatprep.subr.mxu0 0.0
        %2303 = vmatpush1.msra.mxu0 0.0
        %2304 = vmatprep.subr.mxu0 0.0
        %2305 = vmatpush1.msra.mxu0 0.0
        %2306 = vmatprep.subr.mxu0 0.0
        %2307 = vmatpush1.msra.mxu0 0.0
        %2308 = vmatprep.subr.mxu0 0.0
        %2309 = vmatpush1.msra.mxu0 0.0
        %2310 = vmatprep.subr.mxu0 0.0
        %2311 = vmatpush1.msra.mxu0 0.0
        %2312 = vmatprep.subr.mxu0 0.0
        %2313 = vmatpush1.msra.mxu0 0.0
        %2314 = vmatprep.subr.mxu0 0.0
        %2315 = vmatpush1.msra.mxu0 0.0
        %2316 = vmatprep.subr.mxu0 0.0
        %2317 = vmatpush1.msra.mxu0 0.0
        %2318 = vmatprep.subr.mxu0 0.0
        %2319 = vmatpush1.msra.mxu0 0.0
        %2320 = vmatprep.subr.mxu0 0.0
        %2321 = vmatpush1.msra.mxu0 0.0
        %2322 = vmatprep.subr.mxu0 0.0
        %2323 = vmatpush1.msra.mxu0 0.0
        %2324 = vmatprep.subr.mxu0 0.0
        %2325 = vmatpush1.msra.mxu0 0.0
        %2326 = vmatprep.subr.mxu0 0.0
        %2327 = vmatpush1.msra.mxu0 0.0
        %2328 = vmatprep.subr.mxu0 0.0
        %2329 = vmatpush1.msra.mxu0 0.0
        %2330 = vmatprep.subr.mxu0 0.0
        %2331 = vmatpush1.msra.mxu0 0.0
        %2332 = vmatprep.subr.mxu0 0.0
        %2333 = vmatpush1.msra.mxu0 0.0
        %2334 = vmatprep.subr.mxu0 0.0
        %2335 = vmatpush1.msra.mxu0 0.0
        %2336 = vmatprep.subr.mxu0 0.0
        %2337 = vmatpush1.msra.mxu0 0.0
        %2338 = vmatprep.subr.mxu0 0.0
        %2339 = vmatpush1.msra.mxu0 0.0
        %2340 = vmatprep.subr.mxu0 0.0
        %2341 = vmatpush1.msra.mxu0 0.0
        %2342 = vmatprep.subr.mxu0 0.0
        %2343 = vmatpush1.msra.mxu0 0.0
        %2344 = vmatprep.subr.mxu0 0.0
        %2345 = vmatpush1.msra.mxu0 0.0
        %2346 = vmatprep.subr.mxu0 0.0
        %2347 = vmatpush1.msra.mxu0 0.0
        %2348 = vmatprep.subr.mxu0 0.0
        %2349 = vmatpush1.msra.mxu0 0.0
        %2350 = vmatprep.mubr.f32.mxu0 0.0
        %2351 = vmatmul.mubr.f32.gmra.mrb[0].mxu0 %v2284
        %v2352 = vpop.f32.mrb[0].mxu0
        %v2353 = vadd.f32 0.0, %v2352
        %v2354 = vpop.f32.mrb[0].mxu0
        %2355 = vdwg.mxu0
        %v2357 = vsel %vm1638, %v2130, 0
        %2359 = vmatprep.subr.mxu0 0.0
        %2360 = vmatpush1.msra.mxu0 %v2280
        %2361 = vmatprep.subr.mxu0 0.0
        %2362 = vmatpush1.msra.mxu0 0.0
        %2363 = vmatprep.subr.mxu0 0.0
        %2364 = vmatpush1.msra.mxu0 0.0
        %2365 = vmatprep.subr.mxu0 0.0
        %2366 = vmatpush1.msra.mxu0 0.0
        %2367 = vmatprep.subr.mxu0 0.0
        %2368 = vmatpush1.msra.mxu0 0.0
        %2369 = vmatprep.subr.mxu0 0.0
        %2370 = vmatpush1.msra.mxu0 0.0
        %2371 = vmatprep.subr.mxu0 0.0
        %2372 = vmatpush1.msra.mxu0 0.0
        %2373 = vmatprep.subr.mxu0 0.0
        %2374 = vmatpush1.msra.mxu0 0.0
        %2375 = vmatprep.subr.mxu0 0.0
        %2376 = vmatpush1.msra.mxu0 0.0
        %2377 = vmatprep.subr.mxu0 0.0
        %2378 = vmatpush1.msra.mxu0 0.0
        %2379 = vmatprep.subr.mxu0 0.0
        %2380 = vmatpush1.msra.mxu0 0.0
        %2381 = vmatprep.subr.mxu0 0.0
        %2382 = vmatpush1.msra.mxu0 0.0
        %2383 = vmatprep.subr.mxu0 0.0
        %2384 = vmatpush1.msra.mxu0 0.0
        %2385 = vmatprep.subr.mxu0 0.0
        %2386 = vmatpush1.msra.mxu0 0.0
        %2387 = vmatprep.subr.mxu0 0.0
        %2388 = vmatpush1.msra.mxu0 0.0
        %2389 = vmatprep.subr.mxu0 0.0
        %2390 = vmatpush1.msra.mxu0 0.0
        %2391 = vmatprep.subr.mxu0 0.0
        %2392 = vmatpush1.msra.mxu0 0.0
        %2393 = vmatprep.subr.mxu0 0.0
        %2394 = vmatpush1.msra.mxu0 0.0
        %2395 = vmatprep.subr.mxu0 0.0
        %2396 = vmatpush1.msra.mxu0 0.0
        %2397 = vmatprep.subr.mxu0 0.0
        %2398 = vmatpush1.msra.mxu0 0.0
        %2399 = vmatprep.subr.mxu0 0.0
        %2400 = vmatpush1.msra.mxu0 0.0
        %2401 = vmatprep.subr.mxu0 0.0
        %2402 = vmatpush1.msra.mxu0 0.0
        %2403 = vmatprep.subr.mxu0 0.0
        %2404 = vmatpush1.msra.mxu0 0.0
        %2405 = vmatprep.subr.mxu0 0.0
        %2406 = vmatpush1.msra.mxu0 0.0
        %2407 = vmatprep.subr.mxu0 0.0
        %2408 = vmatpush1.msra.mxu0 0.0
        %2409 = vmatprep.subr.mxu0 0.0
        %2410 = vmatpush1.msra.mxu0 0.0
        %2411 = vmatprep.subr.mxu0 0.0
        %2412 = vmatpush1.msra.mxu0 0.0
        %2413 = vmatprep.subr.mxu0 0.0
        %2414 = vmatpush1.msra.mxu0 0.0
        %2415 = vmatprep.subr.mxu0 0.0
        %2416 = vmatpush1.msra.mxu0 0.0
        %2417 = vmatprep.subr.mxu0 0.0
        %2418 = vmatpush1.msra.mxu0 0.0
        %2419 = vmatprep.subr.mxu0 0.0
        %2420 = vmatpush1.msra.mxu0 0.0
        %2421 = vmatprep.subr.mxu0 0.0
        %2422 = vmatpush1.msra.mxu0 0.0
        %2423 = vmatprep.mubr.f32.mxu0 0.0
        %2424 = vmatmul.mubr.f32.gmra.mrb[0].mxu0 %v2357
        %v2425 = vpop.f32.mrb[0].mxu0
        %v2426 = vadd.f32 0.0, %v2425
        %v2427 = vpop.f32.mrb[0].mxu0
        %2428 = vdwg.mxu0
        %v2430 = vsel %vm1638, %v2203, 0
        %2432 = vmatprep.subr.mxu0 0.0
        %2433 = vmatpush1.msra.mxu0 %v2281
        %2434 = vmatprep.subr.mxu0 0.0
        %2435 = vmatpush1.msra.mxu0 0.0
        %2436 = vmatprep.subr.mxu0 0.0
        %2437 = vmatpush1.msra.mxu0 0.0
        %2438 = vmatprep.subr.mxu0 0.0
        %2439 = vmatpush1.msra.mxu0 0.0
        %2440 = vmatprep.subr.mxu0 0.0
        %2441 = vmatpush1.msra.mxu0 0.0
        %2442 = vmatprep.subr.mxu0 0.0
        %2443 = vmatpush1.msra.mxu0 0.0
        %2444 = vmatprep.subr.mxu0 0.0
        %2445 = vmatpush1.msra.mxu0 0.0
        %2446 = vmatprep.subr.mxu0 0.0
        %2447 = vmatpush1.msra.mxu0 0.0
        %2448 = vmatprep.subr.mxu0 0.0
        %2449 = vmatpush1.msra.mxu0 0.0
        %2450 = vmatprep.subr.mxu0 0.0
        %2451 = vmatpush1.msra.mxu0 0.0
        %2452 = vmatprep.subr.mxu0 0.0
        %2453 = vmatpush1.msra.mxu0 0.0
        %2454 = vmatprep.subr.mxu0 0.0
        %2455 = vmatpush1.msra.mxu0 0.0
        %2456 = vmatprep.subr.mxu0 0.0
        %2457 = vmatpush1.msra.mxu0 0.0
        %2458 = vmatprep.subr.mxu0 0.0
        %2459 = vmatpush1.msra.mxu0 0.0
        %2460 = vmatprep.subr.mxu0 0.0
        %2461 = vmatpush1.msra.mxu0 0.0
        %2462 = vmatprep.subr.mxu0 0.0
        %2463 = vmatpush1.msra.mxu0 0.0
        %2464 = vmatprep.subr.mxu0 0.0
        %2465 = vmatpush1.msra.mxu0 0.0
        %2466 = vmatprep.subr.mxu0 0.0
        %2467 = vmatpush1.msra.mxu0 0.0
        %2468 = vmatprep.subr.mxu0 0.0
        %2469 = vmatpush1.msra.mxu0 0.0
        %2470 = vmatprep.subr.mxu0 0.0
        %2471 = vmatpush1.msra.mxu0 0.0
        %2472 = vmatprep.subr.mxu0 0.0
        %2473 = vmatpush1.msra.mxu0 0.0
        %2474 = vmatprep.subr.mxu0 0.0
        %2475 = vmatpush1.msra.mxu0 0.0
        %2476 = vmatprep.subr.mxu0 0.0
        %2477 = vmatpush1.msra.mxu0 0.0
        %2478 = vmatprep.subr.mxu0 0.0
        %2479 = vmatpush1.msra.mxu0 0.0
        %2480 = vmatprep.subr.mxu0 0.0
        %2481 = vmatpush1.msra.mxu0 0.0
        %2482 = vmatprep.subr.mxu0 0.0
        %2483 = vmatpush1.msra.mxu0 0.0
        %2484 = vmatprep.subr.mxu0 0.0
        %2485 = vmatpush1.msra.mxu0 0.0
        %2486 = vmatprep.subr.mxu0 0.0
        %2487 = vmatpush1.msra.mxu0 0.0
        %2488 = vmatprep.subr.mxu0 0.0
        %2489 = vmatpush1.msra.mxu0 0.0
        %2490 = vmatprep.subr.mxu0 0.0
        %2491 = vmatpush1.msra.mxu0 0.0
        %2492 = vmatprep.subr.mxu0 0.0
        %2493 = vmatpush1.msra.mxu0 0.0
        %2494 = vmatprep.subr.mxu0 0.0
        %2495 = vmatpush1.msra.mxu0 0.0
        %2496 = vmatprep.mubr.f32.mxu0 0.0
        %2497 = vmatmul.mubr.f32.gmra.mrb[0].mxu0 %v2430
        %v2498 = vpop.f32.mrb[0].mxu0
        %v2499 = vadd.f32 0.0, %v2498
        %v2500 = vpop.f32.mrb[0].mxu0
        %2501 = vdwg.mxu0
        %v2503 = vsel %vm1638, %v2276, 0
        %2505 = vmatprep.subr.mxu0 0.0
        %2506 = vmatpush1.msra.mxu0 %v2282
        %2507 = vmatprep.subr.mxu0 0.0
        %2508 = vmatpush1.msra.mxu0 0.0
        %2509 = vmatprep.subr.mxu0 0.0
        %2510 = vmatpush1.msra.mxu0 0.0
        %2511 = vmatprep.subr.mxu0 0.0
        %2512 = vmatpush1.msra.mxu0 0.0
        %2513 = vmatprep.subr.mxu0 0.0
        %2514 = vmatpush1.msra.mxu0 0.0
        %2515 = vmatprep.subr.mxu0 0.0
        %2516 = vmatpush1.msra.mxu0 0.0
        %2517 = vmatprep.subr.mxu0 0.0
        %2518 = vmatpush1.msra.mxu0 0.0
        %2519 = vmatprep.subr.mxu0 0.0
        %2520 = vmatpush1.msra.mxu0 0.0
        %2521 = vmatprep.subr.mxu0 0.0
        %2522 = vmatpush1.msra.mxu0 0.0
        %2523 = vmatprep.subr.mxu0 0.0
        %2524 = vmatpush1.msra.mxu0 0.0
        %2525 = vmatprep.subr.mxu0 0.0
        %2526 = vmatpush1.msra.mxu0 0.0
        %2527 = vmatprep.subr.mxu0 0.0
        %2528 = vmatpush1.msra.mxu0 0.0
        %2529 = vmatprep.subr.mxu0 0.0
        %2530 = vmatpush1.msra.mxu0 0.0
        %2531 = vmatprep.subr.mxu0 0.0
        %2532 = vmatpush1.msra.mxu0 0.0
        %2533 = vmatprep.subr.mxu0 0.0
        %2534 = vmatpush1.msra.mxu0 0.0
        %2535 = vmatprep.subr.mxu0 0.0
        %2536 = vmatpush1.msra.mxu0 0.0
        %2537 = vmatprep.subr.mxu0 0.0
        %2538 = vmatpush1.msra.mxu0 0.0
        %2539 = vmatprep.subr.mxu0 0.0
        %2540 = vmatpush1.msra.mxu0 0.0
        %2541 = vmatprep.subr.mxu0 0.0
        %2542 = vmatpush1.msra.mxu0 0.0
        %2543 = vmatprep.subr.mxu0 0.0
        %2544 = vmatpush1.msra.mxu0 0.0
        %2545 = vmatprep.subr.mxu0 0.0
        %2546 = vmatpush1.msra.mxu0 0.0
        %2547 = vmatprep.subr.mxu0 0.0
        %2548 = vmatpush1.msra.mxu0 0.0
        %2549 = vmatprep.subr.mxu0 0.0
        %2550 = vmatpush1.msra.mxu0 0.0
        %2551 = vmatprep.subr.mxu0 0.0
        %2552 = vmatpush1.msra.mxu0 0.0
        %2553 = vmatprep.subr.mxu0 0.0
        %2554 = vmatpush1.msra.mxu0 0.0
        %2555 = vmatprep.subr.mxu0 0.0
        %2556 = vmatpush1.msra.mxu0 0.0
        %2557 = vmatprep.subr.mxu0 0.0
        %2558 = vmatpush1.msra.mxu0 0.0
        %2559 = vmatprep.subr.mxu0 0.0
        %2560 = vmatpush1.msra.mxu0 0.0
        %2561 = vmatprep.subr.mxu0 0.0
        %2562 = vmatpush1.msra.mxu0 0.0
        %2563 = vmatprep.subr.mxu0 0.0
        %2564 = vmatpush1.msra.mxu0 0.0
        %2565 = vmatprep.subr.mxu0 0.0
        %2566 = vmatpush1.msra.mxu0 0.0
        %2567 = vmatprep.subr.mxu0 0.0
        %2568 = vmatpush1.msra.mxu0 0.0
        %2569 = vmatprep.mubr.f32.mxu0 0.0
        %2570 = vmatmul.mubr.f32.gmra.mrb[0].mxu0 %v2503
        %v2571 = vpop.f32.mrb[0].mxu0
        %v2572 = vadd.f32 0.0, %v2571
        %v2573 = vpop.f32.mrb[0].mxu0
        %2574 = vdwg.mxu0
        %v2575 = vsel %vm630, %v2353, 0.0
        %v2576 = vsel %vm630, %v2426, 0.0
        %v2577 = vadd.f32 %v2575, %v2576
        %v2578 = vsel %vm630, %v2499, 0.0
        %v2579 = vadd.f32 %v2577, %v2578
        %v2580 = vsel %vm630, %v2572, 0.0
        %v2581 = vadd.f32 %v2579, %v2580
        %v2582 = vadd.f32 %v627, %v2581
        %v2583 = vld [vmem:[%s9] sm:$0x1]
        %v2585 = vlaneseq
        %v2586 = vshrl.u32 %v2585, 7
        %v2587 = vsub.s32 0, %v2586
        %v2588 = vrot.slane %v2583, %v2587
        %v2590 = vadd.f32 %v2582, %v2588
        %v2591 = vld [vmem:[%s12] sm:$0x1]
        %v2592 = vld [vmem:[%s13] sm:$0x1]
        %v2593 = vsel %vm630, %v2590, 0.0
        %2594 = vadd.xlane.f32.xlu0 %v2593
        %v2595 = vpop.xlane.xlu0 %2594
        %v2596 = vmul.f32 %v2595, %v634
        %v2597 = vsub.f32 %v2590, %v2596
        %v2598 = vmul.f32 %v2597, %v2597
        %v2599 = vsel %vm630, %v2598, 0.0
        %2600 = vadd.xlane.f32.xlu0 %v2599
        %v2601 = vpop.xlane.xlu0 %2600
        %v2602 = vmul.f32 %v2601, %v634
        %v2603 = vadd.f32 %v2602, 1e-06
        %v2604 = vrsqrt.pop %v2603
        %v2605 = vmul.f32 %v2597, %v2604
        %v2607 = vlaneseq
        %v2608 = vshrl.u32 %v2607, 7
        %v2609 = vsub.s32 0, %v2608
        %v2610 = vrot.slane %v2591, %v2609
        %v2612 = vmul.f32 %v2605, %v2610
        %v2614 = vlaneseq
        %v2615 = vshrl.u32 %v2614, 7
        %v2616 = vsub.s32 0, %v2615
        %v2617 = vrot.slane %v2592, %v2616
        %v2619 = vadd.f32 %v2612, %v2617
        %v2620 = vld [vmem:[%s14] sm:$0xff]
        %v2621 = vld [vmem:[%s14 + $0x8] sm:$0xff]
        %v2622 = vld [vmem:[%s14 + $0x10] sm:$0xff]
        %v2623 = vld [vmem:[%s14 + $0x18] sm:$0xff]
        %v2624 = vld [vmem:[%s15] sm:$0x1]
        %v2626 = vlaneseq
        %v2627 = vshrl.u32 %v2626, 7
        %v2628 = vsub.s32 0, %v2627
        %v2629 = vrot.slane %v2624, %v2628
        %v2632 = vsel %vm630, %v2619, 0
        %2634 = vmatprep.subr.mxu0 0.0
        %2635 = vmatpush1.msra.mxu0 %v2620
        %2636 = vmatprep.subr.mxu0 0.0
        %2637 = vmatpush1.msra.mxu0 %v2621
        %2638 = vmatprep.subr.mxu0 0.0
        %2639 = vmatpush1.msra.mxu0 %v2622
        %2640 = vmatprep.subr.mxu0 0.0
        %2641 = vmatpush1.msra.mxu0 %v2623
        %2642 = vmatprep.subr.mxu0 0.0
        %2643 = vmatpush1.msra.mxu0 0.0
        %2644 = vmatprep.subr.mxu0 0.0
        %2645 = vmatpush1.msra.mxu0 0.0
        %2646 = vmatprep.subr.mxu0 0.0
        %2647 = vmatpush1.msra.mxu0 0.0
        %2648 = vmatprep.subr.mxu0 0.0
        %2649 = vmatpush1.msra.mxu0 0.0
        %2650 = vmatprep.subr.mxu0 0.0
        %2651 = vmatpush1.msra.mxu0 0.0
        %2652 = vmatprep.subr.mxu0 0.0
        %2653 = vmatpush1.msra.mxu0 0.0
        %2654 = vmatprep.subr.mxu0 0.0
        %2655 = vmatpush1.msra.mxu0 0.0
        %2656 = vmatprep.subr.mxu0 0.0
        %2657 = vmatpush1.msra.mxu0 0.0
        %2658 = vmatprep.subr.mxu0 0.0
        %2659 = vmatpush1.msra.mxu0 0.0
        %2660 = vmatprep.subr.mxu0 0.0
        %2661 = vmatpush1.msra.mxu0 0.0
        %2662 = vmatprep.subr.mxu0 0.0
        %2663 = vmatpush1.msra.mxu0 0.0
        %2664 = vmatprep.subr.mxu0 0.0
        %2665 = vmatpush1.msra.mxu0 0.0
        %2666 = vmatprep.subr.mxu0 0.0
        %2667 = vmatpush1.msra.mxu0 0.0
        %2668 = vmatprep.subr.mxu0 0.0
        %2669 = vmatpush1.msra.mxu0 0.0
        %2670 = vmatprep.subr.mxu0 0.0
        %2671 = vmatpush1.msra.mxu0 0.0
        %2672 = vmatprep.subr.mxu0 0.0
        %2673 = vmatpush1.msra.mxu0 0.0
        %2674 = vmatprep.subr.mxu0 0.0
        %2675 = vmatpush1.msra.mxu0 0.0
        %2676 = vmatprep.subr.mxu0 0.0
        %2677 = vmatpush1.msra.mxu0 0.0
        %2678 = vmatprep.subr.mxu0 0.0
        %2679 = vmatpush1.msra.mxu0 0.0
        %2680 = vmatprep.subr.mxu0 0.0
        %2681 = vmatpush1.msra.mxu0 0.0
        %2682 = vmatprep.subr.mxu0 0.0
        %2683 = vmatpush1.msra.mxu0 0.0
        %2684 = vmatprep.subr.mxu0 0.0
        %2685 = vmatpush1.msra.mxu0 0.0
        %2686 = vmatprep.subr.mxu0 0.0
        %2687 = vmatpush1.msra.mxu0 0.0
        %2688 = vmatprep.subr.mxu0 0.0
        %2689 = vmatpush1.msra.mxu0 0.0
        %2690 = vmatprep.subr.mxu0 0.0
        %2691 = vmatpush1.msra.mxu0 0.0
        %2692 = vmatprep.subr.mxu0 0.0
        %2693 = vmatpush1.msra.mxu0 0.0
        %2694 = vmatprep.subr.mxu0 0.0
        %2695 = vmatpush1.msra.mxu0 0.0
        %2696 = vmatprep.subr.mxu0 0.0
        %2697 = vmatpush1.msra.mxu0 0.0
        %2698 = vmatprep.mubr.f32.mxu0 0.0
        %2699 = vmatmul.mubr.f32.gmra.mrb[0].mxu0 %v2632
        %v2700 = vpop.f32.mrb[0].mxu0
        %v2701 = vadd.f32 %v2629, %v2700
        %v2702 = vpop.f32.mrb[0].mxu0
        %2703 = vdwg.mxu0
        %v2704 = vmul.f32 %v2701, 0.5
        %v2705 = vmul.f32 %v2701, 0.70710677
        %v2706 = verf.f32.pop %v2705
        %v2707 = vadd.f32 %v2706, 1.0
        %v2708 = vmul.f32 %v2704, %v2707
        %v2709 = vld [vmem:[%s16] sm:$0xff]
        %v2710 = vld [vmem:[%s16 + $0x8] sm:$0xff]
        %v2711 = vld [vmem:[%s16 + $0x10] sm:$0xff]
        %v2712 = vld [vmem:[%s16 + $0x18] sm:$0xff]
        %v2713 = vld [vmem:[%s16 + $0x20] sm:$0xff]
        %v2714 = vld [vmem:[%s16 + $0x28] sm:$0xff]
        %v2715 = vld [vmem:[%s16 + $0x30] sm:$0xff]
        %v2716 = vld [vmem:[%s16 + $0x38] sm:$0xff]
        %v2717 = vld [vmem:[%s16 + $0x40] sm:$0xff]
        %v2718 = vld [vmem:[%s16 + $0x48] sm:$0xff]
        %v2719 = vld [vmem:[%s16 + $0x50] sm:$0xff]
        %v2720 = vld [vmem:[%s16 + $0x58] sm:$0xff]
        %v2721 = vld [vmem:[%s16 + $0x60] sm:$0xff]
        %v2722 = vld [vmem:[%s16 + $0x68] sm:$0xff]
        %v2723 = vld [vmem:[%s16 + $0x70] sm:$0xff]
        %v2724 = vld [vmem:[%s16 + $0x78] sm:$0xff]
        %2725 = vmatprep.subr.mxu0 0.0
        %2726 = vmatpush1.msra.mxu0 %v2709
        %2727 = vmatprep.subr.mxu0 0.0
        %2728 = vmatpush1.msra.mxu0 %v2710
        %2729 = vmatprep.subr.mxu0 0.0
        %2730 = vmatpush1.msra.mxu0 %v2711
        %2731 = vmatprep.subr.mxu0 0.0
        %2732 = vmatpush1.msra.mxu0 %v2712
        %2733 = vmatprep.subr.mxu0 0.0
        %2734 = vmatpush1.msra.mxu0 %v2713
        %2735 = vmatprep.subr.mxu0 0.0
        %2736 = vmatpush1.msra.mxu0 %v2714
        %2737 = vmatprep.subr.mxu0 0.0
        %2738 = vmatpush1.msra.mxu0 %v2715
        %2739 = vmatprep.subr.mxu0 0.0
        %2740 = vmatpush1.msra.mxu0 %v2716
        %2741 = vmatprep.subr.mxu0 0.0
        %2742 = vmatpush1.msra.mxu0 %v2717
        %2743 = vmatprep.subr.mxu0 0.0
        %2744 = vmatpush1.msra.mxu0 %v2718
        %2745 = vmatprep.subr.mxu0 0.0
        %2746 = vmatpush1.msra.mxu0 %v2719
        %2747 = vmatprep.subr.mxu0 0.0
        %2748 = vmatpush1.msra.mxu0 %v2720
        %2749 = vmatprep.subr.mxu0 0.0
        %2750 = vmatpush1.msra.mxu0 %v2721
        %2751 = vmatprep.subr.mxu0 0.0
        %2752 = vmatpush1.msra.mxu0 %v2722
        %2753 = vmatprep.subr.mxu0 0.0
        %2754 = vmatpush1.msra.mxu0 %v2723
        %2755 = vmatprep.subr.mxu0 0.0
        %2756 = vmatpush1.msra.mxu0 %v2724
        %2757 = vmatprep.subr.mxu0 0.0
        %2758 = vmatpush1.msra.mxu0 0.0
        %2759 = vmatprep.subr.mxu0 0.0
        %2760 = vmatpush1.msra.mxu0 0.0
        %2761 = vmatprep.subr.mxu0 0.0
        %2762 = vmatpush1.msra.mxu0 0.0
        %2763 = vmatprep.subr.mxu0 0.0
        %2764 = vmatpush1.msra.mxu0 0.0
        %2765 = vmatprep.subr.mxu0 0.0
        %2766 = vmatpush1.msra.mxu0 0.0
        %2767 = vmatprep.subr.mxu0 0.0
        %2768 = vmatpush1.msra.mxu0 0.0
        %2769 = vmatprep.subr.mxu0 0.0
        %2770 = vmatpush1.msra.mxu0 0.0
        %2771 = vmatprep.subr.mxu0 0.0
        %2772 = vmatpush1.msra.mxu0 0.0
        %2773 = vmatprep.subr.mxu0 0.0
        %2774 = vmatpush1.msra.mxu0 0.0
        %2775 = vmatprep.subr.mxu0 0.0
        %2776 = vmatpush1.msra.mxu0 0.0
        %2777 = vmatprep.subr.mxu0 0.0
        %2778 = vmatpush1.msra.mxu0 0.0
        %2779 = vmatprep.subr.mxu0 0.0
        %2780 = vmatpush1.msra.mxu0 0.0
        %2781 = vmatprep.subr.mxu0 0.0
        %2782 = vmatpush1.msra.mxu0 0.0
        %2783 = vmatprep.subr.mxu0 0.0
        %2784 = vmatpush1.msra.mxu0 0.0
        %2785 = vmatprep.subr.mxu0 0.0
        %2786 = vmatpush1.msra.mxu0 0.0
        %2787 = vmatprep.subr.mxu0 0.0
        %2788 = vmatpush1.msra.mxu0 0.0
        %2789 = vmatprep.mubr.f32.mxu0 0.0
        %2790 = vmatmul.mubr.f32.gmra.mrb[0].mxu0 %v2708
        %v2791 = vpop.f32.mrb[0].mxu0
        %v2792 = vadd.f32 0.0, %v2791
        %v2793 = vpop.f32.mrb[0].mxu0
        %2794 = vdwg.mxu0
        %v2795 = vadd.f32 %v2590, %v2792
        %v2796 = vld [vmem:[%s17] sm:$0x1]
        %v2798 = vlaneseq
        %v2799 = vshrl.u32 %v2798, 7
        %v2800 = vsub.s32 0, %v2799
        %v2801 = vrot.slane %v2796, %v2800
        %v2803 = vadd.f32 %v2795, %v2801
        %s2804 = scalar_lea.vmem %s10, 1
        %v2805 = vld [vmem:[%s2804] sm:$0x1]
        %s2806 = scalar_lea.vmem %s11, 1
        %v2807 = vld [vmem:[%s2806] sm:$0x1]
        %v2808 = vsel %vm630, %v2803, 0.0
        %2809 = vadd.xlane.f32.xlu0 %v2808
        %v2810 = vpop.xlane.xlu0 %2809
        %v2811 = vmul.f32 %v2810, %v634
        %v2812 = vsub.f32 %v2803, %v2811
        %v2813 = vmul.f32 %v2812, %v2812
        %v2814 = vsel %vm630, %v2813, 0.0
        %2815 = vadd.xlane.f32.xlu0 %v2814
        %v2816 = vpop.xlane.xlu0 %2815
        %v2817 = vmul.f32 %v2816, %v634
        %v2818 = vadd.f32 %v2817, 1e-06
        %v2819 = vrsqrt.pop %v2818
        %v2820 = vmul.f32 %v2812, %v2819
        %v2822 = vlaneseq
        %v2823 = vshrl.u32 %v2822, 7
        %v2824 = vsub.s32 0, %v2823
        %v2825 = vrot.slane %v2805, %v2824
        %v2827 = vmul.f32 %v2820, %v2825
        %v2829 = vlaneseq
        %v2830 = vshrl.u32 %v2829, 7
        %v2831 = vsub.s32 0, %v2830
        %v2832 = vrot.slane %v2807, %v2831
        %v2834 = vadd.f32 %v2827, %v2832
        %s2835 = scalar_lea.vmem %s2, 128
        %v2836 = vld [vmem:[%s2835] sm:$0xff]
        %v2837 = vld [vmem:[%s2835 + $0x8] sm:$0xff]
        %v2838 = vld [vmem:[%s2835 + $0x10] sm:$0xff]
        %v2839 = vld [vmem:[%s2835 + $0x18] sm:$0xff]
        %v2840 = vld [vmem:[%s2835 + $0x20] sm:$0xff]
        %v2841 = vld [vmem:[%s2835 + $0x28] sm:$0xff]
        %v2842 = vld [vmem:[%s2835 + $0x30] sm:$0xff]
        %v2843 = vld [vmem:[%s2835 + $0x38] sm:$0xff]
        %v2844 = vld [vmem:[%s2835 + $0x40] sm:$0xff]
        %v2845 = vld [vmem:[%s2835 + $0x48] sm:$0xff]
        %v2846 = vld [vmem:[%s2835 + $0x50] sm:$0xff]
        %v2847 = vld [vmem:[%s2835 + $0x58] sm:$0xff]
        %v2848 = vld [vmem:[%s2835 + $0x60] sm:$0xff]
        %v2849 = vld [vmem:[%s2835 + $0x68] sm:$0xff]
        %v2850 = vld [vmem:[%s2835 + $0x70] sm:$0xff]
        %v2851 = vld [vmem:[%s2835 + $0x78] sm:$0xff]
        %s2852 = scalar_lea.vmem %s3, 4
        %v2853 = vld [vmem:[%s2852] sm:$0x1]
        %v2854 = vld [vmem:[%s2852 + $0x1] sm:$0x1]
        %v2855 = vld [vmem:[%s2852 + $0x2] sm:$0x1]
        %v2856 = vld [vmem:[%s2852 + $0x3] sm:$0x1]
        %v2861 = vlaneseq
        %v2862 = vshrl.u32 %v2861, 7
        %v2863 = vsub.s32 0, %v2862
        %v2864 = vrot.slane %v2853, %v2863
        %v2865 = vlaneseq
        %v2866 = vshrl.u32 %v2865, 7
        %v2867 = vsub.s32 0, %v2866
        %v2868 = vrot.slane %v2854, %v2867
        %v2869 = vlaneseq
        %v2870 = vshrl.u32 %v2869, 7
        %v2871 = vsub.s32 0, %v2870
        %v2872 = vrot.slane %v2855, %v2871
        %v2873 = vlaneseq
        %v2874 = vshrl.u32 %v2873, 7
        %v2875 = vsub.s32 0, %v2874
        %v2876 = vrot.slane %v2856, %v2875
        %v2882 = vsel %vm630, %v2834, 0
        %2884 = vmatprep.subr.mxu0 0.0
        %2885 = vmatpush1.msra.mxu0 %v2836
        %2886 = vmatprep.subr.mxu0 0.0
        %2887 = vmatpush1.msra.mxu0 %v2837
        %2888 = vmatprep.subr.mxu0 0.0
        %2889 = vmatpush1.msra.mxu0 %v2838
        %2890 = vmatprep.subr.mxu0 0.0
        %2891 = vmatpush1.msra.mxu0 %v2839
        %2892 = vmatprep.subr.mxu0 0.0
        %2893 = vmatpush1.msra.mxu0 0.0
        %2894 = vmatprep.subr.mxu0 0.0
        %2895 = vmatpush1.msra.mxu0 0.0
        %2896 = vmatprep.subr.mxu0 0.0
        %2897 = vmatpush1.msra.mxu0 0.0
        %2898 = vmatprep.subr.mxu0 0.0
        %2899 = vmatpush1.msra.mxu0 0.0
        %2900 = vmatprep.subr.mxu0 0.0
        %2901 = vmatpush1.msra.mxu0 0.0
        %2902 = vmatprep.subr.mxu0 0.0
        %2903 = vmatpush1.msra.mxu0 0.0
        %2904 = vmatprep.subr.mxu0 0.0
        %2905 = vmatpush1.msra.mxu0 0.0
        %2906 = vmatprep.subr.mxu0 0.0
        %2907 = vmatpush1.msra.mxu0 0.0
        %2908 = vmatprep.subr.mxu0 0.0
        %2909 = vmatpush1.msra.mxu0 0.0
        %2910 = vmatprep.subr.mxu0 0.0
        %2911 = vmatpush1.msra.mxu0 0.0
        %2912 = vmatprep.subr.mxu0 0.0
        %2913 = vmatpush1.msra.mxu0 0.0
        %2914 = vmatprep.subr.mxu0 0.0
        %2915 = vmatpush1.msra.mxu0 0.0
        %2916 = vmatprep.subr.mxu0 0.0
        %2917 = vmatpush1.msra.mxu0 0.0
        %2918 = vmatprep.subr.mxu0 0.0
        %2919 = vmatpush1.msra.mxu0 0.0
        %2920 = vmatprep.subr.mxu0 0.0
        %2921 = vmatpush1.msra.mxu0 0.0
        %2922 = vmatprep.subr.mxu0 0.0
        %2923 = vmatpush1.msra.mxu0 0.0
        %2924 = vmatprep.subr.mxu0 0.0
        %2925 = vmatpush1.msra.mxu0 0.0
        %2926 = vmatprep.subr.mxu0 0.0
        %2927 = vmatpush1.msra.mxu0 0.0
        %2928 = vmatprep.subr.mxu0 0.0
        %2929 = vmatpush1.msra.mxu0 0.0
        %2930 = vmatprep.subr.mxu0 0.0
        %2931 = vmatpush1.msra.mxu0 0.0
        %2932 = vmatprep.subr.mxu0 0.0
        %2933 = vmatpush1.msra.mxu0 0.0
        %2934 = vmatprep.subr.mxu0 0.0
        %2935 = vmatpush1.msra.mxu0 0.0
        %2936 = vmatprep.subr.mxu0 0.0
        %2937 = vmatpush1.msra.mxu0 0.0
        %2938 = vmatprep.subr.mxu0 0.0
        %2939 = vmatpush1.msra.mxu0 0.0
        %2940 = vmatprep.subr.mxu0 0.0
        %2941 = vmatpush1.msra.mxu0 0.0
        %2942 = vmatprep.subr.mxu0 0.0
        %2943 = vmatpush1.msra.mxu0 0.0
        %2944 = vmatprep.subr.mxu0 0.0
        %2945 = vmatpush1.msra.mxu0 0.0
        %2946 = vmatprep.subr.mxu0 0.0
        %2947 = vmatpush1.msra.mxu0 0.0
        %2948 = vmatprep.mubr.f32.mxu0 0.0
        %2949 = vmatmul.mubr.f32.gmra.mrb[0].mxu0 %v2882
        %v2950 = vpop.f32.mrb[0].mxu0
        %v2951 = vadd.f32 %v2864, %v2950
        %v2952 = vpop.f32.mrb[0].mxu0
        %2953 = vdwg.mxu0
        %2954 = vmatprep.subr.mxu0 0.0
        %2955 = vmatpush1.msra.mxu0 %v2840
        %2956 = vmatprep.subr.mxu0 0.0
        %2957 = vmatpush1.msra.mxu0 %v2841
        %2958 = vmatprep.subr.mxu0 0.0
        %2959 = vmatpush1.msra.mxu0 %v2842
        %2960 = vmatprep.subr.mxu0 0.0
        %2961 = vmatpush1.msra.mxu0 %v2843
        %2962 = vmatprep.subr.mxu0 0.0
        %2963 = vmatpush1.msra.mxu0 0.0
        %2964 = vmatprep.subr.mxu0 0.0
        %2965 = vmatpush1.msra.mxu0 0.0
        %2966 = vmatprep.subr.mxu0 0.0
        %2967 = vmatpush1.msra.mxu0 0.0
        %2968 = vmatprep.subr.mxu0 0.0
        %2969 = vmatpush1.msra.mxu0 0.0
        %2970 = vmatprep.subr.mxu0 0.0
        %2971 = vmatpush1.msra.mxu0 0.0
        %2972 = vmatprep.subr.mxu0 0.0
        %2973 = vmatpush1.msra.mxu0 0.0
        %2974 = vmatprep.subr.mxu0 0.0
        %2975 = vmatpush1.msra.mxu0 0.0
        %2976 = vmatprep.subr.mxu0 0.0
        %2977 = vmatpush1.msra.mxu0 0.0
        %2978 = vmatprep.subr.mxu0 0.0
        %2979 = vmatpush1.msra.mxu0 0.0
        %2980 = vmatprep.subr.mxu0 0.0
        %2981 = vmatpush1.msra.mxu0 0.0
        %2982 = vmatprep.subr.mxu0 0.0
        %2983 = vmatpush1.msra.mxu0 0.0
        %2984 = vmatprep.subr.mxu0 0.0
        %2985 = vmatpush1.msra.mxu0 0.0
        %2986 = vmatprep.subr.mxu0 0.0
        %2987 = vmatpush1.msra.mxu0 0.0
        %2988 = vmatprep.subr.mxu0 0.0
        %2989 = vmatpush1.msra.mxu0 0.0
        %2990 = vmatprep.subr.mxu0 0.0
        %2991 = vmatpush1.msra.mxu0 0.0
        %2992 = vmatprep.subr.mxu0 0.0
        %2993 = vmatpush1.msra.mxu0 0.0
        %2994 = vmatprep.subr.mxu0 0.0
        %2995 = vmatpush1.msra.mxu0 0.0
        %2996 = vmatprep.subr.mxu0 0.0
        %2997 = vmatpush1.msra.mxu0 0.0
        %2998 = vmatprep.subr.mxu0 0.0
        %2999 = vmatpush1.msra.mxu0 0.0
        %3000 = vmatprep.subr.mxu0 0.0
        %3001 = vmatpush1.msra.mxu0 0.0
        %3002 = vmatprep.subr.mxu0 0.0
        %3003 = vmatpush1.msra.mxu0 0.0
        %3004 = vmatprep.subr.mxu0 0.0
        %3005 = vmatpush1.msra.mxu0 0.0
        %3006 = vmatprep.subr.mxu0 0.0
        %3007 = vmatpush1.msra.mxu0 0.0
        %3008 = vmatprep.subr.mxu0 0.0
        %3009 = vmatpush1.msra.mxu0 0.0
        %3010 = vmatprep.subr.mxu0 0.0
        %3011 = vmatpush1.msra.mxu0 0.0
        %3012 = vmatprep.subr.mxu0 0.0
        %3013 = vmatpush1.msra.mxu0 0.0
        %3014 = vmatprep.subr.mxu0 0.0
        %3015 = vmatpush1.msra.mxu0 0.0
        %3016 = vmatprep.subr.mxu0 0.0
        %3017 = vmatpush1.msra.mxu0 0.0
        %3018 = vmatprep.mubr.f32.mxu0 0.0
        %3019 = vmatmul.mubr.f32.gmra.mrb[0].mxu0 %v2882
        %v3020 = vpop.f32.mrb[0].mxu0
        %v3021 = vadd.f32 %v2868, %v3020
        %v3022 = vpop.f32.mrb[0].mxu0
        %3023 = vdwg.mxu0
        %3024 = vmatprep.subr.mxu0 0.0
        %3025 = vmatpush1.msra.mxu0 %v2844
        %3026 = vmatprep.subr.mxu0 0.0
        %3027 = vmatpush1.msra.mxu0 %v2845
        %3028 = vmatprep.subr.mxu0 0.0
        %3029 = vmatpush1.msra.mxu0 %v2846
        %3030 = vmatprep.subr.mxu0 0.0
        %3031 = vmatpush1.msra.mxu0 %v2847
        %3032 = vmatprep.subr.mxu0 0.0
        %3033 = vmatpush1.msra.mxu0 0.0
        %3034 = vmatprep.subr.mxu0 0.0
        %3035 = vmatpush1.msra.mxu0 0.0
        %3036 = vmatprep.subr.mxu0 0.0
        %3037 = vmatpush1.msra.mxu0 0.0
        %3038 = vmatprep.subr.mxu0 0.0
        %3039 = vmatpush1.msra.mxu0 0.0
        %3040 = vmatprep.subr.mxu0 0.0
        %3041 = vmatpush1.msra.mxu0 0.0
        %3042 = vmatprep.subr.mxu0 0.0
        %3043 = vmatpush1.msra.mxu0 0.0
        %3044 = vmatprep.subr.mxu0 0.0
        %3045 = vmatpush1.msra.mxu0 0.0
        %3046 = vmatprep.subr.mxu0 0.0
        %3047 = vmatpush1.msra.mxu0 0.0
        %3048 = vmatprep.subr.mxu0 0.0
        %3049 = vmatpush1.msra.mxu0 0.0
        %3050 = vmatprep.subr.mxu0 0.0
        %3051 = vmatpush1.msra.mxu0 0.0
        %3052 = vmatprep.subr.mxu0 0.0
        %3053 = vmatpush1.msra.mxu0 0.0
        %3054 = vmatprep.subr.mxu0 0.0
        %3055 = vmatpush1.msra.mxu0 0.0
        %3056 = vmatprep.subr.mxu0 0.0
        %3057 = vmatpush1.msra.mxu0 0.0
        %3058 = vmatprep.subr.mxu0 0.0
        %3059 = vmatpush1.msra.mxu0 0.0
        %3060 = vmatprep.subr.mxu0 0.0
        %3061 = vmatpush1.msra.mxu0 0.0
        %3062 = vmatprep.subr.mxu0 0.0
        %3063 = vmatpush1.msra.mxu0 0.0
        %3064 = vmatprep.subr.mxu0 0.0
        %3065 = vmatpush1.msra.mxu0 0.0
        %3066 = vmatprep.subr.mxu0 0.0
        %3067 = vmatpush1.msra.mxu0 0.0
        %3068 = vmatprep.subr.mxu0 0.0
        %3069 = vmatpush1.msra.mxu0 0.0
        %3070 = vmatprep.subr.mxu0 0.0
        %3071 = vmatpush1.msra.mxu0 0.0
        %3072 = vmatprep.subr.mxu0 0.0
        %3073 = vmatpush1.msra.mxu0 0.0
        %3074 = vmatprep.subr.mxu0 0.0
        %3075 = vmatpush1.msra.mxu0 0.0
        %3076 = vmatprep.subr.mxu0 0.0
        %3077 = vmatpush1.msra.mxu0 0.0
        %3078 = vmatprep.subr.mxu0 0.0
        %3079 = vmatpush1.msra.mxu0 0.0
        %3080 = vmatprep.subr.mxu0 0.0
        %3081 = vmatpush1.msra.mxu0 0.0
        %3082 = vmatprep.subr.mxu0 0.0
        %3083 = vmatpush1.msra.mxu0 0.0
        %3084 = vmatprep.subr.mxu0 0.0
        %3085 = vmatpush1.msra.mxu0 0.0
        %3086 = vmatprep.subr.mxu0 0.0
        %3087 = vmatpush1.msra.mxu0 0.0
        %3088 = vmatprep.mubr.f32.mxu0 0.0
        %3089 = vmatmul.mubr.f32.gmra.mrb[0].mxu0 %v2882
        %v3090 = vpop.f32.mrb[0].mxu0
        %v3091 = vadd.f32 %v2872, %v3090
        %v3092 = vpop.f32.mrb[0].mxu0
        %3093 = vdwg.mxu0
        %3094 = vmatprep.subr.mxu0 0.0
        %3095 = vmatpush1.msra.mxu0 %v2848
        %3096 = vmatprep.subr.mxu0 0.0
        %3097 = vmatpush1.msra.mxu0 %v2849
        %3098 = vmatprep.subr.mxu0 0.0
        %3099 = vmatpush1.msra.mxu0 %v2850
        %3100 = vmatprep.subr.mxu0 0.0
        %3101 = vmatpush1.msra.mxu0 %v2851
        %3102 = vmatprep.subr.mxu0 0.0
        %3103 = vmatpush1.msra.mxu0 0.0
        %3104 = vmatprep.subr.mxu0 0.0
        %3105 = vmatpush1.msra.mxu0 0.0
        %3106 = vmatprep.subr.mxu0 0.0
        %3107 = vmatpush1.msra.mxu0 0.0
        %3108 = vmatprep.subr.mxu0 0.0
        %3109 = vmatpush1.msra.mxu0 0.0
        %3110 = vmatprep.subr.mxu0 0.0
        %3111 = vmatpush1.msra.mxu0 0.0
        %3112 = vmatprep.subr.mxu0 0.0
        %3113 = vmatpush1.msra.mxu0 0.0
        %3114 = vmatprep.subr.mxu0 0.0
        %3115 = vmatpush1.msra.mxu0 0.0
        %3116 = vmatprep.subr.mxu0 0.0
        %3117 = vmatpush1.msra.mxu0 0.0
        %3118 = vmatprep.subr.mxu0 0.0
        %3119 = vmatpush1.msra.mxu0 0.0
        %3120 = vmatprep.subr.mxu0 0.0
        %3121 = vmatpush1.msra.mxu0 0.0
        %3122 = vmatprep.subr.mxu0 0.0
        %3123 = vmatpush1.msra.mxu0 0.0
        %3124 = vmatprep.subr.mxu0 0.0
        %3125 = vmatpush1.msra.mxu0 0.0
        %3126 = vmatprep.subr.mxu0 0.0
        %3127 = vmatpush1.msra.mxu0 0.0
        %3128 = vmatprep.subr.mxu0 0.0
        %3129 = vmatpush1.msra.mxu0 0.0
        %3130 = vmatprep.subr.mxu0 0.0
        %3131 = vmatpush1.msra.mxu0 0.0
        %3132 = vmatprep.subr.mxu0 0.0
        %3133 = vmatpush1.msra.mxu0 0.0
        %3134 = vmatprep.subr.mxu0 0.0
        %3135 = vmatpush1.msra.mxu0 0.0
        %3136 = vmatprep.subr.mxu0 0.0
        %3137 = vmatpush1.msra.mxu0 0.0
        %3138 = vmatprep.subr.mxu0 0.0
        %3139 = vmatpush1.msra.mxu0 0.0
        %3140 = vmatprep.subr.mxu0 0.0
        %3141 = vmatpush1.msra.mxu0 0.0
        %3142 = vmatprep.subr.mxu0 0.0
        %3143 = vmatpush1.msra.mxu0 0.0
        %3144 = vmatprep.subr.mxu0 0.0
        %3145 = vmatpush1.msra.mxu0 0.0
        %3146 = vmatprep.subr.mxu0 0.0
        %3147 = vmatpush1.msra.mxu0 0.0
        %3148 = vmatprep.subr.mxu0 0.0
        %3149 = vmatpush1.msra.mxu0 0.0
        %3150 = vmatprep.subr.mxu0 0.0
        %3151 = vmatpush1.msra.mxu0 0.0
        %3152 = vmatprep.subr.mxu0 0.0
        %3153 = vmatpush1.msra.mxu0 0.0
        %3154 = vmatprep.subr.mxu0 0.0
        %3155 = vmatpush1.msra.mxu0 0.0
        %3156 = vmatprep.subr.mxu0 0.0
        %3157 = vmatpush1.msra.mxu0 0.0
        %3158 = vmatprep.mubr.f32.mxu0 0.0
        %3159 = vmatmul.mubr.f32.gmra.mrb[0].mxu0 %v2882
        %v3160 = vpop.f32.mrb[0].mxu0
        %v3161 = vadd.f32 %v2876, %v3160
        %v3162 = vpop.f32.mrb[0].mxu0
        %3163 = vdwg.mxu0
        %v3164 = vmul.f32 %v2951, 0.35355338
        %v3165 = vmul.f32 %v3021, 0.35355338
        %v3166 = vmul.f32 %v3091, 0.35355338
        %v3167 = vmul.f32 %v3161, 0.35355338
        %s3168 = scalar_lea.vmem %s4, 128
        %v3169 = vld [vmem:[%s3168] sm:$0xff]
        %v3170 = vld [vmem:[%s3168 + $0x8] sm:$0xff]
        %v3171 = vld [vmem:[%s3168 + $0x10] sm:$0xff]
        %v3172 = vld [vmem:[%s3168 + $0x18] sm:$0xff]
        %v3173 = vld [vmem:[%s3168 + $0x20] sm:$0xff]
        %v3174 = vld [vmem:[%s3168 + $0x28] sm:$0xff]
        %v3175 = vld [vmem:[%s3168 + $0x30] sm:$0xff]
        %v3176 = vld [vmem:[%s3168 + $0x38] sm:$0xff]
        %v3177 = vld [vmem:[%s3168 + $0x40] sm:$0xff]
        %v3178 = vld [vmem:[%s3168 + $0x48] sm:$0xff]
        %v3179 = vld [vmem:[%s3168 + $0x50] sm:$0xff]
        %v3180 = vld [vmem:[%s3168 + $0x58] sm:$0xff]
        %v3181 = vld [vmem:[%s3168 + $0x60] sm:$0xff]
        %v3182 = vld [vmem:[%s3168 + $0x68] sm:$0xff]
        %v3183 = vld [vmem:[%s3168 + $0x70] sm:$0xff]
        %v3184 = vld [vmem:[%s3168 + $0x78] sm:$0xff]
        %s3185 = scalar_lea.vmem %s5, 4
        %v3186 = vld [vmem:[%s3185] sm:$0x1]
        %v3187 = vld [vmem:[%s3185 + $0x1] sm:$0x1]
        %v3188 = vld [vmem:[%s3185 + $0x2] sm:$0x1]
        %v3189 = vld [vmem:[%s3185 + $0x3] sm:$0x1]
        %v3194 = vlaneseq
        %v3195 = vshrl.u32 %v3194, 7
        %v3196 = vsub.s32 0, %v3195
        %v3197 = vrot.slane %v3186, %v3196
        %v3198 = vlaneseq
        %v3199 = vshrl.u32 %v3198, 7
        %v3200 = vsub.s32 0, %v3199
        %v3201 = vrot.slane %v3187, %v3200
        %v3202 = vlaneseq
        %v3203 = vshrl.u32 %v3202, 7
        %v3204 = vsub.s32 0, %v3203
        %v3205 = vrot.slane %v3188, %v3204
        %v3206 = vlaneseq
        %v3207 = vshrl.u32 %v3206, 7
        %v3208 = vsub.s32 0, %v3207
        %v3209 = vrot.slane %v3189, %v3208
        %3214 = vmatprep.subr.mxu0 0.0
        %3215 = vmatpush1.msra.mxu0 %v3169
        %3216 = vmatprep.subr.mxu0 0.0
        %3217 = vmatpush1.msra.mxu0 %v3170
        %3218 = vmatprep.subr.mxu0 0.0
        %3219 = vmatpush1.msra.mxu0 %v3171
        %3220 = vmatprep.subr.mxu0 0.0
        %3221 = vmatpush1.msra.mxu0 %v3172
        %3222 = vmatprep.subr.mxu0 0.0
        %3223 = vmatpush1.msra.mxu0 0.0
        %3224 = vmatprep.subr.mxu0 0.0
        %3225 = vmatpush1.msra.mxu0 0.0
        %3226 = vmatprep.subr.mxu0 0.0
        %3227 = vmatpush1.msra.mxu0 0.0
        %3228 = vmatprep.subr.mxu0 0.0
        %3229 = vmatpush1.msra.mxu0 0.0
        %3230 = vmatprep.subr.mxu0 0.0
        %3231 = vmatpush1.msra.mxu0 0.0
        %3232 = vmatprep.subr.mxu0 0.0
        %3233 = vmatpush1.msra.mxu0 0.0
        %3234 = vmatprep.subr.mxu0 0.0
        %3235 = vmatpush1.msra.mxu0 0.0
        %3236 = vmatprep.subr.mxu0 0.0
        %3237 = vmatpush1.msra.mxu0 0.0
        %3238 = vmatprep.subr.mxu0 0.0
        %3239 = vmatpush1.msra.mxu0 0.0
        %3240 = vmatprep.subr.mxu0 0.0
        %3241 = vmatpush1.msra.mxu0 0.0
        %3242 = vmatprep.subr.mxu0 0.0
        %3243 = vmatpush1.msra.mxu0 0.0
        %3244 = vmatprep.subr.mxu0 0.0
        %3245 = vmatpush1.msra.mxu0 0.0
        %3246 = vmatprep.subr.mxu0 0.0
        %3247 = vmatpush1.msra.mxu0 0.0
        %3248 = vmatprep.subr.mxu0 0.0
        %3249 = vmatpush1.msra.mxu0 0.0
        %3250 = vmatprep.subr.mxu0 0.0
        %3251 = vmatpush1.msra.mxu0 0.0
        %3252 = vmatprep.subr.mxu0 0.0
        %3253 = vmatpush1.msra.mxu0 0.0
        %3254 = vmatprep.subr.mxu0 0.0
        %3255 = vmatpush1.msra.mxu0 0.0
        %3256 = vmatprep.subr.mxu0 0.0
        %3257 = vmatpush1.msra.mxu0 0.0
        %3258 = vmatprep.subr.mxu0 0.0
        %3259 = vmatpush1.msra.mxu0 0.0
        %3260 = vmatprep.subr.mxu0 0.0
        %3261 = vmatpush1.msra.mxu0 0.0
        %3262 = vmatprep.subr.mxu0 0.0
        %3263 = vmatpush1.msra.mxu0 0.0
        %3264 = vmatprep.subr.mxu0 0.0
        %3265 = vmatpush1.msra.mxu0 0.0
        %3266 = vmatprep.subr.mxu0 0.0
        %3267 = vmatpush1.msra.mxu0 0.0
        %3268 = vmatprep.subr.mxu0 0.0
        %3269 = vmatpush1.msra.mxu0 0.0
        %3270 = vmatprep.subr.mxu0 0.0
        %3271 = vmatpush1.msra.mxu0 0.0
        %3272 = vmatprep.subr.mxu0 0.0
        %3273 = vmatpush1.msra.mxu0 0.0
        %3274 = vmatprep.subr.mxu0 0.0
        %3275 = vmatpush1.msra.mxu0 0.0
        %3276 = vmatprep.subr.mxu0 0.0
        %3277 = vmatpush1.msra.mxu0 0.0
        %3278 = vmatprep.mubr.f32.mxu0 0.0
        %3279 = vmatmul.mubr.f32.gmra.mrb[0].mxu0 %v2882
        %v3280 = vpop.f32.mrb[0].mxu0
        %v3281 = vadd.f32 %v3197, %v3280
        %v3282 = vpop.f32.mrb[0].mxu0
        %3283 = vdwg.mxu0
        %3284 = vmatprep.subr.mxu0 0.0
        %3285 = vmatpush1.msra.mxu0 %v3173
        %3286 = vmatprep.subr.mxu0 0.0
        %3287 = vmatpush1.msra.mxu0 %v3174
        %3288 = vmatprep.subr.mxu0 0.0
        %3289 = vmatpush1.msra.mxu0 %v3175
        %3290 = vmatprep.subr.mxu0 0.0
        %3291 = vmatpush1.msra.mxu0 %v3176
        %3292 = vmatprep.subr.mxu0 0.0
        %3293 = vmatpush1.msra.mxu0 0.0
        %3294 = vmatprep.subr.mxu0 0.0
        %3295 = vmatpush1.msra.mxu0 0.0
        %3296 = vmatprep.subr.mxu0 0.0
        %3297 = vmatpush1.msra.mxu0 0.0
        %3298 = vmatprep.subr.mxu0 0.0
        %3299 = vmatpush1.msra.mxu0 0.0
        %3300 = vmatprep.subr.mxu0 0.0
        %3301 = vmatpush1.msra.mxu0 0.0
        %3302 = vmatprep.subr.mxu0 0.0
        %3303 = vmatpush1.msra.mxu0 0.0
        %3304 = vmatprep.subr.mxu0 0.0
        %3305 = vmatpush1.msra.mxu0 0.0
        %3306 = vmatprep.subr.mxu0 0.0
        %3307 = vmatpush1.msra.mxu0 0.0
        %3308 = vmatprep.subr.mxu0 0.0
        %3309 = vmatpush1.msra.mxu0 0.0
        %3310 = vmatprep.subr.mxu0 0.0
        %3311 = vmatpush1.msra.mxu0 0.0
        %3312 = vmatprep.subr.mxu0 0.0
        %3313 = vmatpush1.msra.mxu0 0.0
        %3314 = vmatprep.subr.mxu0 0.0
        %3315 = vmatpush1.msra.mxu0 0.0
        %3316 = vmatprep.subr.mxu0 0.0
        %3317 = vmatpush1.msra.mxu0 0.0
        %3318 = vmatprep.subr.mxu0 0.0
        %3319 = vmatpush1.msra.mxu0 0.0
        %3320 = vmatprep.subr.mxu0 0.0
        %3321 = vmatpush1.msra.mxu0 0.0
        %3322 = vmatprep.subr.mxu0 0.0
        %3323 = vmatpush1.msra.mxu0 0.0
        %3324 = vmatprep.subr.mxu0 0.0
        %3325 = vmatpush1.msra.mxu0 0.0
        %3326 = vmatprep.subr.mxu0 0.0
        %3327 = vmatpush1.msra.mxu0 0.0
        %3328 = vmatprep.subr.mxu0 0.0
        %3329 = vmatpush1.msra.mxu0 0.0
        %3330 = vmatprep.subr.mxu0 0.0
        %3331 = vmatpush1.msra.mxu0 0.0
        %3332 = vmatprep.subr.mxu0 0.0
        %3333 = vmatpush1.msra.mxu0 0.0
        %3334 = vmatprep.subr.mxu0 0.0
        %3335 = vmatpush1.msra.mxu0 0.0
        %3336 = vmatprep.subr.mxu0 0.0
        %3337 = vmatpush1.msra.mxu0 0.0
        %3338 = vmatprep.subr.mxu0 0.0
        %3339 = vmatpush1.msra.mxu0 0.0
        %3340 = vmatprep.subr.mxu0 0.0
        %3341 = vmatpush1.msra.mxu0 0.0
        %3342 = vmatprep.subr.mxu0 0.0
        %3343 = vmatpush1.msra.mxu0 0.0
        %3344 = vmatprep.subr.mxu0 0.0
        %3345 = vmatpush1.msra.mxu0 0.0
        %3346 = vmatprep.subr.mxu0 0.0
        %3347 = vmatpush1.msra.mxu0 0.0
        %3348 = vmatprep.mubr.f32.mxu0 0.0
        %3349 = vmatmul.mubr.f32.gmra.mrb[0].mxu0 %v2882
        %v3350 = vpop.f32.mrb[0].mxu0
        %v3351 = vadd.f32 %v3201, %v3350
        %v3352 = vpop.f32.mrb[0].mxu0
        %3353 = vdwg.mxu0
        %3354 = vmatprep.subr.mxu0 0.0
        %3355 = vmatpush1.msra.mxu0 %v3177
        %3356 = vmatprep.subr.mxu0 0.0
        %3357 = vmatpush1.msra.mxu0 %v3178
        %3358 = vmatprep.subr.mxu0 0.0
        %3359 = vmatpush1.msra.mxu0 %v3179
        %3360 = vmatprep.subr.mxu0 0.0
        %3361 = vmatpush1.msra.mxu0 %v3180
        %3362 = vmatprep.subr.mxu0 0.0
        %3363 = vmatpush1.msra.mxu0 0.0
        %3364 = vmatprep.subr.mxu0 0.0
        %3365 = vmatpush1.msra.mxu0 0.0
        %3366 = vmatprep.subr.mxu0 0.0
        %3367 = vmatpush1.msra.mxu0 0.0
        %3368 = vmatprep.subr.mxu0 0.0
        %3369 = vmatpush1.msra.mxu0 0.0
        %3370 = vmatprep.subr.mxu0 0.0
        %3371 = vmatpush1.msra.mxu0 0.0
        %3372 = vmatprep.subr.mxu0 0.0
        %3373 = vmatpush1.msra.mxu0 0.0
        %3374 = vmatprep.subr.mxu0 0.0
        %3375 = vmatpush1.msra.mxu0 0.0
        %3376 = vmatprep.subr.mxu0 0.0
        %3377 = vmatpush1.msra.mxu0 0.0
        %3378 = vmatprep.subr.mxu0 0.0
        %3379 = vmatpush1.msra.mxu0 0.0
        %3380 = vmatprep.subr.mxu0 0.0
        %3381 = vmatpush1.msra.mxu0 0.0
        %3382 = vmatprep.subr.mxu0 0.0
        %3383 = vmatpush1.msra.mxu0 0.0
        %3384 = vmatprep.subr.mxu0 0.0
        %3385 = vmatpush1.msra.mxu0 0.0
        %3386 = vmatprep.subr.mxu0 0.0
        %3387 = vmatpush1.msra.mxu0 0.0
        %3388 = vmatprep.subr.mxu0 0.0
        %3389 = vmatpush1.msra.mxu0 0.0
        %3390 = vmatprep.subr.mxu0 0.0
        %3391 = vmatpush1.msra.mxu0 0.0
        %3392 = vmatprep.subr.mxu0 0.0
        %3393 = vmatpush1.msra.mxu0 0.0
        %3394 = vmatprep.subr.mxu0 0.0
        %3395 = vmatpush1.msra.mxu0 0.0
        %3396 = vmatprep.subr.mxu0 0.0
        %3397 = vmatpush1.msra.mxu0 0.0
        %3398 = vmatprep.subr.mxu0 0.0
        %3399 = vmatpush1.msra.mxu0 0.0
        %3400 = vmatprep.subr.mxu0 0.0
        %3401 = vmatpush1.msra.mxu0 0.0
        %3402 = vmatprep.subr.mxu0 0.0
        %3403 = vmatpush1.msra.mxu0 0.0
        %3404 = vmatprep.subr.mxu0 0.0
        %3405 = vmatpush1.msra.mxu0 0.0
        %3406 = vmatprep.subr.mxu0 0.0
        %3407 = vmatpush1.msra.mxu0 0.0
        %3408 = vmatprep.subr.mxu0 0.0
        %3409 = vmatpush1.msra.mxu0 0.0
        %3410 = vmatprep.subr.mxu0 0.0
        %3411 = vmatpush1.msra.mxu0 0.0
        %3412 = vmatprep.subr.mxu0 0.0
        %3413 = vmatpush1.msra.mxu0 0.0
        %3414 = vmatprep.subr.mxu0 0.0
        %3415 = vmatpush1.msra.mxu0 0.0
        %3416 = vmatprep.subr.mxu0 0.0
        %3417 = vmatpush1.msra.mxu0 0.0
        %3418 = vmatprep.mubr.f32.mxu0 0.0
        %3419 = vmatmul.mubr.f32.gmra.mrb[0].mxu0 %v2882
        %v3420 = vpop.f32.mrb[0].mxu0
        %v3421 = vadd.f32 %v3205, %v3420
        %v3422 = vpop.f32.mrb[0].mxu0
        %3423 = vdwg.mxu0
        %3424 = vmatprep.subr.mxu0 0.0
        %3425 = vmatpush1.msra.mxu0 %v3181
        %3426 = vmatprep.subr.mxu0 0.0
        %3427 = vmatpush1.msra.mxu0 %v3182
        %3428 = vmatprep.subr.mxu0 0.0
        %3429 = vmatpush1.msra.mxu0 %v3183
        %3430 = vmatprep.subr.mxu0 0.0
        %3431 = vmatpush1.msra.mxu0 %v3184
        %3432 = vmatprep.subr.mxu0 0.0
        %3433 = vmatpush1.msra.mxu0 0.0
        %3434 = vmatprep.subr.mxu0 0.0
        %3435 = vmatpush1.msra.mxu0 0.0
        %3436 = vmatprep.subr.mxu0 0.0
        %3437 = vmatpush1.msra.mxu0 0.0
        %3438 = vmatprep.subr.mxu0 0.0
        %3439 = vmatpush1.msra.mxu0 0.0
        %3440 = vmatprep.subr.mxu0 0.0
        %3441 = vmatpush1.msra.mxu0 0.0
        %3442 = vmatprep.subr.mxu0 0.0
        %3443 = vmatpush1.msra.mxu0 0.0
        %3444 = vmatprep.subr.mxu0 0.0
        %3445 = vmatpush1.msra.mxu0 0.0
        %3446 = vmatprep.subr.mxu0 0.0
        %3447 = vmatpush1.msra.mxu0 0.0
        %3448 = vmatprep.subr.mxu0 0.0
        %3449 = vmatpush1.msra.mxu0 0.0
        %3450 = vmatprep.subr.mxu0 0.0
        %3451 = vmatpush1.msra.mxu0 0.0
        %3452 = vmatprep.subr.mxu0 0.0
        %3453 = vmatpush1.msra.mxu0 0.0
        %3454 = vmatprep.subr.mxu0 0.0
        %3455 = vmatpush1.msra.mxu0 0.0
        %3456 = vmatprep.subr.mxu0 0.0
        %3457 = vmatpush1.msra.mxu0 0.0
        %3458 = vmatprep.subr.mxu0 0.0
        %3459 = vmatpush1.msra.mxu0 0.0
        %3460 = vmatprep.subr.mxu0 0.0
        %3461 = vmatpush1.msra.mxu0 0.0
        %3462 = vmatprep.subr.mxu0 0.0
        %3463 = vmatpush1.msra.mxu0 0.0
        %3464 = vmatprep.subr.mxu0 0.0
        %3465 = vmatpush1.msra.mxu0 0.0
        %3466 = vmatprep.subr.mxu0 0.0
        %3467 = vmatpush1.msra.mxu0 0.0
        %3468 = vmatprep.subr.mxu0 0.0
        %3469 = vmatpush1.msra.mxu0 0.0
        %3470 = vmatprep.subr.mxu0 0.0
        %3471 = vmatpush1.msra.mxu0 0.0
        %3472 = vmatprep.subr.mxu0 0.0
        %3473 = vmatpush1.msra.mxu0 0.0
        %3474 = vmatprep.subr.mxu0 0.0
        %3475 = vmatpush1.msra.mxu0 0.0
        %3476 = vmatprep.subr.mxu0 0.0
        %3477 = vmatpush1.msra.mxu0 0.0
        %3478 = vmatprep.subr.mxu0 0.0
        %3479 = vmatpush1.msra.mxu0 0.0
        %3480 = vmatprep.subr.mxu0 0.0
        %3481 = vmatpush1.msra.mxu0 0.0
        %3482 = vmatprep.subr.mxu0 0.0
        %3483 = vmatpush1.msra.mxu0 0.0
        %3484 = vmatprep.subr.mxu0 0.0
        %3485 = vmatpush1.msra.mxu0 0.0
        %3486 = vmatprep.subr.mxu0 0.0
        %3487 = vmatpush1.msra.mxu0 0.0
        %3488 = vmatprep.mubr.f32.mxu0 0.0
        %3489 = vmatmul.mubr.f32.gmra.mrb[0].mxu0 %v2882
        %v3490 = vpop.f32.mrb[0].mxu0
        %v3491 = vadd.f32 %v3209, %v3490
        %v3492 = vpop.f32.mrb[0].mxu0
        %3493 = vdwg.mxu0
        %s3494 = scalar_lea.vmem %s6, 128
        %v3495 = vld [vmem:[%s3494] sm:$0xff]
        %v3496 = vld [vmem:[%s3494 + $0x8] sm:$0xff]
        %v3497 = vld [vmem:[%s3494 + $0x10] sm:$0xff]
        %v3498 = vld [vmem:[%s3494 + $0x18] sm:$0xff]
        %v3499 = vld [vmem:[%s3494 + $0x20] sm:$0xff]
        %v3500 = vld [vmem:[%s3494 + $0x28] sm:$0xff]
        %v3501 = vld [vmem:[%s3494 + $0x30] sm:$0xff]
        %v3502 = vld [vmem:[%s3494 + $0x38] sm:$0xff]
        %v3503 = vld [vmem:[%s3494 + $0x40] sm:$0xff]
        %v3504 = vld [vmem:[%s3494 + $0x48] sm:$0xff]
        %v3505 = vld [vmem:[%s3494 + $0x50] sm:$0xff]
        %v3506 = vld [vmem:[%s3494 + $0x58] sm:$0xff]
        %v3507 = vld [vmem:[%s3494 + $0x60] sm:$0xff]
        %v3508 = vld [vmem:[%s3494 + $0x68] sm:$0xff]
        %v3509 = vld [vmem:[%s3494 + $0x70] sm:$0xff]
        %v3510 = vld [vmem:[%s3494 + $0x78] sm:$0xff]
        %s3511 = scalar_lea.vmem %s7, 4
        %v3512 = vld [vmem:[%s3511] sm:$0x1]
        %v3513 = vld [vmem:[%s3511 + $0x1] sm:$0x1]
        %v3514 = vld [vmem:[%s3511 + $0x2] sm:$0x1]
        %v3515 = vld [vmem:[%s3511 + $0x3] sm:$0x1]
        %v3520 = vlaneseq
        %v3521 = vshrl.u32 %v3520, 7
        %v3522 = vsub.s32 0, %v3521
        %v3523 = vrot.slane %v3512, %v3522
        %v3524 = vlaneseq
        %v3525 = vshrl.u32 %v3524, 7
        %v3526 = vsub.s32 0, %v3525
        %v3527 = vrot.slane %v3513, %v3526
        %v3528 = vlaneseq
        %v3529 = vshrl.u32 %v3528, 7
        %v3530 = vsub.s32 0, %v3529
        %v3531 = vrot.slane %v3514, %v3530
        %v3532 = vlaneseq
        %v3533 = vshrl.u32 %v3532, 7
        %v3534 = vsub.s32 0, %v3533
        %v3535 = vrot.slane %v3515, %v3534
        %3540 = vmatprep.subr.mxu0 0.0
        %3541 = vmatpush1.msra.mxu0 %v3495
        %3542 = vmatprep.subr.mxu0 0.0
        %3543 = vmatpush1.msra.mxu0 %v3496
        %3544 = vmatprep.subr.mxu0 0.0
        %3545 = vmatpush1.msra.mxu0 %v3497
        %3546 = vmatprep.subr.mxu0 0.0
        %3547 = vmatpush1.msra.mxu0 %v3498
        %3548 = vmatprep.subr.mxu0 0.0
        %3549 = vmatpush1.msra.mxu0 0.0
        %3550 = vmatprep.subr.mxu0 0.0
        %3551 = vmatpush1.msra.mxu0 0.0
        %3552 = vmatprep.subr.mxu0 0.0
        %3553 = vmatpush1.msra.mxu0 0.0
        %3554 = vmatprep.subr.mxu0 0.0
        %3555 = vmatpush1.msra.mxu0 0.0
        %3556 = vmatprep.subr.mxu0 0.0
        %3557 = vmatpush1.msra.mxu0 0.0
        %3558 = vmatprep.subr.mxu0 0.0
        %3559 = vmatpush1.msra.mxu0 0.0
        %3560 = vmatprep.subr.mxu0 0.0
        %3561 = vmatpush1.msra.mxu0 0.0
        %3562 = vmatprep.subr.mxu0 0.0
        %3563 = vmatpush1.msra.mxu0 0.0
        %3564 = vmatprep.subr.mxu0 0.0
        %3565 = vmatpush1.msra.mxu0 0.0
        %3566 = vmatprep.subr.mxu0 0.0
        %3567 = vmatpush1.msra.mxu0 0.0
        %3568 = vmatprep.subr.mxu0 0.0
        %3569 = vmatpush1.msra.mxu0 0.0
        %3570 = vmatprep.subr.mxu0 0.0
        %3571 = vmatpush1.msra.mxu0 0.0
        %3572 = vmatprep.subr.mxu0 0.0
        %3573 = vmatpush1.msra.mxu0 0.0
        %3574 = vmatprep.subr.mxu0 0.0
        %3575 = vmatpush1.msra.mxu0 0.0
        %3576 = vmatprep.subr.mxu0 0.0
        %3577 = vmatpush1.msra.mxu0 0.0
        %3578 = vmatprep.subr.mxu0 0.0
        %3579 = vmatpush1.msra.mxu0 0.0
        %3580 = vmatprep.subr.mxu0 0.0
        %3581 = vmatpush1.msra.mxu0 0.0
        %3582 = vmatprep.subr.mxu0 0.0
        %3583 = vmatpush1.msra.mxu0 0.0
        %3584 = vmatprep.subr.mxu0 0.0
        %3585 = vmatpush1.msra.mxu0 0.0
        %3586 = vmatprep.subr.mxu0 0.0
        %3587 = vmatpush1.msra.mxu0 0.0
        %3588 = vmatprep.subr.mxu0 0.0
        %3589 = vmatpush1.msra.mxu0 0.0
        %3590 = vmatprep.subr.mxu0 0.0
        %3591 = vmatpush1.msra.mxu0 0.0
        %3592 = vmatprep.subr.mxu0 0.0
        %3593 = vmatpush1.msra.mxu0 0.0
        %3594 = vmatprep.subr.mxu0 0.0
        %3595 = vmatpush1.msra.mxu0 0.0
        %3596 = vmatprep.subr.mxu0 0.0
        %3597 = vmatpush1.msra.mxu0 0.0
        %3598 = vmatprep.subr.mxu0 0.0
        %3599 = vmatpush1.msra.mxu0 0.0
        %3600 = vmatprep.subr.mxu0 0.0
        %3601 = vmatpush1.msra.mxu0 0.0
        %3602 = vmatprep.subr.mxu0 0.0
        %3603 = vmatpush1.msra.mxu0 0.0
        %3604 = vmatprep.mubr.f32.mxu0 0.0
        %3605 = vmatmul.mubr.f32.gmra.mrb[0].mxu0 %v2882
        %v3606 = vpop.f32.mrb[0].mxu0
        %v3607 = vadd.f32 %v3523, %v3606
        %v3608 = vpop.f32.mrb[0].mxu0
        %3609 = vdwg.mxu0
        %3610 = vmatprep.subr.mxu0 0.0
        %3611 = vmatpush1.msra.mxu0 %v3499
        %3612 = vmatprep.subr.mxu0 0.0
        %3613 = vmatpush1.msra.mxu0 %v3500
        %3614 = vmatprep.subr.mxu0 0.0
        %3615 = vmatpush1.msra.mxu0 %v3501
        %3616 = vmatprep.subr.mxu0 0.0
        %3617 = vmatpush1.msra.mxu0 %v3502
        %3618 = vmatprep.subr.mxu0 0.0
        %3619 = vmatpush1.msra.mxu0 0.0
        %3620 = vmatprep.subr.mxu0 0.0
        %3621 = vmatpush1.msra.mxu0 0.0
        %3622 = vmatprep.subr.mxu0 0.0
        %3623 = vmatpush1.msra.mxu0 0.0
        %3624 = vmatprep.subr.mxu0 0.0
        %3625 = vmatpush1.msra.mxu0 0.0
        %3626 = vmatprep.subr.mxu0 0.0
        %3627 = vmatpush1.msra.mxu0 0.0
        %3628 = vmatprep.subr.mxu0 0.0
        %3629 = vmatpush1.msra.mxu0 0.0
        %3630 = vmatprep.subr.mxu0 0.0
        %3631 = vmatpush1.msra.mxu0 0.0
        %3632 = vmatprep.subr.mxu0 0.0
        %3633 = vmatpush1.msra.mxu0 0.0
        %3634 = vmatprep.subr.mxu0 0.0
        %3635 = vmatpush1.msra.mxu0 0.0
        %3636 = vmatprep.subr.mxu0 0.0
        %3637 = vmatpush1.msra.mxu0 0.0
        %3638 = vmatprep.subr.mxu0 0.0
        %3639 = vmatpush1.msra.mxu0 0.0
        %3640 = vmatprep.subr.mxu0 0.0
        %3641 = vmatpush1.msra.mxu0 0.0
        %3642 = vmatprep.subr.mxu0 0.0
        %3643 = vmatpush1.msra.mxu0 0.0
        %3644 = vmatprep.subr.mxu0 0.0
        %3645 = vmatpush1.msra.mxu0 0.0
        %3646 = vmatprep.subr.mxu0 0.0
        %3647 = vmatpush1.msra.mxu0 0.0
        %3648 = vmatprep.subr.mxu0 0.0
        %3649 = vmatpush1.msra.mxu0 0.0
        %3650 = vmatprep.subr.mxu0 0.0
        %3651 = vmatpush1.msra.mxu0 0.0
        %3652 = vmatprep.subr.mxu0 0.0
        %3653 = vmatpush1.msra.mxu0 0.0
        %3654 = vmatprep.subr.mxu0 0.0
        %3655 = vmatpush1.msra.mxu0 0.0
        %3656 = vmatprep.subr.mxu0 0.0
        %3657 = vmatpush1.msra.mxu0 0.0
        %3658 = vmatprep.subr.mxu0 0.0
        %3659 = vmatpush1.msra.mxu0 0.0
        %3660 = vmatprep.subr.mxu0 0.0
        %3661 = vmatpush1.msra.mxu0 0.0
        %3662 = vmatprep.subr.mxu0 0.0
        %3663 = vmatpush1.msra.mxu0 0.0
        %3664 = vmatprep.subr.mxu0 0.0
        %3665 = vmatpush1.msra.mxu0 0.0
        %3666 = vmatprep.subr.mxu0 0.0
        %3667 = vmatpush1.msra.mxu0 0.0
        %3668 = vmatprep.subr.mxu0 0.0
        %3669 = vmatpush1.msra.mxu0 0.0
        %3670 = vmatprep.subr.mxu0 0.0
        %3671 = vmatpush1.msra.mxu0 0.0
        %3672 = vmatprep.subr.mxu0 0.0
        %3673 = vmatpush1.msra.mxu0 0.0
        %3674 = vmatprep.mubr.f32.mxu0 0.0
        %3675 = vmatmul.mubr.f32.gmra.mrb[0].mxu0 %v2882
        %v3676 = vpop.f32.mrb[0].mxu0
        %v3677 = vadd.f32 %v3527, %v3676
        %v3678 = vpop.f32.mrb[0].mxu0
        %3679 = vdwg.mxu0
        %3680 = vmatprep.subr.mxu0 0.0
        %3681 = vmatpush1.msra.mxu0 %v3503
        %3682 = vmatprep.subr.mxu0 0.0
        %3683 = vmatpush1.msra.mxu0 %v3504
        %3684 = vmatprep.subr.mxu0 0.0
        %3685 = vmatpush1.msra.mxu0 %v3505
        %3686 = vmatprep.subr.mxu0 0.0
        %3687 = vmatpush1.msra.mxu0 %v3506
        %3688 = vmatprep.subr.mxu0 0.0
        %3689 = vmatpush1.msra.mxu0 0.0
        %3690 = vmatprep.subr.mxu0 0.0
        %3691 = vmatpush1.msra.mxu0 0.0
        %3692 = vmatprep.subr.mxu0 0.0
        %3693 = vmatpush1.msra.mxu0 0.0
        %3694 = vmatprep.subr.mxu0 0.0
        %3695 = vmatpush1.msra.mxu0 0.0
        %3696 = vmatprep.subr.mxu0 0.0
        %3697 = vmatpush1.msra.mxu0 0.0
        %3698 = vmatprep.subr.mxu0 0.0
        %3699 = vmatpush1.msra.mxu0 0.0
        %3700 = vmatprep.subr.mxu0 0.0
        %3701 = vmatpush1.msra.mxu0 0.0
        %3702 = vmatprep.subr.mxu0 0.0
        %3703 = vmatpush1.msra.mxu0 0.0
        %3704 = vmatprep.subr.mxu0 0.0
        %3705 = vmatpush1.msra.mxu0 0.0
        %3706 = vmatprep.subr.mxu0 0.0
        %3707 = vmatpush1.msra.mxu0 0.0
        %3708 = vmatprep.subr.mxu0 0.0
        %3709 = vmatpush1.msra.mxu0 0.0
        %3710 = vmatprep.subr.mxu0 0.0
        %3711 = vmatpush1.msra.mxu0 0.0
        %3712 = vmatprep.subr.mxu0 0.0
        %3713 = vmatpush1.msra.mxu0 0.0
        %3714 = vmatprep.subr.mxu0 0.0
        %3715 = vmatpush1.msra.mxu0 0.0
        %3716 = vmatprep.subr.mxu0 0.0
        %3717 = vmatpush1.msra.mxu0 0.0
        %3718 = vmatprep.subr.mxu0 0.0
        %3719 = vmatpush1.msra.mxu0 0.0
        %3720 = vmatprep.subr.mxu0 0.0
        %3721 = vmatpush1.msra.mxu0 0.0
        %3722 = vmatprep.subr.mxu0 0.0
        %3723 = vmatpush1.msra.mxu0 0.0
        %3724 = vmatprep.subr.mxu0 0.0
        %3725 = vmatpush1.msra.mxu0 0.0
        %3726 = vmatprep.subr.mxu0 0.0
        %3727 = vmatpush1.msra.mxu0 0.0
        %3728 = vmatprep.subr.mxu0 0.0
        %3729 = vmatpush1.msra.mxu0 0.0
        %3730 = vmatprep.subr.mxu0 0.0
        %3731 = vmatpush1.msra.mxu0 0.0
        %3732 = vmatprep.subr.mxu0 0.0
        %3733 = vmatpush1.msra.mxu0 0.0
        %3734 = vmatprep.subr.mxu0 0.0
        %3735 = vmatpush1.msra.mxu0 0.0
        %3736 = vmatprep.subr.mxu0 0.0
        %3737 = vmatpush1.msra.mxu0 0.0
        %3738 = vmatprep.subr.mxu0 0.0
        %3739 = vmatpush1.msra.mxu0 0.0
        %3740 = vmatprep.subr.mxu0 0.0
        %3741 = vmatpush1.msra.mxu0 0.0
        %3742 = vmatprep.subr.mxu0 0.0
        %3743 = vmatpush1.msra.mxu0 0.0
        %3744 = vmatprep.mubr.f32.mxu0 0.0
        %3745 = vmatmul.mubr.f32.gmra.mrb[0].mxu0 %v2882
        %v3746 = vpop.f32.mrb[0].mxu0
        %v3747 = vadd.f32 %v3531, %v3746
        %v3748 = vpop.f32.mrb[0].mxu0
        %3749 = vdwg.mxu0
        %3750 = vmatprep.subr.mxu0 0.0
        %3751 = vmatpush1.msra.mxu0 %v3507
        %3752 = vmatprep.subr.mxu0 0.0
        %3753 = vmatpush1.msra.mxu0 %v3508
        %3754 = vmatprep.subr.mxu0 0.0
        %3755 = vmatpush1.msra.mxu0 %v3509
        %3756 = vmatprep.subr.mxu0 0.0
        %3757 = vmatpush1.msra.mxu0 %v3510
        %3758 = vmatprep.subr.mxu0 0.0
        %3759 = vmatpush1.msra.mxu0 0.0
        %3760 = vmatprep.subr.mxu0 0.0
        %3761 = vmatpush1.msra.mxu0 0.0
        %3762 = vmatprep.subr.mxu0 0.0
        %3763 = vmatpush1.msra.mxu0 0.0
        %3764 = vmatprep.subr.mxu0 0.0
        %3765 = vmatpush1.msra.mxu0 0.0
        %3766 = vmatprep.subr.mxu0 0.0
        %3767 = vmatpush1.msra.mxu0 0.0
        %3768 = vmatprep.subr.mxu0 0.0
        %3769 = vmatpush1.msra.mxu0 0.0
        %3770 = vmatprep.subr.mxu0 0.0
        %3771 = vmatpush1.msra.mxu0 0.0
        %3772 = vmatprep.subr.mxu0 0.0
        %3773 = vmatpush1.msra.mxu0 0.0
        %3774 = vmatprep.subr.mxu0 0.0
        %3775 = vmatpush1.msra.mxu0 0.0
        %3776 = vmatprep.subr.mxu0 0.0
        %3777 = vmatpush1.msra.mxu0 0.0
        %3778 = vmatprep.subr.mxu0 0.0
        %3779 = vmatpush1.msra.mxu0 0.0
        %3780 = vmatprep.subr.mxu0 0.0
        %3781 = vmatpush1.msra.mxu0 0.0
        %3782 = vmatprep.subr.mxu0 0.0
        %3783 = vmatpush1.msra.mxu0 0.0
        %3784 = vmatprep.subr.mxu0 0.0
        %3785 = vmatpush1.msra.mxu0 0.0
        %3786 = vmatprep.subr.mxu0 0.0
        %3787 = vmatpush1.msra.mxu0 0.0
        %3788 = vmatprep.subr.mxu0 0.0
        %3789 = vmatpush1.msra.mxu0 0.0
        %3790 = vmatprep.subr.mxu0 0.0
        %3791 = vmatpush1.msra.mxu0 0.0
        %3792 = vmatprep.subr.mxu0 0.0
        %3793 = vmatpush1.msra.mxu0 0.0
        %3794 = vmatprep.subr.mxu0 0.0
        %3795 = vmatpush1.msra.mxu0 0.0
        %3796 = vmatprep.subr.mxu0 0.0
        %3797 = vmatpush1.msra.mxu0 0.0
        %3798 = vmatprep.subr.mxu0 0.0
        %3799 = vmatpush1.msra.mxu0 0.0
        %3800 = vmatprep.subr.mxu0 0.0
        %3801 = vmatpush1.msra.mxu0 0.0
        %3802 = vmatprep.subr.mxu0 0.0
        %3803 = vmatpush1.msra.mxu0 0.0
        %3804 = vmatprep.subr.mxu0 0.0
        %3805 = vmatpush1.msra.mxu0 0.0
        %3806 = vmatprep.subr.mxu0 0.0
        %3807 = vmatpush1.msra.mxu0 0.0
        %3808 = vmatprep.subr.mxu0 0.0
        %3809 = vmatpush1.msra.mxu0 0.0
        %3810 = vmatprep.subr.mxu0 0.0
        %3811 = vmatpush1.msra.mxu0 0.0
        %3812 = vmatprep.subr.mxu0 0.0
        %3813 = vmatpush1.msra.mxu0 0.0
        %3814 = vmatprep.mubr.f32.mxu0 0.0
        %3815 = vmatmul.mubr.f32.gmra.mrb[0].mxu0 %v2882
        %v3816 = vpop.f32.mrb[0].mxu0
        %v3817 = vadd.f32 %v3535, %v3816
        %v3818 = vpop.f32.mrb[0].mxu0
        %3819 = vdwg.mxu0
        %v3821 = vsel %vm1638, %v3164, 0
        %v3824 = vsel %vm1638, %v3281, 0
        %3826 = vmatprep.subr.mxu0 0.0
        %3827 = vmatpush1.xpose.msra.mxu0 %v3824
        %3828 = vmatprep.subr.mxu0 0.0
        %3829 = vmatpush1.xpose.msra.mxu0 0.0
        %3830 = vmatprep.subr.mxu0 0.0
        %3831 = vmatpush1.xpose.msra.mxu0 0.0
        %3832 = vmatprep.subr.mxu0 0.0
        %3833 = vmatpush1.xpose.msra.mxu0 0.0
        %3834 = vmatprep.subr.mxu0 0.0
        %3835 = vmatpush1.xpose.msra.mxu0 0.0
        %3836 = vmatprep.subr.mxu0 0.0
        %3837 = vmatpush1.xpose.msra.mxu0 0.0
        %3838 = vmatprep.subr.mxu0 0.0
        %3839 = vmatpush1.xpose.msra.mxu0 0.0
        %3840 = vmatprep.subr.mxu0 0.0
        %3841 = vmatpush1.xpose.msra.mxu0 0.0
        %3842 = vmatprep.subr.mxu0 0.0
        %3843 = vmatpush1.xpose.msra.mxu0 0.0
        %3844 = vmatprep.subr.mxu0 0.0
        %3845 = vmatpush1.xpose.msra.mxu0 0.0
        %3846 = vmatprep.subr.mxu0 0.0
        %3847 = vmatpush1.xpose.msra.mxu0 0.0
        %3848 = vmatprep.subr.mxu0 0.0
        %3849 = vmatpush1.xpose.msra.mxu0 0.0
        %3850 = vmatprep.subr.mxu0 0.0
        %3851 = vmatpush1.xpose.msra.mxu0 0.0
        %3852 = vmatprep.subr.mxu0 0.0
        %3853 = vmatpush1.xpose.msra.mxu0 0.0
        %3854 = vmatprep.subr.mxu0 0.0
        %3855 = vmatpush1.xpose.msra.mxu0 0.0
        %3856 = vmatprep.subr.mxu0 0.0
        %3857 = vmatpush1.xpose.msra.mxu0 0.0
        %3858 = vmatprep.subr.mxu0 0.0
        %3859 = vmatpush1.xpose.msra.mxu0 0.0
        %3860 = vmatprep.subr.mxu0 0.0
        %3861 = vmatpush1.xpose.msra.mxu0 0.0
        %3862 = vmatprep.subr.mxu0 0.0
        %3863 = vmatpush1.xpose.msra.mxu0 0.0
        %3864 = vmatprep.subr.mxu0 0.0
        %3865 = vmatpush1.xpose.msra.mxu0 0.0
        %3866 = vmatprep.subr.mxu0 0.0
        %3867 = vmatpush1.xpose.msra.mxu0 0.0
        %3868 = vmatprep.subr.mxu0 0.0
        %3869 = vmatpush1.xpose.msra.mxu0 0.0
        %3870 = vmatprep.subr.mxu0 0.0
        %3871 = vmatpush1.xpose.msra.mxu0 0.0
        %3872 = vmatprep.subr.mxu0 0.0
        %3873 = vmatpush1.xpose.msra.mxu0 0.0
        %3874 = vmatprep.subr.mxu0 0.0
        %3875 = vmatpush1.xpose.msra.mxu0 0.0
        %3876 = vmatprep.subr.mxu0 0.0
        %3877 = vmatpush1.xpose.msra.mxu0 0.0
        %3878 = vmatprep.subr.mxu0 0.0
        %3879 = vmatpush1.xpose.msra.mxu0 0.0
        %3880 = vmatprep.subr.mxu0 0.0
        %3881 = vmatpush1.xpose.msra.mxu0 0.0
        %3882 = vmatprep.subr.mxu0 0.0
        %3883 = vmatpush1.xpose.msra.mxu0 0.0
        %3884 = vmatprep.subr.mxu0 0.0
        %3885 = vmatpush1.xpose.msra.mxu0 0.0
        %3886 = vmatprep.subr.mxu0 0.0
        %3887 = vmatpush1.xpose.msra.mxu0 0.0
        %3888 = vmatprep.subr.mxu0 0.0
        %3889 = vmatpush1.xpose.msra.mxu0 0.0
        %3890 = vmatprep.mubr.f32.mxu0 0.0
        %3891 = vmatmul.mubr.f32.gmra.mrb[0].mxu0 %v3821
        %v3892 = vpop.f32.mrb[0].mxu0
        %v3893 = vadd.f32 0.0, %v3892
        %v3894 = vpop.f32.mrb[0].mxu0
        %3895 = vdwg.mxu0
        %v3897 = vsel %vm1638, %v3165, 0
        %v3900 = vsel %vm1638, %v3351, 0
        %3902 = vmatprep.subr.mxu0 0.0
        %3903 = vmatpush1.xpose.msra.mxu0 %v3900
        %3904 = vmatprep.subr.mxu0 0.0
        %3905 = vmatpush1.xpose.msra.mxu0 0.0
        %3906 = vmatprep.subr.mxu0 0.0
        %3907 = vmatpush1.xpose.msra.mxu0 0.0
        %3908 = vmatprep.subr.mxu0 0.0
        %3909 = vmatpush1.xpose.msra.mxu0 0.0
        %3910 = vmatprep.subr.mxu0 0.0
        %3911 = vmatpush1.xpose.msra.mxu0 0.0
        %3912 = vmatprep.subr.mxu0 0.0
        %3913 = vmatpush1.xpose.msra.mxu0 0.0
        %3914 = vmatprep.subr.mxu0 0.0
        %3915 = vmatpush1.xpose.msra.mxu0 0.0
        %3916 = vmatprep.subr.mxu0 0.0
        %3917 = vmatpush1.xpose.msra.mxu0 0.0
        %3918 = vmatprep.subr.mxu0 0.0
        %3919 = vmatpush1.xpose.msra.mxu0 0.0
        %3920 = vmatprep.subr.mxu0 0.0
        %3921 = vmatpush1.xpose.msra.mxu0 0.0
        %3922 = vmatprep.subr.mxu0 0.0
        %3923 = vmatpush1.xpose.msra.mxu0 0.0
        %3924 = vmatprep.subr.mxu0 0.0
        %3925 = vmatpush1.xpose.msra.mxu0 0.0
        %3926 = vmatprep.subr.mxu0 0.0
        %3927 = vmatpush1.xpose.msra.mxu0 0.0
        %3928 = vmatprep.subr.mxu0 0.0
        %3929 = vmatpush1.xpose.msra.mxu0 0.0
        %3930 = vmatprep.subr.mxu0 0.0
        %3931 = vmatpush1.xpose.msra.mxu0 0.0
        %3932 = vmatprep.subr.mxu0 0.0
        %3933 = vmatpush1.xpose.msra.mxu0 0.0
        %3934 = vmatprep.subr.mxu0 0.0
        %3935 = vmatpush1.xpose.msra.mxu0 0.0
        %3936 = vmatprep.subr.mxu0 0.0
        %3937 = vmatpush1.xpose.msra.mxu0 0.0
        %3938 = vmatprep.subr.mxu0 0.0
        %3939 = vmatpush1.xpose.msra.mxu0 0.0
        %3940 = vmatprep.subr.mxu0 0.0
        %3941 = vmatpush1.xpose.msra.mxu0 0.0
        %3942 = vmatprep.subr.mxu0 0.0
        %3943 = vmatpush1.xpose.msra.mxu0 0.0
        %3944 = vmatprep.subr.mxu0 0.0
        %3945 = vmatpush1.xpose.msra.mxu0 0.0
        %3946 = vmatprep.subr.mxu0 0.0
        %3947 = vmatpush1.xpose.msra.mxu0 0.0
        %3948 = vmatprep.subr.mxu0 0.0
        %3949 = vmatpush1.xpose.msra.mxu0 0.0
        %3950 = vmatprep.subr.mxu0 0.0
        %3951 = vmatpush1.xpose.msra.mxu0 0.0
        %3952 = vmatprep.subr.mxu0 0.0
        %3953 = vmatpush1.xpose.msra.mxu0 0.0
        %3954 = vmatprep.subr.mxu0 0.0
        %3955 = vmatpush1.xpose.msra.mxu0 0.0
        %3956 = vmatprep.subr.mxu0 0.0
        %3957 = vmatpush1.xpose.msra.mxu0 0.0
        %3958 = vmatprep.subr.mxu0 0.0
        %3959 = vmatpush1.xpose.msra.mxu0 0.0
        %3960 = vmatprep.subr.mxu0 0.0
        %3961 = vmatpush1.xpose.msra.mxu0 0.0
        %3962 = vmatprep.subr.mxu0 0.0
        %3963 = vmatpush1.xpose.msra.mxu0 0.0
        %3964 = vmatprep.subr.mxu0 0.0
        %3965 = vmatpush1.xpose.msra.mxu0 0.0
        %3966 = vmatprep.mubr.f32.mxu0 0.0
        %3967 = vmatmul.mubr.f32.gmra.mrb[0].mxu0 %v3897
        %v3968 = vpop.f32.mrb[0].mxu0
        %v3969 = vadd.f32 0.0, %v3968
        %v3970 = vpop.f32.mrb[0].mxu0
        %3971 = vdwg.mxu0
        %v3973 = vsel %vm1638, %v3166, 0
        %v3976 = vsel %vm1638, %v3421, 0
        %3978 = vmatprep.subr.mxu0 0.0
        %3979 = vmatpush1.xpose.msra.mxu0 %v3976
        %3980 = vmatprep.subr.mxu0 0.0
        %3981 = vmatpush1.xpose.msra.mxu0 0.0
        %3982 = vmatprep.subr.mxu0 0.0
        %3983 = vmatpush1.xpose.msra.mxu0 0.0
        %3984 = vmatprep.subr.mxu0 0.0
        %3985 = vmatpush1.xpose.msra.mxu0 0.0
        %3986 = vmatprep.subr.mxu0 0.0
        %3987 = vmatpush1.xpose.msra.mxu0 0.0
        %3988 = vmatprep.subr.mxu0 0.0
        %3989 = vmatpush1.xpose.msra.mxu0 0.0
        %3990 = vmatprep.subr.mxu0 0.0
        %3991 = vmatpush1.xpose.msra.mxu0 0.0
        %3992 = vmatprep.subr.mxu0 0.0
        %3993 = vmatpush1.xpose.msra.mxu0 0.0
        %3994 = vmatprep.subr.mxu0 0.0
        %3995 = vmatpush1.xpose.msra.mxu0 0.0
        %3996 = vmatprep.subr.mxu0 0.0
        %3997 = vmatpush1.xpose.msra.mxu0 0.0
        %3998 = vmatprep.subr.mxu0 0.0
        %3999 = vmatpush1.xpose.msra.mxu0 0.0
        %4000 = vmatprep.subr.mxu0 0.0
        %4001 = vmatpush1.xpose.msra.mxu0 0.0
        %4002 = vmatprep.subr.mxu0 0.0
        %4003 = vmatpush1.xpose.msra.mxu0 0.0
        %4004 = vmatprep.subr.mxu0 0.0
        %4005 = vmatpush1.xpose.msra.mxu0 0.0
        %4006 = vmatprep.subr.mxu0 0.0
        %4007 = vmatpush1.xpose.msra.mxu0 0.0
        %4008 = vmatprep.subr.mxu0 0.0
        %4009 = vmatpush1.xpose.msra.mxu0 0.0
        %4010 = vmatprep.subr.mxu0 0.0
        %4011 = vmatpush1.xpose.msra.mxu0 0.0
        %4012 = vmatprep.subr.mxu0 0.0
        %4013 = vmatpush1.xpose.msra.mxu0 0.0
        %4014 = vmatprep.subr.mxu0 0.0
        %4015 = vmatpush1.xpose.msra.mxu0 0.0
        %4016 = vmatprep.subr.mxu0 0.0
        %4017 = vmatpush1.xpose.msra.mxu0 0.0
        %4018 = vmatprep.subr.mxu0 0.0
        %4019 = vmatpush1.xpose.msra.mxu0 0.0
        %4020 = vmatprep.subr.mxu0 0.0
        %4021 = vmatpush1.xpose.msra.mxu0 0.0
        %4022 = vmatprep.subr.mxu0 0.0
        %4023 = vmatpush1.xpose.msra.mxu0 0.0
        %4024 = vmatprep.subr.mxu0 0.0
        %4025 = vmatpush1.xpose.msra.mxu0 0.0
        %4026 = vmatprep.subr.mxu0 0.0
        %4027 = vmatpush1.xpose.msra.mxu0 0.0
        %4028 = vmatprep.subr.mxu0 0.0
        %4029 = vmatpush1.xpose.msra.mxu0 0.0
        %4030 = vmatprep.subr.mxu0 0.0
        %4031 = vmatpush1.xpose.msra.mxu0 0.0
        %4032 = vmatprep.subr.mxu0 0.0
        %4033 = vmatpush1.xpose.msra.mxu0 0.0
        %4034 = vmatprep.subr.mxu0 0.0
        %4035 = vmatpush1.xpose.msra.mxu0 0.0
        %4036 = vmatprep.subr.mxu0 0.0
        %4037 = vmatpush1.xpose.msra.mxu0 0.0
        %4038 = vmatprep.subr.mxu0 0.0
        %4039 = vmatpush1.xpose.msra.mxu0 0.0
        %4040 = vmatprep.subr.mxu0 0.0
        %4041 = vmatpush1.xpose.msra.mxu0 0.0
        %4042 = vmatprep.mubr.f32.mxu0 0.0
        %4043 = vmatmul.mubr.f32.gmra.mrb[0].mxu0 %v3973
        %v4044 = vpop.f32.mrb[0].mxu0
        %v4045 = vadd.f32 0.0, %v4044
        %v4046 = vpop.f32.mrb[0].mxu0
        %4047 = vdwg.mxu0
        %v4049 = vsel %vm1638, %v3167, 0
        %v4052 = vsel %vm1638, %v3491, 0
        %4054 = vmatprep.subr.mxu0 0.0
        %4055 = vmatpush1.xpose.msra.mxu0 %v4052
        %4056 = vmatprep.subr.mxu0 0.0
        %4057 = vmatpush1.xpose.msra.mxu0 0.0
        %4058 = vmatprep.subr.mxu0 0.0
        %4059 = vmatpush1.xpose.msra.mxu0 0.0
        %4060 = vmatprep.subr.mxu0 0.0
        %4061 = vmatpush1.xpose.msra.mxu0 0.0
        %4062 = vmatprep.subr.mxu0 0.0
        %4063 = vmatpush1.xpose.msra.mxu0 0.0
        %4064 = vmatprep.subr.mxu0 0.0
        %4065 = vmatpush1.xpose.msra.mxu0 0.0
        %4066 = vmatprep.subr.mxu0 0.0
        %4067 = vmatpush1.xpose.msra.mxu0 0.0
        %4068 = vmatprep.subr.mxu0 0.0
        %4069 = vmatpush1.xpose.msra.mxu0 0.0
        %4070 = vmatprep.subr.mxu0 0.0
        %4071 = vmatpush1.xpose.msra.mxu0 0.0
        %4072 = vmatprep.subr.mxu0 0.0
        %4073 = vmatpush1.xpose.msra.mxu0 0.0
        %4074 = vmatprep.subr.mxu0 0.0
        %4075 = vmatpush1.xpose.msra.mxu0 0.0
        %4076 = vmatprep.subr.mxu0 0.0
        %4077 = vmatpush1.xpose.msra.mxu0 0.0
        %4078 = vmatprep.subr.mxu0 0.0
        %4079 = vmatpush1.xpose.msra.mxu0 0.0
        %4080 = vmatprep.subr.mxu0 0.0
        %4081 = vmatpush1.xpose.msra.mxu0 0.0
        %4082 = vmatprep.subr.mxu0 0.0
        %4083 = vmatpush1.xpose.msra.mxu0 0.0
        %4084 = vmatprep.subr.mxu0 0.0
        %4085 = vmatpush1.xpose.msra.mxu0 0.0
        %4086 = vmatprep.subr.mxu0 0.0
        %4087 = vmatpush1.xpose.msra.mxu0 0.0
        %4088 = vmatprep.subr.mxu0 0.0
        %4089 = vmatpush1.xpose.msra.mxu0 0.0
        %4090 = vmatprep.subr.mxu0 0.0
        %4091 = vmatpush1.xpose.msra.mxu0 0.0
        %4092 = vmatprep.subr.mxu0 0.0
        %4093 = vmatpush1.xpose.msra.mxu0 0.0
        %4094 = vmatprep.subr.mxu0 0.0
        %4095 = vmatpush1.xpose.msra.mxu0 0.0
        %4096 = vmatprep.subr.mxu0 0.0
        %4097 = vmatpush1.xpose.msra.mxu0 0.0
        %4098 = vmatprep.subr.mxu0 0.0
        %4099 = vmatpush1.xpose.msra.mxu0 0.0
        %4100 = vmatprep.subr.mxu0 0.0
        %4101 = vmatpush1.xpose.msra.mxu0 0.0
        %4102 = vmatprep.subr.mxu0 0.0
        %4103 = vmatpush1.xpose.msra.mxu0 0.0
        %4104 = vmatprep.subr.mxu0 0.0
        %4105 = vmatpush1.xpose.msra.mxu0 0.0
        %4106 = vmatprep.subr.mxu0 0.0
        %4107 = vmatpush1.xpose.msra.mxu0 0.0
        %4108 = vmatprep.subr.mxu0 0.0
        %4109 = vmatpush1.xpose.msra.mxu0 0.0
        %4110 = vmatprep.subr.mxu0 0.0
        %4111 = vmatpush1.xpose.msra.mxu0 0.0
        %4112 = vmatprep.subr.mxu0 0.0
        %4113 = vmatpush1.xpose.msra.mxu0 0.0
        %4114 = vmatprep.subr.mxu0 0.0
        %4115 = vmatpush1.xpose.msra.mxu0 0.0
        %4116 = vmatprep.subr.mxu0 0.0
        %4117 = vmatpush1.xpose.msra.mxu0 0.0
        %4118 = vmatprep.mubr.f32.mxu0 0.0
        %4119 = vmatmul.mubr.f32.gmra.mrb[0].mxu0 %v4049
        %v4120 = vpop.f32.mrb[0].mxu0
        %v4121 = vadd.f32 0.0, %v4120
        %v4122 = vpop.f32.mrb[0].mxu0
        %4123 = vdwg.mxu0
        %v4124 = vsel %vm1638, %v3893, -inf
        %4125 = vmax.xlane.f32.xlu0 %v4124
        %v4126 = vpop.xlane.xlu0 %4125
        %v4127 = vsel %vm1638, %v3969, -inf
        %4128 = vmax.xlane.f32.xlu0 %v4127
        %v4129 = vpop.xlane.xlu0 %4128
        %v4130 = vsel %vm1638, %v4045, -inf
        %4131 = vmax.xlane.f32.xlu0 %v4130
        %v4132 = vpop.xlane.xlu0 %4131
        %v4133 = vsel %vm1638, %v4121, -inf
        %4134 = vmax.xlane.f32.xlu0 %v4133
        %v4135 = vpop.xlane.xlu0 %4134
        %v4136 = vsub.f32 %v3893, %v4126
        %v4137 = vsub.f32 %v3969, %v4129
        %v4138 = vsub.f32 %v4045, %v4132
        %v4139 = vsub.f32 %v4121, %v4135
        %v4140 = vmul.f32 %v4136, 1.442695
        %v4141 = vpow.pop %v4140
        %v4142 = vmul.f32 %v4137, 1.442695
        %v4143 = vpow.pop %v4142
        %v4144 = vmul.f32 %v4138, 1.442695
        %v4145 = vpow.pop %v4144
        %v4146 = vmul.f32 %v4139, 1.442695
        %v4147 = vpow.pop %v4146
        %v4148 = vsel %vm1638, %v4141, 0.0
        %4149 = vadd.xlane.f32.xlu0 %v4148
        %v4150 = vpop.xlane.xlu0 %4149
        %v4151 = vsel %vm1638, %v4143, 0.0
        %4152 = vadd.xlane.f32.xlu0 %v4151
        %v4153 = vpop.xlane.xlu0 %4152
        %v4154 = vsel %vm1638, %v4145, 0.0
        %4155 = vadd.xlane.f32.xlu0 %v4154
        %v4156 = vpop.xlane.xlu0 %4155
        %v4157 = vsel %vm1638, %v4147, 0.0
        %4158 = vadd.xlane.f32.xlu0 %v4157
        %v4159 = vpop.xlane.xlu0 %4158
        %v4160 = vrcp.pop %v4150
        %v4161 = vrcp.pop %v4153
        %v4162 = vrcp.pop %v4156
        %v4163 = vrcp.pop %v4159
        %v4164 = vmul.f32 %v4141, %v4160
        %v4165 = vmul.f32 %v4143, %v4161
        %v4166 = vmul.f32 %v4145, %v4162
        %v4167 = vmul.f32 %v4147, %v4163
        %v4169 = vsel %vm1638, %v4164, 0
        %4171 = vmatprep.subr.mxu0 0.0
        %4172 = vmatpush1.msra.mxu0 %v3607
        %4173 = vmatprep.subr.mxu0 0.0
        %4174 = vmatpush1.msra.mxu0 0.0
        %4175 = vmatprep.subr.mxu0 0.0
        %4176 = vmatpush1.msra.mxu0 0.0
        %4177 = vmatprep.subr.mxu0 0.0
        %4178 = vmatpush1.msra.mxu0 0.0
        %4179 = vmatprep.subr.mxu0 0.0
        %4180 = vmatpush1.msra.mxu0 0.0
        %4181 = vmatprep.subr.mxu0 0.0
        %4182 = vmatpush1.msra.mxu0 0.0
        %4183 = vmatprep.subr.mxu0 0.0
        %4184 = vmatpush1.msra.mxu0 0.0
        %4185 = vmatprep.subr.mxu0 0.0
        %4186 = vmatpush1.msra.mxu0 0.0
        %4187 = vmatprep.subr.mxu0 0.0
        %4188 = vmatpush1.msra.mxu0 0.0
        %4189 = vmatprep.subr.mxu0 0.0
        %4190 = vmatpush1.msra.mxu0 0.0
        %4191 = vmatprep.subr.mxu0 0.0
        %4192 = vmatpush1.msra.mxu0 0.0
        %4193 = vmatprep.subr.mxu0 0.0
        %4194 = vmatpush1.msra.mxu0 0.0
        %4195 = vmatprep.subr.mxu0 0.0
        %4196 = vmatpush1.msra.mxu0 0.0
        %4197 = vmatprep.subr.mxu0 0.0
        %4198 = vmatpush1.msra.mxu0 0.0
        %4199 = vmatprep.subr.mxu0 0.0
        %4200 = vmatpush1.msra.mxu0 0.0
        %4201 = vmatprep.subr.mxu0 0.0
        %4202 = vmatpush1.msra.mxu0 0.0
        %4203 = vmatprep.subr.mxu0 0.0
        %4204 = vmatpush1.msra.mxu0 0.0
        %4205 = vmatprep.subr.mxu0 0.0
        %4206 = vmatpush1.msra.mxu0 0.0
        %4207 = vmatprep.subr.mxu0 0.0
        %4208 = vmatpush1.msra.mxu0 0.0
        %4209 = vmatprep.subr.mxu0 0.0
        %4210 = vmatpush1.msra.mxu0 0.0
        %4211 = vmatprep.subr.mxu0 0.0
        %4212 = vmatpush1.msra.mxu0 0.0
        %4213 = vmatprep.subr.mxu0 0.0
        %4214 = vmatpush1.msra.mxu0 0.0
        %4215 = vmatprep.subr.mxu0 0.0
        %4216 = vmatpush1.msra.mxu0 0.0
        %4217 = vmatprep.subr.mxu0 0.0
        %4218 = vmatpush1.msra.mxu0 0.0
        %4219 = vmatprep.subr.mxu0 0.0
        %4220 = vmatpush1.msra.mxu0 0.0
        %4221 = vmatprep.subr.mxu0 0.0
        %4222 = vmatpush1.msra.mxu0 0.0
        %4223 = vmatprep.subr.mxu0 0.0
        %4224 = vmatpush1.msra.mxu0 0.0
        %4225 = vmatprep.subr.mxu0 0.0
        %4226 = vmatpush1.msra.mxu0 0.0
        %4227 = vmatprep.subr.mxu0 0.0
        %4228 = vmatpush1.msra.mxu0 0.0
        %4229 = vmatprep.subr.mxu0 0.0
        %4230 = vmatpush1.msra.mxu0 0.0
        %4231 = vmatprep.subr.mxu0 0.0
        %4232 = vmatpush1.msra.mxu0 0.0
        %4233 = vmatprep.subr.mxu0 0.0
        %4234 = vmatpush1.msra.mxu0 0.0
        %4235 = vmatprep.mubr.f32.mxu0 0.0
        %4236 = vmatmul.mubr.f32.gmra.mrb[0].mxu0 %v4169
        %v4237 = vpop.f32.mrb[0].mxu0
        %v4238 = vadd.f32 0.0, %v4237
        %v4239 = vpop.f32.mrb[0].mxu0
        %4240 = vdwg.mxu0
        %v4242 = vsel %vm1638, %v4165, 0
        %4244 = vmatprep.subr.mxu0 0.0
        %4245 = vmatpush1.msra.mxu0 %v3677
        %4246 = vmatprep.subr.mxu0 0.0
        %4247 = vmatpush1.msra.mxu0 0.0
        %4248 = vmatprep.subr.mxu0 0.0
        %4249 = vmatpush1.msra.mxu0 0.0
        %4250 = vmatprep.subr.mxu0 0.0
        %4251 = vmatpush1.msra.mxu0 0.0
        %4252 = vmatprep.subr.mxu0 0.0
        %4253 = vmatpush1.msra.mxu0 0.0
        %4254 = vmatprep.subr.mxu0 0.0
        %4255 = vmatpush1.msra.mxu0 0.0
        %4256 = vmatprep.subr.mxu0 0.0
        %4257 = vmatpush1.msra.mxu0 0.0
        %4258 = vmatprep.subr.mxu0 0.0
        %4259 = vmatpush1.msra.mxu0 0.0
        %4260 = vmatprep.subr.mxu0 0.0
        %4261 = vmatpush1.msra.mxu0 0.0
        %4262 = vmatprep.subr.mxu0 0.0
        %4263 = vmatpush1.msra.mxu0 0.0
        %4264 = vmatprep.subr.mxu0 0.0
        %4265 = vmatpush1.msra.mxu0 0.0
        %4266 = vmatprep.subr.mxu0 0.0
        %4267 = vmatpush1.msra.mxu0 0.0
        %4268 = vmatprep.subr.mxu0 0.0
        %4269 = vmatpush1.msra.mxu0 0.0
        %4270 = vmatprep.subr.mxu0 0.0
        %4271 = vmatpush1.msra.mxu0 0.0
        %4272 = vmatprep.subr.mxu0 0.0
        %4273 = vmatpush1.msra.mxu0 0.0
        %4274 = vmatprep.subr.mxu0 0.0
        %4275 = vmatpush1.msra.mxu0 0.0
        %4276 = vmatprep.subr.mxu0 0.0
        %4277 = vmatpush1.msra.mxu0 0.0
        %4278 = vmatprep.subr.mxu0 0.0
        %4279 = vmatpush1.msra.mxu0 0.0
        %4280 = vmatprep.subr.mxu0 0.0
        %4281 = vmatpush1.msra.mxu0 0.0
        %4282 = vmatprep.subr.mxu0 0.0
        %4283 = vmatpush1.msra.mxu0 0.0
        %4284 = vmatprep.subr.mxu0 0.0
        %4285 = vmatpush1.msra.mxu0 0.0
        %4286 = vmatprep.subr.mxu0 0.0
        %4287 = vmatpush1.msra.mxu0 0.0
        %4288 = vmatprep.subr.mxu0 0.0
        %4289 = vmatpush1.msra.mxu0 0.0
        %4290 = vmatprep.subr.mxu0 0.0
        %4291 = vmatpush1.msra.mxu0 0.0
        %4292 = vmatprep.subr.mxu0 0.0
        %4293 = vmatpush1.msra.mxu0 0.0
        %4294 = vmatprep.subr.mxu0 0.0
        %4295 = vmatpush1.msra.mxu0 0.0
        %4296 = vmatprep.subr.mxu0 0.0
        %4297 = vmatpush1.msra.mxu0 0.0
        %4298 = vmatprep.subr.mxu0 0.0
        %4299 = vmatpush1.msra.mxu0 0.0
        %4300 = vmatprep.subr.mxu0 0.0
        %4301 = vmatpush1.msra.mxu0 0.0
        %4302 = vmatprep.subr.mxu0 0.0
        %4303 = vmatpush1.msra.mxu0 0.0
        %4304 = vmatprep.subr.mxu0 0.0
        %4305 = vmatpush1.msra.mxu0 0.0
        %4306 = vmatprep.subr.mxu0 0.0
        %4307 = vmatpush1.msra.mxu0 0.0
        %4308 = vmatprep.mubr.f32.mxu0 0.0
        %4309 = vmatmul.mubr.f32.gmra.mrb[0].mxu0 %v4242
        %v4310 = vpop.f32.mrb[0].mxu0
        %v4311 = vadd.f32 0.0, %v4310
        %v4312 = vpop.f32.mrb[0].mxu0
        %4313 = vdwg.mxu0
        %v4315 = vsel %vm1638, %v4166, 0
        %4317 = vmatprep.subr.mxu0 0.0
        %4318 = vmatpush1.msra.mxu0 %v3747
        %4319 = vmatprep.subr.mxu0 0.0
        %4320 = vmatpush1.msra.mxu0 0.0
        %4321 = vmatprep.subr.mxu0 0.0
        %4322 = vmatpush1.msra.mxu0 0.0
        %4323 = vmatprep.subr.mxu0 0.0
        %4324 = vmatpush1.msra.mxu0 0.0
        %4325 = vmatprep.subr.mxu0 0.0
        %4326 = vmatpush1.msra.mxu0 0.0
        %4327 = vmatprep.subr.mxu0 0.0
        %4328 = vmatpush1.msra.mxu0 0.0
        %4329 = vmatprep.subr.mxu0 0.0
        %4330 = vmatpush1.msra.mxu0 0.0
        %4331 = vmatprep.subr.mxu0 0.0
        %4332 = vmatpush1.msra.mxu0 0.0
        %4333 = vmatprep.subr.mxu0 0.0
        %4334 = vmatpush1.msra.mxu0 0.0
        %4335 = vmatprep.subr.mxu0 0.0
        %4336 = vmatpush1.msra.mxu0 0.0
        %4337 = vmatprep.subr.mxu0 0.0
        %4338 = vmatpush1.msra.mxu0 0.0
        %4339 = vmatprep.subr.mxu0 0.0
        %4340 = vmatpush1.msra.mxu0 0.0
        %4341 = vmatprep.subr.mxu0 0.0
        %4342 = vmatpush1.msra.mxu0 0.0
        %4343 = vmatprep.subr.mxu0 0.0
        %4344 = vmatpush1.msra.mxu0 0.0
        %4345 = vmatprep.subr.mxu0 0.0
        %4346 = vmatpush1.msra.mxu0 0.0
        %4347 = vmatprep.subr.mxu0 0.0
        %4348 = vmatpush1.msra.mxu0 0.0
        %4349 = vmatprep.subr.mxu0 0.0
        %4350 = vmatpush1.msra.mxu0 0.0
        %4351 = vmatprep.subr.mxu0 0.0
        %4352 = vmatpush1.msra.mxu0 0.0
        %4353 = vmatprep.subr.mxu0 0.0
        %4354 = vmatpush1.msra.mxu0 0.0
        %4355 = vmatprep.subr.mxu0 0.0
        %4356 = vmatpush1.msra.mxu0 0.0
        %4357 = vmatprep.subr.mxu0 0.0
        %4358 = vmatpush1.msra.mxu0 0.0
        %4359 = vmatprep.subr.mxu0 0.0
        %4360 = vmatpush1.msra.mxu0 0.0
        %4361 = vmatprep.subr.mxu0 0.0
        %4362 = vmatpush1.msra.mxu0 0.0
        %4363 = vmatprep.subr.mxu0 0.0
        %4364 = vmatpush1.msra.mxu0 0.0
        %4365 = vmatprep.subr.mxu0 0.0
        %4366 = vmatpush1.msra.mxu0 0.0
        %4367 = vmatprep.subr.mxu0 0.0
        %4368 = vmatpush1.msra.mxu0 0.0
        %4369 = vmatprep.subr.mxu0 0.0
        %4370 = vmatpush1.msra.mxu0 0.0
        %4371 = vmatprep.subr.mxu0 0.0
        %4372 = vmatpush1.msra.mxu0 0.0
        %4373 = vmatprep.subr.mxu0 0.0
        %4374 = vmatpush1.msra.mxu0 0.0
        %4375 = vmatprep.subr.mxu0 0.0
        %4376 = vmatpush1.msra.mxu0 0.0
        %4377 = vmatprep.subr.mxu0 0.0
        %4378 = vmatpush1.msra.mxu0 0.0
        %4379 = vmatprep.subr.mxu0 0.0
        %4380 = vmatpush1.msra.mxu0 0.0
        %4381 = vmatprep.mubr.f32.mxu0 0.0
        %4382 = vmatmul.mubr.f32.gmra.mrb[0].mxu0 %v4315
        %v4383 = vpop.f32.mrb[0].mxu0
        %v4384 = vadd.f32 0.0, %v4383
        %v4385 = vpop.f32.mrb[0].mxu0
        %4386 = vdwg.mxu0
        %v4388 = vsel %vm1638, %v4167, 0
        %4390 = vmatprep.subr.mxu0 0.0
        %4391 = vmatpush1.msra.mxu0 %v3817
        %4392 = vmatprep.subr.mxu0 0.0
        %4393 = vmatpush1.msra.mxu0 0.0
        %4394 = vmatprep.subr.mxu0 0.0
        %4395 = vmatpush1.msra.mxu0 0.0
        %4396 = vmatprep.subr.mxu0 0.0
        %4397 = vmatpush1.msra.mxu0 0.0
        %4398 = vmatprep.subr.mxu0 0.0
        %4399 = vmatpush1.msra.mxu0 0.0
        %4400 = vmatprep.subr.mxu0 0.0
        %4401 = vmatpush1.msra.mxu0 0.0
        %4402 = vmatprep.subr.mxu0 0.0
        %4403 = vmatpush1.msra.mxu0 0.0
        %4404 = vmatprep.subr.mxu0 0.0
        %4405 = vmatpush1.msra.mxu0 0.0
        %4406 = vmatprep.subr.mxu0 0.0
        %4407 = vmatpush1.msra.mxu0 0.0
        %4408 = vmatprep.subr.mxu0 0.0
        %4409 = vmatpush1.msra.mxu0 0.0
        %4410 = vmatprep.subr.mxu0 0.0
        %4411 = vmatpush1.msra.mxu0 0.0
        %4412 = vmatprep.subr.mxu0 0.0
        %4413 = vmatpush1.msra.mxu0 0.0
        %4414 = vmatprep.subr.mxu0 0.0
        %4415 = vmatpush1.msra.mxu0 0.0
        %4416 = vmatprep.subr.mxu0 0.0
        %4417 = vmatpush1.msra.mxu0 0.0
        %4418 = vmatprep.subr.mxu0 0.0
        %4419 = vmatpush1.msra.mxu0 0.0
        %4420 = vmatprep.subr.mxu0 0.0
        %4421 = vmatpush1.msra.mxu0 0.0
        %4422 = vmatprep.subr.mxu0 0.0
        %4423 = vmatpush1.msra.mxu0 0.0
        %4424 = vmatprep.subr.mxu0 0.0
        %4425 = vmatpush1.msra.mxu0 0.0
        %4426 = vmatprep.subr.mxu0 0.0
        %4427 = vmatpush1.msra.mxu0 0.0
        %4428 = vmatprep.subr.mxu0 0.0
        %4429 = vmatpush1.msra.mxu0 0.0
        %4430 = vmatprep.subr.mxu0 0.0
        %4431 = vmatpush1.msra.mxu0 0.0
        %4432 = vmatprep.subr.mxu0 0.0
        %4433 = vmatpush1.msra.mxu0 0.0
        %4434 = vmatprep.subr.mxu0 0.0
        %4435 = vmatpush1.msra.mxu0 0.0
        %4436 = vmatprep.subr.mxu0 0.0
        %4437 = vmatpush1.msra.mxu0 0.0
        %4438 = vmatprep.subr.mxu0 0.0
        %4439 = vmatpush1.msra.mxu0 0.0
        %4440 = vmatprep.subr.mxu0 0.0
        %4441 = vmatpush1.msra.mxu0 0.0
        %4442 = vmatprep.subr.mxu0 0.0
        %4443 = vmatpush1.msra.mxu0 0.0
        %4444 = vmatprep.subr.mxu0 0.0
        %4445 = vmatpush1.msra.mxu0 0.0
        %4446 = vmatprep.subr.mxu0 0.0
        %4447 = vmatpush1.msra.mxu0 0.0
        %4448 = vmatprep.subr.mxu0 0.0
        %4449 = vmatpush1.msra.mxu0 0.0
        %4450 = vmatprep.subr.mxu0 0.0
        %4451 = vmatpush1.msra.mxu0 0.0
        %4452 = vmatprep.subr.mxu0 0.0
        %4453 = vmatpush1.msra.mxu0 0.0
        %4454 = vmatprep.mubr.f32.mxu0 0.0
        %4455 = vmatmul.mubr.f32.gmra.mrb[0].mxu0 %v4388
        %v4456 = vpop.f32.mrb[0].mxu0
        %v4457 = vadd.f32 0.0, %v4456
        %v4458 = vpop.f32.mrb[0].mxu0
        %4459 = vdwg.mxu0
        %s4460 = scalar_lea.vmem %s8, 32
        %v4461 = vld [vmem:[%s4460] sm:$0xff]
        %v4462 = vld [vmem:[%s4460 + $0x8] sm:$0xff]
        %v4463 = vld [vmem:[%s4460 + $0x10] sm:$0xff]
        %v4464 = vld [vmem:[%s4460 + $0x18] sm:$0xff]
        %v4466 = vsel %vm1638, %v4238, 0
        %4468 = vmatprep.subr.mxu0 0.0
        %4469 = vmatpush1.msra.mxu0 %v4461
        %4470 = vmatprep.subr.mxu0 0.0
        %4471 = vmatpush1.msra.mxu0 0.0
        %4472 = vmatprep.subr.mxu0 0.0
        %4473 = vmatpush1.msra.mxu0 0.0
        %4474 = vmatprep.subr.mxu0 0.0
        %4475 = vmatpush1.msra.mxu0 0.0
        %4476 = vmatprep.subr.mxu0 0.0
        %4477 = vmatpush1.msra.mxu0 0.0
        %4478 = vmatprep.subr.mxu0 0.0
        %4479 = vmatpush1.msra.mxu0 0.0
        %4480 = vmatprep.subr.mxu0 0.0
        %4481 = vmatpush1.msra.mxu0 0.0
        %4482 = vmatprep.subr.mxu0 0.0
        %4483 = vmatpush1.msra.mxu0 0.0
        %4484 = vmatprep.subr.mxu0 0.0
        %4485 = vmatpush1.msra.mxu0 0.0
        %4486 = vmatprep.subr.mxu0 0.0
        %4487 = vmatpush1.msra.mxu0 0.0
        %4488 = vmatprep.subr.mxu0 0.0
        %4489 = vmatpush1.msra.mxu0 0.0
        %4490 = vmatprep.subr.mxu0 0.0
        %4491 = vmatpush1.msra.mxu0 0.0
        %4492 = vmatprep.subr.mxu0 0.0
        %4493 = vmatpush1.msra.mxu0 0.0
        %4494 = vmatprep.subr.mxu0 0.0
        %4495 = vmatpush1.msra.mxu0 0.0
        %4496 = vmatprep.subr.mxu0 0.0
        %4497 = vmatpush1.msra.mxu0 0.0
        %4498 = vmatprep.subr.mxu0 0.0
        %4499 = vmatpush1.msra.mxu0 0.0
        %4500 = vmatprep.subr.mxu0 0.0
        %4501 = vmatpush1.msra.mxu0 0.0
        %4502 = vmatprep.subr.mxu0 0.0
        %4503 = vmatpush1.msra.mxu0 0.0
        %4504 = vmatprep.subr.mxu0 0.0
        %4505 = vmatpush1.msra.mxu0 0.0
        %4506 = vmatprep.subr.mxu0 0.0
        %4507 = vmatpush1.msra.mxu0 0.0
        %4508 = vmatprep.subr.mxu0 0.0
        %4509 = vmatpush1.msra.mxu0 0.0
        %4510 = vmatprep.subr.mxu0 0.0
        %4511 = vmatpush1.msra.mxu0 0.0
        %4512 = vmatprep.subr.mxu0 0.0
        %4513 = vmatpush1.msra.mxu0 0.0
        %4514 = vmatprep.subr.mxu0 0.0
        %4515 = vmatpush1.msra.mxu0 0.0
        %4516 = vmatprep.subr.mxu0 0.0
        %4517 = vmatpush1.msra.mxu0 0.0
        %4518 = vmatprep.subr.mxu0 0.0
        %4519 = vmatpush1.msra.mxu0 0.0
        %4520 = vmatprep.subr.mxu0 0.0
        %4521 = vmatpush1.msra.mxu0 0.0
        %4522 = vmatprep.subr.mxu0 0.0
        %4523 = vmatpush1.msra.mxu0 0.0
        %4524 = vmatprep.subr.mxu0 0.0
        %4525 = vmatpush1.msra.mxu0 0.0
        %4526 = vmatprep.subr.mxu0 0.0
        %4527 = vmatpush1.msra.mxu0 0.0
        %4528 = vmatprep.subr.mxu0 0.0
        %4529 = vmatpush1.msra.mxu0 0.0
        %4530 = vmatprep.subr.mxu0 0.0
        %4531 = vmatpush1.msra.mxu0 0.0
        %4532 = vmatprep.mubr.f32.mxu0 0.0
        %4533 = vmatmul.mubr.f32.gmra.mrb[0].mxu0 %v4466
        %v4534 = vpop.f32.mrb[0].mxu0
        %v4535 = vadd.f32 0.0, %v4534
        %v4536 = vpop.f32.mrb[0].mxu0
        %4537 = vdwg.mxu0
        %v4539 = vsel %vm1638, %v4311, 0
        %4541 = vmatprep.subr.mxu0 0.0
        %4542 = vmatpush1.msra.mxu0 %v4462
        %4543 = vmatprep.subr.mxu0 0.0
        %4544 = vmatpush1.msra.mxu0 0.0
        %4545 = vmatprep.subr.mxu0 0.0
        %4546 = vmatpush1.msra.mxu0 0.0
        %4547 = vmatprep.subr.mxu0 0.0
        %4548 = vmatpush1.msra.mxu0 0.0
        %4549 = vmatprep.subr.mxu0 0.0
        %4550 = vmatpush1.msra.mxu0 0.0
        %4551 = vmatprep.subr.mxu0 0.0
        %4552 = vmatpush1.msra.mxu0 0.0
        %4553 = vmatprep.subr.mxu0 0.0
        %4554 = vmatpush1.msra.mxu0 0.0
        %4555 = vmatprep.subr.mxu0 0.0
        %4556 = vmatpush1.msra.mxu0 0.0
        %4557 = vmatprep.subr.mxu0 0.0
        %4558 = vmatpush1.msra.mxu0 0.0
        %4559 = vmatprep.subr.mxu0 0.0
        %4560 = vmatpush1.msra.mxu0 0.0
        %4561 = vmatprep.subr.mxu0 0.0
        %4562 = vmatpush1.msra.mxu0 0.0
        %4563 = vmatprep.subr.mxu0 0.0
        %4564 = vmatpush1.msra.mxu0 0.0
        %4565 = vmatprep.subr.mxu0 0.0
        %4566 = vmatpush1.msra.mxu0 0.0
        %4567 = vmatprep.subr.mxu0 0.0
        %4568 = vmatpush1.msra.mxu0 0.0
        %4569 = vmatprep.subr.mxu0 0.0
        %4570 = vmatpush1.msra.mxu0 0.0
        %4571 = vmatprep.subr.mxu0 0.0
        %4572 = vmatpush1.msra.mxu0 0.0
        %4573 = vmatprep.subr.mxu0 0.0
        %4574 = vmatpush1.msra.mxu0 0.0
        %4575 = vmatprep.subr.mxu0 0.0
        %4576 = vmatpush1.msra.mxu0 0.0
        %4577 = vmatprep.subr.mxu0 0.0
        %4578 = vmatpush1.msra.mxu0 0.0
        %4579 = vmatprep.subr.mxu0 0.0
        %4580 = vmatpush1.msra.mxu0 0.0
        %4581 = vmatprep.subr.mxu0 0.0
        %4582 = vmatpush1.msra.mxu0 0.0
        %4583 = vmatprep.subr.mxu0 0.0
        %4584 = vmatpush1.msra.mxu0 0.0
        %4585 = vmatprep.subr.mxu0 0.0
        %4586 = vmatpush1.msra.mxu0 0.0
        %4587 = vmatprep.subr.mxu0 0.0
        %4588 = vmatpush1.msra.mxu0 0.0
        %4589 = vmatprep.subr.mxu0 0.0
        %4590 = vmatpush1.msra.mxu0 0.0
        %4591 = vmatprep.subr.mxu0 0.0
        %4592 = vmatpush1.msra.mxu0 0.0
        %4593 = vmatprep.subr.mxu0 0.0
        %4594 = vmatpush1.msra.mxu0 0.0
        %4595 = vmatprep.subr.mxu0 0.0
        %4596 = vmatpush1.msra.mxu0 0.0
        %4597 = vmatprep.subr.mxu0 0.0
        %4598 = vmatpush1.msra.mxu0 0.0
        %4599 = vmatprep.subr.mxu0 0.0
        %4600 = vmatpush1.msra.mxu0 0.0
        %4601 = vmatprep.subr.mxu0 0.0
        %4602 = vmatpush1.msra.mxu0 0.0
        %4603 = vmatprep.subr.mxu0 0.0
        %4604 = vmatpush1.msra.mxu0 0.0
        %4605 = vmatprep.mubr.f32.mxu0 0.0
        %4606 = vmatmul.mubr.f32.gmra.mrb[0].mxu0 %v4539
        %v4607 = vpop.f32.mrb[0].mxu0
        %v4608 = vadd.f32 0.0, %v4607
        %v4609 = vpop.f32.mrb[0].mxu0
        %4610 = vdwg.mxu0
        %v4612 = vsel %vm1638, %v4384, 0
        %4614 = vmatprep.subr.mxu0 0.0
        %4615 = vmatpush1.msra.mxu0 %v4463
        %4616 = vmatprep.subr.mxu0 0.0
        %4617 = vmatpush1.msra.mxu0 0.0
        %4618 = vmatprep.subr.mxu0 0.0
        %4619 = vmatpush1.msra.mxu0 0.0
        %4620 = vmatprep.subr.mxu0 0.0
        %4621 = vmatpush1.msra.mxu0 0.0
        %4622 = vmatprep.subr.mxu0 0.0
        %4623 = vmatpush1.msra.mxu0 0.0
        %4624 = vmatprep.subr.mxu0 0.0
        %4625 = vmatpush1.msra.mxu0 0.0
        %4626 = vmatprep.subr.mxu0 0.0
        %4627 = vmatpush1.msra.mxu0 0.0
        %4628 = vmatprep.subr.mxu0 0.0
        %4629 = vmatpush1.msra.mxu0 0.0
        %4630 = vmatprep.subr.mxu0 0.0
        %4631 = vmatpush1.msra.mxu0 0.0
        %4632 = vmatprep.subr.mxu0 0.0
        %4633 = vmatpush1.msra.mxu0 0.0
        %4634 = vmatprep.subr.mxu0 0.0
        %4635 = vmatpush1.msra.mxu0 0.0
        %4636 = vmatprep.subr.mxu0 0.0
        %4637 = vmatpush1.msra.mxu0 0.0
        %4638 = vmatprep.subr.mxu0 0.0
        %4639 = vmatpush1.msra.mxu0 0.0
        %4640 = vmatprep.subr.mxu0 0.0
        %4641 = vmatpush1.msra.mxu0 0.0
        %4642 = vmatprep.subr.mxu0 0.0
        %4643 = vmatpush1.msra.mxu0 0.0
        %4644 = vmatprep.subr.mxu0 0.0
        %4645 = vmatpush1.msra.mxu0 0.0
        %4646 = vmatprep.subr.mxu0 0.0
        %4647 = vmatpush1.msra.mxu0 0.0
        %4648 = vmatprep.subr.mxu0 0.0
        %4649 = vmatpush1.msra.mxu0 0.0
        %4650 = vmatprep.subr.mxu0 0.0
        %4651 = vmatpush1.msra.mxu0 0.0
        %4652 = vmatprep.subr.mxu0 0.0
        %4653 = vmatpush1.msra.mxu0 0.0
        %4654 = vmatprep.subr.mxu0 0.0
        %4655 = vmatpush1.msra.mxu0 0.0
        %4656 = vmatprep.subr.mxu0 0.0
        %4657 = vmatpush1.msra.mxu0 0.0
        %4658 = vmatprep.subr.mxu0 0.0
        %4659 = vmatpush1.msra.mxu0 0.0
        %4660 = vmatprep.subr.mxu0 0.0
        %4661 = vmatpush1.msra.mxu0 0.0
        %4662 = vmatprep.subr.mxu0 0.0
        %4663 = vmatpush1.msra.mxu0 0.0
        %4664 = vmatprep.subr.mxu0 0.0
        %4665 = vmatpush1.msra.mxu0 0.0
        %4666 = vmatprep.subr.mxu0 0.0
        %4667 = vmatpush1.msra.mxu0 0.0
        %4668 = vmatprep.subr.mxu0 0.0
        %4669 = vmatpush1.msra.mxu0 0.0
        %4670 = vmatprep.subr.mxu0 0.0
        %4671 = vmatpush1.msra.mxu0 0.0
        %4672 = vmatprep.subr.mxu0 0.0
        %4673 = vmatpush1.msra.mxu0 0.0
        %4674 = vmatprep.subr.mxu0 0.0
        %4675 = vmatpush1.msra.mxu0 0.0
        %4676 = vmatprep.subr.mxu0 0.0
        %4677 = vmatpush1.msra.mxu0 0.0
        %4678 = vmatprep.mubr.f32.mxu0 0.0
        %4679 = vmatmul.mubr.f32.gmra.mrb[0].mxu0 %v4612
        %v4680 = vpop.f32.mrb[0].mxu0
        %v4681 = vadd.f32 0.0, %v4680
        %v4682 = vpop.f32.mrb[0].mxu0
        %4683 = vdwg.mxu0
        %v4685 = vsel %vm1638, %v4457, 0
        %4687 = vmatprep.subr.mxu0 0.0
        %4688 = vmatpush1.msra.mxu0 %v4464
        %4689 = vmatprep.subr.mxu0 0.0
        %4690 = vmatpush1.msra.mxu0 0.0
        %4691 = vmatprep.subr.mxu0 0.0
        %4692 = vmatpush1.msra.mxu0 0.0
        %4693 = vmatprep.subr.mxu0 0.0
        %4694 = vmatpush1.msra.mxu0 0.0
        %4695 = vmatprep.subr.mxu0 0.0
        %4696 = vmatpush1.msra.mxu0 0.0
        %4697 = vmatprep.subr.mxu0 0.0
        %4698 = vmatpush1.msra.mxu0 0.0
        %4699 = vmatprep.subr.mxu0 0.0
        %4700 = vmatpush1.msra.mxu0 0.0
        %4701 = vmatprep.subr.mxu0 0.0
        %4702 = vmatpush1.msra.mxu0 0.0
        %4703 = vmatprep.subr.mxu0 0.0
        %4704 = vmatpush1.msra.mxu0 0.0
        %4705 = vmatprep.subr.mxu0 0.0
        %4706 = vmatpush1.msra.mxu0 0.0
        %4707 = vmatprep.subr.mxu0 0.0
        %4708 = vmatpush1.msra.mxu0 0.0
        %4709 = vmatprep.subr.mxu0 0.0
        %4710 = vmatpush1.msra.mxu0 0.0
        %4711 = vmatprep.subr.mxu0 0.0
        %4712 = vmatpush1.msra.mxu0 0.0
        %4713 = vmatprep.subr.mxu0 0.0
        %4714 = vmatpush1.msra.mxu0 0.0
        %4715 = vmatprep.subr.mxu0 0.0
        %4716 = vmatpush1.msra.mxu0 0.0
        %4717 = vmatprep.subr.mxu0 0.0
        %4718 = vmatpush1.msra.mxu0 0.0
        %4719 = vmatprep.subr.mxu0 0.0
        %4720 = vmatpush1.msra.mxu0 0.0
        %4721 = vmatprep.subr.mxu0 0.0
        %4722 = vmatpush1.msra.mxu0 0.0
        %4723 = vmatprep.subr.mxu0 0.0
        %4724 = vmatpush1.msra.mxu0 0.0
        %4725 = vmatprep.subr.mxu0 0.0
        %4726 = vmatpush1.msra.mxu0 0.0
        %4727 = vmatprep.subr.mxu0 0.0
        %4728 = vmatpush1.msra.mxu0 0.0
        %4729 = vmatprep.subr.mxu0 0.0
        %4730 = vmatpush1.msra.mxu0 0.0
        %4731 = vmatprep.subr.mxu0 0.0
        %4732 = vmatpush1.msra.mxu0 0.0
        %4733 = vmatprep.subr.mxu0 0.0
        %4734 = vmatpush1.msra.mxu0 0.0
        %4735 = vmatprep.subr.mxu0 0.0
        %4736 = vmatpush1.msra.mxu0 0.0
        %4737 = vmatprep.subr.mxu0 0.0
        %4738 = vmatpush1.msra.mxu0 0.0
        %4739 = vmatprep.subr.mxu0 0.0
        %4740 = vmatpush1.msra.mxu0 0.0
        %4741 = vmatprep.subr.mxu0 0.0
        %4742 = vmatpush1.msra.mxu0 0.0
        %4743 = vmatprep.subr.mxu0 0.0
        %4744 = vmatpush1.msra.mxu0 0.0
        %4745 = vmatprep.subr.mxu0 0.0
        %4746 = vmatpush1.msra.mxu0 0.0
        %4747 = vmatprep.subr.mxu0 0.0
        %4748 = vmatpush1.msra.mxu0 0.0
        %4749 = vmatprep.subr.mxu0 0.0
        %4750 = vmatpush1.msra.mxu0 0.0
        %4751 = vmatprep.mubr.f32.mxu0 0.0
        %4752 = vmatmul.mubr.f32.gmra.mrb[0].mxu0 %v4685
        %v4753 = vpop.f32.mrb[0].mxu0
        %v4754 = vadd.f32 0.0, %v4753
        %v4755 = vpop.f32.mrb[0].mxu0
        %4756 = vdwg.mxu0
        %v4757 = vsel %vm630, %v4535, 0.0
        %v4758 = vsel %vm630, %v4608, 0.0
        %v4759 = vadd.f32 %v4757, %v4758
        %v4760 = vsel %vm630, %v4681, 0.0
        %v4761 = vadd.f32 %v4759, %v4760
        %v4762 = vsel %vm630, %v4754, 0.0
        %v4763 = vadd.f32 %v4761, %v4762
        %v4764 = vadd.f32 %v2803, %v4763
        %s4765 = scalar_lea.vmem %s9, 1
        %v4766 = vld [vmem:[%s4765] sm:$0x1]
        %v4768 = vlaneseq
        %v4769 = vshrl.u32 %v4768, 7
        %v4770 = vsub.s32 0, %v4769
        %v4771 = vrot.slane %v4766, %v4770
        %v4773 = vadd.f32 %v4764, %v4771
        %s4774 = scalar_lea.vmem %s12, 1
        %v4775 = vld [vmem:[%s4774] sm:$0x1]
        %s4776 = scalar_lea.vmem %s13, 1
        %v4777 = vld [vmem:[%s4776] sm:$0x1]
        %v4778 = vsel %vm630, %v4773, 0.0
        %4779 = vadd.xlane.f32.xlu0 %v4778
        %v4780 = vpop.xlane.xlu0 %4779
        %v4781 = vmul.f32 %v4780, %v634
        %v4782 = vsub.f32 %v4773, %v4781
        %v4783 = vmul.f32 %v4782, %v4782
        %v4784 = vsel %vm630, %v4783, 0.0
        %4785 = vadd.xlane.f32.xlu0 %v4784
        %v4786 = vpop.xlane.xlu0 %4785
        %v4787 = vmul.f32 %v4786, %v634
        %v4788 = vadd.f32 %v4787, 1e-06
        %v4789 = vrsqrt.pop %v4788
        %v4790 = vmul.f32 %v4782, %v4789
        %v4792 = vlaneseq
        %v4793 = vshrl.u32 %v4792, 7
        %v4794 = vsub.s32 0, %v4793
        %v4795 = vrot.slane %v4775, %v4794
        %v4797 = vmul.f32 %v4790, %v4795
        %v4799 = vlaneseq
        %v4800 = vshrl.u32 %v4799, 7
        %v4801 = vsub.s32 0, %v4800
        %v4802 = vrot.slane %v4777, %v4801
        %v4804 = vadd.f32 %v4797, %v4802
        %s4805 = scalar_lea.vmem %s14, 32
        %v4806 = vld [vmem:[%s4805] sm:$0xff]
        %v4807 = vld [vmem:[%s4805 + $0x8] sm:$0xff]
        %v4808 = vld [vmem:[%s4805 + $0x10] sm:$0xff]
        %v4809 = vld [vmem:[%s4805 + $0x18] sm:$0xff]
        %s4810 = scalar_lea.vmem %s15, 1
        %v4811 = vld [vmem:[%s4810] sm:$0x1]
        %v4813 = vlaneseq
        %v4814 = vshrl.u32 %v4813, 7
        %v4815 = vsub.s32 0, %v4814
        %v4816 = vrot.slane %v4811, %v4815
        %v4819 = vsel %vm630, %v4804, 0
        %4821 = vmatprep.subr.mxu0 0.0
        %4822 = vmatpush1.msra.mxu0 %v4806
        %4823 = vmatprep.subr.mxu0 0.0
        %4824 = vmatpush1.msra.mxu0 %v4807
        %4825 = vmatprep.subr.mxu0 0.0
        %4826 = vmatpush1.msra.mxu0 %v4808
        %4827 = vmatprep.subr.mxu0 0.0
        %4828 = vmatpush1.msra.mxu0 %v4809
        %4829 = vmatprep.subr.mxu0 0.0
        %4830 = vmatpush1.msra.mxu0 0.0
        %4831 = vmatprep.subr.mxu0 0.0
        %4832 = vmatpush1.msra.mxu0 0.0
        %4833 = vmatprep.subr.mxu0 0.0
        %4834 = vmatpush1.msra.mxu0 0.0
        %4835 = vmatprep.subr.mxu0 0.0
        %4836 = vmatpush1.msra.mxu0 0.0
        %4837 = vmatprep.subr.mxu0 0.0
        %4838 = vmatpush1.msra.mxu0 0.0
        %4839 = vmatprep.subr.mxu0 0.0
        %4840 = vmatpush1.msra.mxu0 0.0
        %4841 = vmatprep.subr.mxu0 0.0
        %4842 = vmatpush1.msra.mxu0 0.0
        %4843 = vmatprep.subr.mxu0 0.0
        %4844 = vmatpush1.msra.mxu0 0.0
        %4845 = vmatprep.subr.mxu0 0.0
        %4846 = vmatpush1.msra.mxu0 0.0
        %4847 = vmatprep.subr.mxu0 0.0
        %4848 = vmatpush1.msra.mxu0 0.0
        %4849 = vmatprep.subr.mxu0 0.0
        %4850 = vmatpush1.msra.mxu0 0.0
        %4851 = vmatprep.subr.mxu0 0.0
        %4852 = vmatpush1.msra.mxu0 0.0
        %4853 = vmatprep.subr.mxu0 0.0
        %4854 = vmatpush1.msra.mxu0 0.0
        %4855 = vmatprep.subr.mxu0 0.0
        %4856 = vmatpush1.msra.mxu0 0.0
        %4857 = vmatprep.subr.mxu0 0.0
        %4858 = vmatpush1.msra.mxu0 0.0
        %4859 = vmatprep.subr.mxu0 0.0
        %4860 = vmatpush1.msra.mxu0 0.0
        %4861 = vmatprep.subr.mxu0 0.0
        %4862 = vmatpush1.msra.mxu0 0.0
        %4863 = vmatprep.subr.mxu0 0.0
        %4864 = vmatpush1.msra.mxu0 0.0
        %4865 = vmatprep.subr.mxu0 0.0
        %4866 = vmatpush1.msra.mxu0 0.0
        %4867 = vmatprep.subr.mxu0 0.0
        %4868 = vmatpush1.msra.mxu0 0.0
        %4869 = vmatprep.subr.mxu0 0.0
        %4870 = vmatpush1.msra.mxu0 0.0
        %4871 = vmatprep.subr.mxu0 0.0
        %4872 = vmatpush1.msra.mxu0 0.0
        %4873 = vmatprep.subr.mxu0 0.0
        %4874 = vmatpush1.msra.mxu0 0.0
        %4875 = vmatprep.subr.mxu0 0.0
        %4876 = vmatpush1.msra.mxu0 0.0
        %4877 = vmatprep.subr.mxu0 0.0
        %4878 = vmatpush1.msra.mxu0 0.0
        %4879 = vmatprep.subr.mxu0 0.0
        %4880 = vmatpush1.msra.mxu0 0.0
        %4881 = vmatprep.subr.mxu0 0.0
        %4882 = vmatpush1.msra.mxu0 0.0
        %4883 = vmatprep.subr.mxu0 0.0
        %4884 = vmatpush1.msra.mxu0 0.0
        %4885 = vmatprep.mubr.f32.mxu0 0.0
        %4886 = vmatmul.mubr.f32.gmra.mrb[0].mxu0 %v4819
        %v4887 = vpop.f32.mrb[0].mxu0
        %v4888 = vadd.f32 %v4816, %v4887
        %v4889 = vpop.f32.mrb[0].mxu0
        %4890 = vdwg.mxu0
        %v4891 = vmul.f32 %v4888, 0.5
        %v4892 = vmul.f32 %v4888, 0.70710677
        %v4893 = verf.f32.pop %v4892
        %v4894 = vadd.f32 %v4893, 1.0
        %v4895 = vmul.f32 %v4891, %v4894
        %s4896 = scalar_lea.vmem %s16, 128
        %v4897 = vld [vmem:[%s4896] sm:$0xff]
        %v4898 = vld [vmem:[%s4896 + $0x8] sm:$0xff]
        %v4899 = vld [vmem:[%s4896 + $0x10] sm:$0xff]
        %v4900 = vld [vmem:[%s4896 + $0x18] sm:$0xff]
        %v4901 = vld [vmem:[%s4896 + $0x20] sm:$0xff]
        %v4902 = vld [vmem:[%s4896 + $0x28] sm:$0xff]
        %v4903 = vld [vmem:[%s4896 + $0x30] sm:$0xff]
        %v4904 = vld [vmem:[%s4896 + $0x38] sm:$0xff]
        %v4905 = vld [vmem:[%s4896 + $0x40] sm:$0xff]
        %v4906 = vld [vmem:[%s4896 + $0x48] sm:$0xff]
        %v4907 = vld [vmem:[%s4896 + $0x50] sm:$0xff]
        %v4908 = vld [vmem:[%s4896 + $0x58] sm:$0xff]
        %v4909 = vld [vmem:[%s4896 + $0x60] sm:$0xff]
        %v4910 = vld [vmem:[%s4896 + $0x68] sm:$0xff]
        %v4911 = vld [vmem:[%s4896 + $0x70] sm:$0xff]
        %v4912 = vld [vmem:[%s4896 + $0x78] sm:$0xff]
        %4913 = vmatprep.subr.mxu0 0.0
        %4914 = vmatpush1.msra.mxu0 %v4897
        %4915 = vmatprep.subr.mxu0 0.0
        %4916 = vmatpush1.msra.mxu0 %v4898
        %4917 = vmatprep.subr.mxu0 0.0
        %4918 = vmatpush1.msra.mxu0 %v4899
        %4919 = vmatprep.subr.mxu0 0.0
        %4920 = vmatpush1.msra.mxu0 %v4900
        %4921 = vmatprep.subr.mxu0 0.0
        %4922 = vmatpush1.msra.mxu0 %v4901
        %4923 = vmatprep.subr.mxu0 0.0
        %4924 = vmatpush1.msra.mxu0 %v4902
        %4925 = vmatprep.subr.mxu0 0.0
        %4926 = vmatpush1.msra.mxu0 %v4903
        %4927 = vmatprep.subr.mxu0 0.0
        %4928 = vmatpush1.msra.mxu0 %v4904
        %4929 = vmatprep.subr.mxu0 0.0
        %4930 = vmatpush1.msra.mxu0 %v4905
        %4931 = vmatprep.subr.mxu0 0.0
        %4932 = vmatpush1.msra.mxu0 %v4906
        %4933 = vmatprep.subr.mxu0 0.0
        %4934 = vmatpush1.msra.mxu0 %v4907
        %4935 = vmatprep.subr.mxu0 0.0
        %4936 = vmatpush1.msra.mxu0 %v4908
        %4937 = vmatprep.subr.mxu0 0.0
        %4938 = vmatpush1.msra.mxu0 %v4909
        %4939 = vmatprep.subr.mxu0 0.0
        %4940 = vmatpush1.msra.mxu0 %v4910
        %4941 = vmatprep.subr.mxu0 0.0
        %4942 = vmatpush1.msra.mxu0 %v4911
        %4943 = vmatprep.subr.mxu0 0.0
        %4944 = vmatpush1.msra.mxu0 %v4912
        %4945 = vmatprep.subr.mxu0 0.0
        %4946 = vmatpush1.msra.mxu0 0.0
        %4947 = vmatprep.subr.mxu0 0.0
        %4948 = vmatpush1.msra.mxu0 0.0
        %4949 = vmatprep.subr.mxu0 0.0
        %4950 = vmatpush1.msra.mxu0 0.0
        %4951 = vmatprep.subr.mxu0 0.0
        %4952 = vmatpush1.msra.mxu0 0.0
        %4953 = vmatprep.subr.mxu0 0.0
        %4954 = vmatpush1.msra.mxu0 0.0
        %4955 = vmatprep.subr.mxu0 0.0
        %4956 = vmatpush1.msra.mxu0 0.0
        %4957 = vmatprep.subr.mxu0 0.0
        %4958 = vmatpush1.msra.mxu0 0.0
        %4959 = vmatprep.subr.mxu0 0.0
        %4960 = vmatpush1.msra.mxu0 0.0
        %4961 = vmatprep.subr.mxu0 0.0
        %4962 = vmatpush1.msra.mxu0 0.0
        %4963 = vmatprep.subr.mxu0 0.0
        %4964 = vmatpush1.msra.mxu0 0.0
        %4965 = vmatprep.subr.mxu0 0.0
        %4966 = vmatpush1.msra.mxu0 0.0
        %4967 = vmatprep.subr.mxu0 0.0
        %4968 = vmatpush1.msra.mxu0 0.0
        %4969 = vmatprep.subr.mxu0 0.0
        %4970 = vmatpush1.msra.mxu0 0.0
        %4971 = vmatprep.subr.mxu0 0.0
        %4972 = vmatpush1.msra.mxu0 0.0
        %4973 = vmatprep.subr.mxu0 0.0
        %4974 = vmatpush1.msra.mxu0 0.0
        %4975 = vmatprep.subr.mxu0 0.0
        %4976 = vmatpush1.msra.mxu0 0.0
        %4977 = vmatprep.mubr.f32.mxu0 0.0
        %4978 = vmatmul.mubr.f32.gmra.mrb[0].mxu0 %v4895
        %v4979 = vpop.f32.mrb[0].mxu0
        %v4980 = vadd.f32 0.0, %v4979
        %v4981 = vpop.f32.mrb[0].mxu0
        %4982 = vdwg.mxu0
        %v4983 = vadd.f32 %v4773, %v4980
        %s4984 = scalar_lea.vmem %s17, 1
        %v4985 = vld [vmem:[%s4984] sm:$0x1]
        %v4987 = vlaneseq
        %v4988 = vshrl.u32 %v4987, 7
        %v4989 = vsub.s32 0, %v4988
        %v4990 = vrot.slane %v4985, %v4989
        %v4992 = vadd.f32 %v4983, %v4990
        %v4993 = vld [vmem:[%s18] sm:$0x1]
        %v4994 = vld [vmem:[%s19] sm:$0x1]
        %v4995 = vsel %vm630, %v4992, 0.0
        %4996 = vadd.xlane.f32.xlu0 %v4995
        %v4997 = vpop.xlane.xlu0 %4996
        %v4998 = vmul.f32 %v4997, %v634
        %v4999 = vsub.f32 %v4992, %v4998
        %v5000 = vmul.f32 %v4999, %v4999
        %v5001 = vsel %vm630, %v5000, 0.0
        %5002 = vadd.xlane.f32.xlu0 %v5001
        %v5003 = vpop.xlane.xlu0 %5002
        %v5004 = vmul.f32 %v5003, %v634
        %v5005 = vadd.f32 %v5004, 1e-06
        %v5006 = vrsqrt.pop %v5005
        %v5007 = vmul.f32 %v4999, %v5006
        %v5009 = vlaneseq
        %v5010 = vshrl.u32 %v5009, 7
        %v5011 = vsub.s32 0, %v5010
        %v5012 = vrot.slane %v4993, %v5011
        %v5014 = vmul.f32 %v5007, %v5012
        %v5016 = vlaneseq
        %v5017 = vshrl.u32 %v5016, 7
        %v5018 = vsub.s32 0, %v5017
        %v5019 = vrot.slane %v4994, %v5018
        %v5021 = vadd.f32 %v5014, %v5019
        %5022 = vst.msk [vmem:[%s620] sm:$0xff] %vm630, %v5021
        %s5023 = sand.u32 %s467, 1
        %s5024 = scalar_lea.sflag [#allocation3], %s5023
        %s5025 = sand.u32 %s467, 1
        %s5026 = smul.addr %s5025, 8
        %s5027 = scalar_lea.vmem [#allocation2], %s5026
        // Predicated region
        $region101: #{transformer_encoder.1} parent=99 // pred_check
          %p5028 = pneg %p477
        $region102: #{transformer_encoder.1} parent=99 // pred_check_branch
          %5030 = sbr.rel (%p5028) target = $region104
        $region103: #{transformer_encoder.1} parent=99 // pred_region
          %s5032 = ssub.s32 128, 128
          %5033 = vsyncadd %s5024, %s5032
          %s5034 = smul.addr %s34, 128
          %s5035 = scalar_lea.hbm %s20, %s5034
          %s5037 = sshll.u32 %s5027, 4
          %s5038 = int_to_ptr.vmem [resolvable:$true] %s5037
          %5040 = dma.vmem_to_hbm [thread:$0]  %s5038, 128, %s5035, %s5024
        $region104: #{transformer_encoder.1} parent=99 // pred_fallthru
          _
      $region100: #{transformer_encoder.1} parent=5 // pred_fallthru
        _
      %p5041 = scmp.le.s32.totalorder 2, %s29
      // Predicated region
      $region105: #{transformer_encoder.1} parent=5 // pred_check
        %p5042 = pneg %p5041
      $region106: #{transformer_encoder.1} parent=5 // pred_check_branch
        %5044 = sbr.rel (%p5042) target = $region108
      $region107: #{transformer_encoder.1} parent=5 // pred_region
        %s5045 = ssub.s32 %s29, 2
        // Predicated region
        $region109: #{transformer_encoder.1} parent=107 // pred_check
          %p5046 = pneg %p483
        $region110: #{transformer_encoder.1} parent=107 // pred_check_branch
          %5048 = sbr.rel (%p5046) target = $region112
        $region111: #{transformer_encoder.1} parent=107 // pred_region
          %s5049 = sand.u32 %s468, 1
          %s5050 = scalar_lea.sflag [#allocation3], %s5049
          %s5051 = sand.u32 %s468, 1
          %s5052 = smul.addr %s5051, 8
          %s5053 = scalar_lea.vmem [#allocation2], %s5052
          %5054 = dma.done %s5050, 128
        $region112: #{transformer_encoder.1} parent=107 // pred_fallthru
          _
      $region108: #{transformer_encoder.1} parent=5 // pred_fallthru
        _
    $region6: #{transformer_encoder.1} parent=1 // loop_footer
      %s33 = sadd.s32 1, %s29
    $region7: #{transformer_encoder.1} parent=1 // loop_footer_branch
      %28 = sbr.rel target = $region3
    $region8: #{transformer_encoder.1} parent=1 // loop_exit
      _
    %5055 = vsyncpa [#allocation3], 1
    %s5056 = scalar_lea.sflag [#allocation3], 1
    %5057 = vsyncpa %s5056, 1

</llo_original>
